<compile_context>
chip_gen: v6e
topology: v6e:2x2x1
jax: 0.10.0
libtpu: 0.0.40
codegen_flags: <defaults>
</compile_context>

<pallas_src>
import functools

import jax
import jax.numpy as jnp
from jax import lax
from jax.experimental import pallas as pl
from jax.experimental.pallas import tpu as pltpu


def _round_up(x, m):
    return (x + m - 1) // m * m


# ----------------------------------------------------------------------------
# Pallas kernels
# ----------------------------------------------------------------------------
def _linear_lrelu_kernel(z_ref, w_ref, b_ref, o_ref):
    """Linear + LeakyReLU(0.2): bf16 operands, f32 accumulate/epilogue, bf16 out."""
    y = jnp.dot(z_ref[...], w_ref[...], preferred_element_type=jnp.float32)
    y = y + b_ref[...]
    y = jnp.where(y > 0, y, 0.2 * y)
    o_ref[...] = y.astype(o_ref.dtype)


def _convt_bn_lrelu_kernel(a_ref, w_ref, gamma_ref, beta_ref, mask_ref,
                           o_ref, slab_ref, acc_ref, *, offsets, ci, co, count, eps):
    """Fused sub-pixel ConvTranspose2d(k=4,s=2,p=1) + BatchNorm2d(batch stats)
    + LeakyReLU(0.2), driven by ONE K=9*ci MXU matmul.

    a_ref:      [ci, La]      bf16  flattened, spatially padded input
    w_ref:      [4*co, 9*ci]  bf16  packed sub-pixel weights (phase-major rows)
    gamma/beta: [co, 1]       f32
    mask_ref:   [1, Ms]       f32   1.0 at valid output lanes
    o_ref:      [4*co, Ms]    bf16  normalised + leaky conv output (phase-major)
    slab_ref:   [9*ci, Ms]    bf16  scratch: tap-shifted copies of the input
    acc_ref:    [4*co, Ms]    f32   scratch: conv accumulator
    """
    ms = o_ref.shape[1]
    # Gather the 9 tap-shifted views into one K-major slab (one unaligned lane
    # slice per tap, done up-front so the matmul below is pure MXU work).
    for t, off in enumerate(offsets):
        slab_ref[t * ci:(t + 1) * ci, :] = a_ref[:, off:off + ms]
    # Single implicit-GEMM matmul: K = 9*ci fills the MXU contraction dim.
    # (ConvT bias is dropped: BN batch-stat mean subtraction cancels it exactly.)
    acc_ref[...] = jnp.dot(w_ref[...], slab_ref[...],
                           preferred_element_type=jnp.float32)

    m = mask_ref[...]                                    # [1, Ms]
    inv_n = 1.0 / count
    # Per-phase masked statistics: bounded [co, Ms] temporaries (no full-slab
    # am/am2), two-pass (shifted) variance for numerical robustness.
    s1 = jnp.zeros((co, 1), jnp.float32)
    for p in range(4):
        s1 = s1 + jnp.sum(acc_ref[p * co:(p + 1) * co, :] * m,
                          axis=1, keepdims=True)
    mean = s1 * inv_n                                    # [co, 1]
    s2 = jnp.zeros((co, 1), jnp.float32)
    for p in range(4):
        d = (acc_ref[p * co:(p + 1) * co, :] - mean) * m
        s2 = s2 + jnp.sum(d * d, axis=1, keepdims=True)
    var = s2 * inv_n
    scale = gamma_ref[...] * lax.rsqrt(var + eps)        # [co, 1]
    shift = beta_ref[...] - mean * scale
    for p in range(4):                                   # normalise + LeakyReLU per phase
        yp = acc_ref[p * co:(p + 1) * co, :] * scale + shift
        o_ref[p * co:(p + 1) * co, :] = jnp.where(yp > 0, yp,
                                                  0.2 * yp).astype(o_ref.dtype)


def _conv_tanh_kernel(a_ref, w_ref, b_ref, o_ref, slab_ref, *, offsets, ci):
    """Fused Conv2d(3x3, stride 1, pad 1) + bias + Tanh as ONE K=9*ci matmul."""
    ms = o_ref.shape[1]
    for t, off in enumerate(offsets):
        slab_ref[t * ci:(t + 1) * ci, :] = a_ref[:, off:off + ms]
    acc = jnp.dot(w_ref[...], slab_ref[...], preferred_element_type=jnp.float32)
    o_ref[...] = jnp.tanh(acc + b_ref[...])


# ----------------------------------------------------------------------------
# Wrappers (JAX glue is layout plumbing only: pad / flatten / pixel-shuffle)
# ----------------------------------------------------------------------------
def _pad_flatten(x_cnhw, la):
    """[C,N,H,W] -> pad spatial by 1 -> flatten to [C, N*(H+2)*(W+2)] -> pad lanes."""
    c, n, h, w = x_cnhw.shape
    xp = jnp.pad(x_cnhw.astype(jnp.bfloat16), ((0, 0), (0, 0), (1, 1), (1, 1)))
    flat = xp.reshape(c, n * (h + 2) * (w + 2))
    return jnp.pad(flat, ((0, 0), (0, la - flat.shape[1])))


def linear_lrelu(z, w_bf, b_f32):
    B, K = z.shape
    N = w_bf.shape[1]
    return pl.pallas_call(
        _linear_lrelu_kernel,
        out_shape=jax.ShapeDtypeStruct((B, N), jnp.bfloat16),
        grid=(1,),
        in_specs=[pl.BlockSpec((B, K), lambda i: (0, 0)),
                  pl.BlockSpec((K, N), lambda i: (0, 0)),
                  pl.BlockSpec((1, N), lambda i: (0, 0))],
        out_specs=pl.BlockSpec((B, N), lambda i: (0, 0)),
        compiler_params=pltpu.CompilerParams(dimension_semantics=("arbitrary",)),
        cost_estimate=pl.CostEstimate(flops=2 * B * K * N, transcendentals=0,
                                      bytes_accessed=2 * (B * K + K * N + B * N) + 4 * N),
    )(z.astype(jnp.bfloat16), w_bf, b_f32)


def convt_bn_lrelu(x_cnhw, arrs, g, *, eps=1e-5):
    """Fused ConvTranspose2d(4,2,1)+BN(batch stats)+LeakyReLU.
    x: [ci, N, H, W] bf16 -> [co, N, 2H, 2W] bf16."""
    ci, N, H, W = x_cnhw.shape
    co, Hp, Wp = g["co"], g["Hp"], g["Wp"]
    Mp, Ms, La = g["Mp"], g["Ms"], g["La"]
    a2 = _pad_flatten(x_cnhw, La)                 # [ci, La] bf16 (no im2col duplication)
    kernel = functools.partial(_convt_bn_lrelu_kernel, offsets=g["offsets"],
                               ci=ci, co=co, count=g["count"], eps=eps)
    y = pl.pallas_call(
        kernel,
        out_shape=jax.ShapeDtypeStruct((4 * co, Ms), jnp.bfloat16),
        grid=(1,),
        in_specs=[pl.BlockSpec((ci, La), lambda i: (0, 0)),
                  pl.BlockSpec((4 * co, 9 * ci), lambda i: (0, 0)),
                  pl.BlockSpec((co, 1), lambda i: (0, 0)),
                  pl.BlockSpec((co, 1), lambda i: (0, 0)),
                  pl.BlockSpec((1, Ms), lambda i: (0, 0))],
        out_specs=pl.BlockSpec((4 * co, Ms), lambda i: (0, 0)),
        scratch_shapes=[pltpu.VMEM((9 * ci, Ms), jnp.bfloat16),
                        pltpu.VMEM((4 * co, Ms), jnp.float32)],
        compiler_params=pltpu.CompilerParams(dimension_semantics=("arbitrary",)),
        cost_estimate=pl.CostEstimate(
            flops=2 * (4 * co) * (9 * ci) * Ms, transcendentals=0,
            bytes_accessed=2 * ci * La + 2 * 4 * co * 9 * ci + 2 * 4 * co * Ms),
    )(a2, arrs["w"], arrs["gamma"], arrs["beta"], arrs["mask"])
    # pixel-shuffle the 4 output phases back to [co, N, 2H, 2W] (tiny fused XLA relayout)
    yv = y[:, :Mp].reshape(2, 2, co, N, Hp, Wp)[:, :, :, :, :H, :W]
    return yv.transpose(2, 3, 4, 0, 5, 1).reshape(co, N, 2 * H, 2 * W)


def conv3x3_tanh(x_cnhw, arrs, g):
    """Fused Conv2d(ci->co, 3, 1, 1) + bias + Tanh.  x: [ci,N,H,W] -> [co,N,H,W] f32."""
    ci, N, H, W = x_cnhw.shape
    co, Hp, Wp = g["co"], g["Hp"], g["Wp"]
    Mp, Ms, La = g["Mp"], g["Ms"], g["La"]
    a2 = _pad_flatten(x_cnhw, La)
    y = pl.pallas_call(
        functools.partial(_conv_tanh_kernel, offsets=g["offsets"], ci=ci),
        out_shape=jax.ShapeDtypeStruct((co, Ms), jnp.float32),
        grid=(1,),
        in_specs=[pl.BlockSpec((ci, La), lambda i: (0, 0)),
                  pl.BlockSpec((co, 9 * ci), lambda i: (0, 0)),
                  pl.BlockSpec((co, 1), lambda i: (0, 0))],
        out_specs=pl.BlockSpec((co, Ms), lambda i: (0, 0)),
        scratch_shapes=[pltpu.VMEM((9 * ci, Ms), jnp.bfloat16)],
        compiler_params=pltpu.CompilerParams(dimension_semantics=("arbitrary",)),
        cost_estimate=pl.CostEstimate(
            flops=2 * co * (9 * ci) * Ms, transcendentals=co * Ms,
            bytes_accessed=2 * ci * La + 2 * co * 9 * ci + 4 * co * Ms),
    )(a2, arrs["w"], arrs["bias"])
    return y[:, :Mp].reshape(co, N, Hp, Wp)[:, :, :H, :W]


# ----------------------------------------------------------------------------
# One-time geometry + parameter packing (NOT in the per-forward path)
# ----------------------------------------------------------------------------
# Sub-pixel decomposition: output row i = 2a + ph;
#   ph=0 uses {dr=0: kh=3, dr=1: kh=1}; ph=1 uses {dr=1: kh=2, dr=2: kh=0}
# (dr is the tap row in the pad-1 input window). Same mapping along columns.
_KH_MAP = ({0: 3, 1: 1}, {1: 2, 2: 0})


def _layer_geom(ci, co, H, W, batch):
    Hp, Wp = H + 2, W + 2
    Mp = batch * Hp * Wp
    Ms = _round_up(Mp, 128)                    # lane-dense output width
    La = _round_up(Ms + 2 * Wp + 2, 128)
    offsets = tuple(dr * Wp + dc for dr in range(3) for dc in range(3))
    return dict(ci=ci, co=co, H=H, W=W, Hp=Hp, Wp=Wp, Mp=Mp, Ms=Ms, La=La,
                offsets=offsets, count=float(4 * batch * H * W))


def build_geometry(batch, model_dim, channels):
    md = model_dim
    cfgs = [(4 * md, 2 * md, 4), (2 * md, 2 * md, 8), (2 * md, md, 16)]
    return {"ct": [_layer_geom(ci, co, H, H, batch) for ci, co, H in cfgs],
            "cv": _layer_geom(md, channels, 32, 32, batch)}


def pack_params(params, geom):
    """Repack weights / build masks once (removes all per-forward weight scatter)."""
    packed = {"lin_w": params["lin_w"].astype(jnp.bfloat16),
              "lin_b": params["lin_b"].reshape(1, -1).astype(jnp.float32)}
    ct = []
    for idx, g in enumerate(geom["ct"]):
        ci, co = g["ci"], g["co"]
        H, W, Hp, Wp, Mp, Ms = g["H"], g["W"], g["Hp"], g["Wp"], g["Mp"], g["Ms"]
        w = params[f"ct{idx}_w"].astype(jnp.float32)          # PyTorch [ci, co, 4, 4]
        blocks = jnp.zeros((2, 2, 3, 3, co, ci), jnp.float32)
        for ph in (0, 1):
            for pw in (0, 1):
                for dr, kh in _KH_MAP[ph].items():
                    for dc, kw in _KH_MAP[pw].items():
                        blocks = blocks.at[ph, pw, dr, dc].set(w[:, :, kh, kw].T)
        wbig = blocks.transpose(0, 1, 4, 2, 3, 5).reshape(4 * co, 9 * ci)
        lane = jnp.arange(Ms, dtype=jnp.int32)
        mask = ((lane < Mp) & (((lane // Wp) % Hp) < H) & ((lane % Wp) < W))
        ct.append(dict(
            w=wbig.astype(jnp.bfloat16),
            gamma=params[f"bn{idx}_g"].reshape(co, 1).astype(jnp.float32),
            beta=params[f"bn{idx}_b"].reshape(co, 1).astype(jnp.float32),
            mask=mask.astype(jnp.float32).reshape(1, Ms)))
        # NOTE: ct{idx}_b (ConvT bias) is intentionally not packed — it is
        # cancelled exactly by the BatchNorm batch-stat mean subtraction.
    packed["ct"] = ct
    gv = geom["cv"]
    wcv = params["cv_w"].astype(jnp.float32)                  # [co, ci, 3, 3]
    packed["cv"] = dict(
        w=jnp.transpose(wcv, (0, 2, 3, 1)).reshape(gv["co"], 9 * gv["ci"]
                                                   ).astype(jnp.bfloat16),
        bias=params["cv_b"].reshape(gv["co"], 1).astype(jnp.float32))
    return packed


# ----------------------------------------------------------------------------
# Generator parameters + forward pass
# ----------------------------------------------------------------------------
def init_params(key, latent_dim, model_dim, channels):
    keys = jax.random.split(key, 20)
    rnd = lambda k, shape, s=0.05: jax.random.normal(k, shape, jnp.float32) * s
    p = {}
    p["lin_w"] = rnd(keys[0], (latent_dim, 4 * 4 * 4 * model_dim))   # stored [in, out]
    p["lin_b"] = rnd(keys[1], (4 * 4 * 4 * model_dim,))
    cfgs = [(4 * model_dim, 2 * model_dim),
            (2 * model_dim, 2 * model_dim),
            (2 * model_dim, model_dim)]
    for idx, (ci, co) in enumerate(cfgs):
        k0, k1, k2, k3 = jax.random.split(keys[2 + idx], 4)
        p[f"ct{idx}_w"] = rnd(k0, (ci, co, 4, 4))          # PyTorch ConvT layout [in,out,kh,kw]
        p[f"ct{idx}_b"] = rnd(k1, (co,))
        p[f"bn{idx}_g"] = 1.0 + rnd(k2, (co,), 0.1)
        p[f"bn{idx}_b"] = rnd(k3, (co,), 0.1)
    p["cv_w"] = rnd(keys[10], (channels, model_dim, 3, 3))  # Conv2d layout [out,in,kh,kw]
    p["cv_b"] = rnd(keys[11], (channels,))
    return p


def generator_forward(packed, z, *, geom, model_dim):
    B = z.shape[0]
    md = model_dim
    # Linear + LeakyReLU(0.2)
    h = linear_lrelu(z, packed["lin_w"], packed["lin_b"])          # [B, 64*md] bf16
    # torch.reshape(h, [-1, 4*md, 4, 4]) (NCHW), kept channel-first: [4*md, B, 4, 4]
    x = h.reshape(B, 4 * md, 4, 4).transpose(1, 0, 2, 3)
    # three fused (ConvTranspose2d -> BatchNorm2d -> LeakyReLU) blocks
    for idx in range(3):
        x = convt_bn_lrelu(x, packed["ct"][idx], geom["ct"][idx])
    # Conv2d(md -> channels, 3, 1, 1) + Tanh, back to NCHW
    y = conv3x3_tanh(x, packed["cv"], geom["cv"])                  # [channels, B, 32, 32]
    return jnp.transpose(y, (1, 0, 2, 3))


# ----------------------------------------------------------------------------
# Pure-JAX reference (precision-matched: bf16 operands, f32 accumulate/epilogue)
# ----------------------------------------------------------------------------
def generator_reference(params, z, *, model_dim, eps=1e-5):
    md = model_dim
    bf = lambda t: t.astype(jnp.bfloat16)
    dn = ("NCHW", "OIHW", "NCHW")
    h = jnp.dot(bf(z), bf(params["lin_w"]), preferred_element_type=jnp.float32)
    h = h + params["lin_b"]
    x = jnp.where(h > 0, h, 0.2 * h).astype(jnp.bfloat16).reshape(-1, 4 * md, 4, 4)
    for idx in range(3):
        w = params[f"ct{idx}_w"]                                   # [ci, co, 4, 4]
        wf = jnp.transpose(jnp.flip(w, axis=(2, 3)), (1, 0, 2, 3)) # [co, ci, 4, 4]
        y = lax.conv_general_dilated(bf(x), bf(wf), window_strides=(1, 1),
                                     padding=((2, 2), (2, 2)), lhs_dilation=(2, 2),
                                     dimension_numbers=dn,
                                     preferred_element_type=jnp.float32)
        y = y + params[f"ct{idx}_b"][None, :, None, None]
        mean = jnp.mean(y, axis=(0, 2, 3), keepdims=True)
        var = jnp.mean(jnp.square(y - mean), axis=(0, 2, 3), keepdims=True)
        y = (params[f"bn{idx}_g"][None, :, None, None] * (y - mean)
             * lax.rsqrt(var + eps) + params[f"bn{idx}_b"][None, :, None, None])
        x = jnp.where(y > 0, y, 0.2 * y).astype(jnp.bfloat16)
    y = lax.conv_general_dilated(bf(x), bf(params["cv_w"]), window_strides=(1, 1),
                                 padding=((1, 1), (1, 1)), dimension_numbers=dn,
                                 preferred_element_type=jnp.float32)
    return jnp.tanh(y + params["cv_b"][None, :, None, None])


if __name__ == "__main__":
    latent_dim, model_dim, channels = 32, 8, 3
    batch = 2

    key = jax.random.PRNGKey(0)
    kz, kp = jax.random.split(key)
    z = jax.random.normal(kz, (batch, latent_dim), jnp.float32)
    params = init_params(kp, latent_dim, model_dim, channels)

    geom = build_geometry(batch, model_dim, channels)       # static python geometry
    packed = pack_params(params, geom)                       # one-time weight repack

    fwd = jax.jit(functools.partial(generator_forward, geom=geom, model_dim=model_dim))
    out = fwd(packed, z)
    jax.block_until_ready(out)

    assert out.shape == (batch, channels, 32, 32), out.shape
    assert bool(jnp.all(jnp.isfinite(out)))
    assert bool(jnp.all(jnp.abs(out) <= 1.0 + 1e-6))        # tanh range

    ref = jax.jit(functools.partial(generator_reference, model_dim=model_dim))(params, z)
    err = float(jnp.max(jnp.abs(out.astype(jnp.float32) - ref)))
    assert err < 3e-2, f"max |pallas - reference| = {err}"
    print("KERNEL_OK")
</pallas_src>

<mosaic_0001>
module attributes {stable_mosaic.version = 11 : i64} {
  func.func @_linear_lrelu_kernel(%arg0: i32, %arg1: memref<2x32xbf16, #tpu.memory_space<vmem>>, %arg2: memref<32x512xbf16, #tpu.memory_space<vmem>>, %arg3: memref<1x512xf32, #tpu.memory_space<vmem>>, %arg4: memref<2x512xbf16, #tpu.memory_space<vmem>>) attributes {dimension_semantics = [#tpu.dimension_semantics<arbitrary>], iteration_bounds = array<i64: 1>, scalar_prefetch = 0 : i64, scratch_operands = 0 : i64, tpu.core_type = #tpu.core_type<tc>, window_params = [{pipeline_mode = #tpu.pipeline_mode<synchronous>, transform_indices = @transform_0, window_bounds = array<i64: 2, 32>}, {pipeline_mode = #tpu.pipeline_mode<synchronous>, transform_indices = @transform_1, window_bounds = array<i64: 32, 512>}, {pipeline_mode = #tpu.pipeline_mode<synchronous>, transform_indices = @transform_2, window_bounds = array<i64: 1, 512>}, {pipeline_mode = #tpu.pipeline_mode<synchronous>, transform_indices = @transform_3, window_bounds = array<i64: 2, 512>}]} {
    %c0 = arith.constant 0 : index
    %c0_0 = arith.constant 0 : index
    %0 = vector.load %arg1[%c0, %c0_0] : memref<2x32xbf16, #tpu.memory_space<vmem>>, vector<2x32xbf16>
    %c0_1 = arith.constant 0 : index
    %c0_2 = arith.constant 0 : index
    %1 = vector.load %arg2[%c0_1, %c0_2] : memref<32x512xbf16, #tpu.memory_space<vmem>>, vector<32x512xbf16>
    %cst = arith.constant dense<0.000000e+00> : vector<2x512xf32>
    %2 = tpu.matmul %0, %1, %cst {dimension_numbers = #tpu.dot_dimension_numbers<[1], [0], [0], [1], [0, 0, 1, 1], [], []>} : vector<2x32xbf16>, vector<32x512xbf16>, vector<2x512xf32> -> vector<2x512xf32>
    %c0_3 = arith.constant 0 : index
    %c0_4 = arith.constant 0 : index
    %3 = vector.load %arg3[%c0_3, %c0_4] : memref<1x512xf32, #tpu.memory_space<vmem>>, vector<1x512xf32>
    %4 = vector.broadcast %3 : vector<1x512xf32> to vector<2x512xf32>
    %5 = arith.addf %2, %4 : vector<2x512xf32>
    %cst_5 = arith.constant 0.000000e+00 : f32
    %6 = vector.broadcast %cst_5 : f32 to vector<2x512xf32>
    %7 = arith.cmpf ogt, %5, %6 : vector<2x512xf32>
    %cst_6 = arith.constant 2.000000e-01 : f32
    %8 = vector.broadcast %cst_6 : f32 to vector<2x512xf32>
    %9 = arith.mulf %8, %5 : vector<2x512xf32>
    %10 = arith.select %7, %5, %9 : vector<2x512xi1>, vector<2x512xf32>
    %11 = arith.truncf %10 : vector<2x512xf32> to vector<2x512xbf16>
    %c0_7 = arith.constant 0 : index
    %c0_8 = arith.constant 0 : index
    %12 = vector.load %arg4[%c0_7, %c0_8] : memref<2x512xbf16, #tpu.memory_space<vmem>>, vector<2x512xbf16>
    tpu.vector_store %arg4[%c0_7, %c0_8], %11 {strides = array<i32>} : memref<2x512xbf16, #tpu.memory_space<vmem>>, vector<2x512xbf16>,
    return
  }
  func.func @transform_0(%arg0: i32) -> (i32, i32) {
    %c0_i32 = arith.constant 0 : i32
    %c0_i32_0 = arith.constant 0 : i32
    %c0_i32_1 = arith.constant 0 : i32
    return %c0_i32, %c0_i32_0 : i32, i32
  }
  func.func @transform_1(%arg0: i32) -> (i32, i32) {
    %c0_i32 = arith.constant 0 : i32
    %c0_i32_0 = arith.constant 0 : i32
    %c0_i32_1 = arith.constant 0 : i32
    return %c0_i32, %c0_i32_0 : i32, i32
  }
  func.func @transform_2(%arg0: i32) -> (i32, i32) {
    %c0_i32 = arith.constant 0 : i32
    %c0_i32_0 = arith.constant 0 : i32
    %c0_i32_1 = arith.constant 0 : i32
    return %c0_i32, %c0_i32_0 : i32, i32
  }
  func.func @transform_3(%arg0: i32) -> (i32, i32) {
    %c0_i32 = arith.constant 0 : i32
    %c0_i32_0 = arith.constant 0 : i32
    %c0_i32_1 = arith.constant 0 : i32
    return %c0_i32, %c0_i32_0 : i32, i32
  }
}

module attributes {stable_mosaic.version = 11 : i64} {
  func.func @_convt_bn_lrelu_kernel(%arg0: i32, %arg1: memref<32x256xbf16, #tpu.memory_space<vmem>>, %arg2: memref<64x288xbf16, #tpu.memory_space<vmem>>, %arg3: memref<16x1xf32, #tpu.memory_space<vmem>>, %arg4: memref<16x1xf32, #tpu.memory_space<vmem>>, %arg5: memref<1x128xf32, #tpu.memory_space<vmem>>, %arg6: memref<64x128xbf16, #tpu.memory_space<vmem>>, %arg7: memref<288x128xbf16, #tpu.memory_space<vmem>>, %arg8: memref<64x128xf32, #tpu.memory_space<vmem>>) attributes {dimension_semantics = [#tpu.dimension_semantics<arbitrary>], iteration_bounds = array<i64: 1>, scalar_prefetch = 0 : i64, scratch_operands = 2 : i64, tpu.core_type = #tpu.core_type<tc>, window_params = [{pipeline_mode = #tpu.pipeline_mode<synchronous>, transform_indices = @transform_0, window_bounds = array<i64: 32, 256>}, {pipeline_mode = #tpu.pipeline_mode<synchronous>, transform_indices = @transform_1, window_bounds = array<i64: 64, 288>}, {pipeline_mode = #tpu.pipeline_mode<synchronous>, transform_indices = @transform_2, window_bounds = array<i64: 16, 1>}, {pipeline_mode = #tpu.pipeline_mode<synchronous>, transform_indices = @transform_3, window_bounds = array<i64: 16, 1>}, {pipeline_mode = #tpu.pipeline_mode<synchronous>, transform_indices = @transform_4, window_bounds = array<i64: 1, 128>}, {pipeline_mode = #tpu.pipeline_mode<synchronous>, transform_indices = @transform_5, window_bounds = array<i64: 64, 128>}]} {
    %c0 = arith.constant 0 : index
    %c0_0 = arith.constant 0 : index
    %0 = vector.load %arg1[%c0, %c0_0] : memref<32x256xbf16, #tpu.memory_space<vmem>>, vector<32x128xbf16>
    %c0_1 = arith.constant 0 : index
    %c0_2 = arith.constant 0 : index
    %1 = vector.load %arg7[%c0_1, %c0_2] : memref<288x128xbf16, #tpu.memory_space<vmem>>, vector<32x128xbf16>
    tpu.vector_store %arg7[%c0_1, %c0_2], %0 {strides = array<i32>} : memref<288x128xbf16, #tpu.memory_space<vmem>>, vector<32x128xbf16>,
    %c0_3 = arith.constant 0 : index
    %c1 = arith.constant 1 : index
    %2 = vector.load %arg1[%c0_3, %c1] : memref<32x256xbf16, #tpu.memory_space<vmem>>, vector<32x128xbf16>
    %c32 = arith.constant 32 : index
    %c0_4 = arith.constant 0 : index
    %3 = vector.load %arg7[%c32, %c0_4] : memref<288x128xbf16, #tpu.memory_space<vmem>>, vector<32x128xbf16>
    tpu.vector_store %arg7[%c32, %c0_4], %2 {strides = array<i32>} : memref<288x128xbf16, #tpu.memory_space<vmem>>, vector<32x128xbf16>,
    %c0_5 = arith.constant 0 : index
    %c2 = arith.constant 2 : index
    %4 = vector.load %arg1[%c0_5, %c2] : memref<32x256xbf16, #tpu.memory_space<vmem>>, vector<32x128xbf16>
    %c64 = arith.constant 64 : index
    %c0_6 = arith.constant 0 : index
    %5 = vector.load %arg7[%c64, %c0_6] : memref<288x128xbf16, #tpu.memory_space<vmem>>, vector<32x128xbf16>
    tpu.vector_store %arg7[%c64, %c0_6], %4 {strides = array<i32>} : memref<288x128xbf16, #tpu.memory_space<vmem>>, vector<32x128xbf16>,
    %c0_7 = arith.constant 0 : index
    %c6 = arith.constant 6 : index
    %6 = vector.load %arg1[%c0_7, %c6] : memref<32x256xbf16, #tpu.memory_space<vmem>>, vector<32x128xbf16>
    %c96 = arith.constant 96 : index
    %c0_8 = arith.constant 0 : index
    %7 = vector.load %arg7[%c96, %c0_8] : memref<288x128xbf16, #tpu.memory_space<vmem>>, vector<32x128xbf16>
    tpu.vector_store %arg7[%c96, %c0_8], %6 {strides = array<i32>} : memref<288x128xbf16, #tpu.memory_space<vmem>>, vector<32x128xbf16>,
    %c0_9 = arith.constant 0 : index
    %c7 = arith.constant 7 : index
    %8 = vector.load %arg1[%c0_9, %c7] : memref<32x256xbf16, #tpu.memory_space<vmem>>, vector<32x128xbf16>
    %c128 = arith.constant 128 : index
    %c0_10 = arith.constant 0 : index
    %9 = vector.load %arg7[%c128, %c0_10] : memref<288x128xbf16, #tpu.memory_space<vmem>>, vector<32x128xbf16>
    tpu.vector_store %arg7[%c128, %c0_10], %8 {strides = array<i32>} : memref<288x128xbf16, #tpu.memory_space<vmem>>, vector<32x128xbf16>,
    %c0_11 = arith.constant 0 : index
    %c8 = arith.constant 8 : index
    %10 = vector.load %arg1[%c0_11, %c8] : memref<32x256xbf16, #tpu.memory_space<vmem>>, vector<32x128xbf16>
    %c160 = arith.constant 160 : index
    %c0_12 = arith.constant 0 : index
    %11 = vector.load %arg7[%c160, %c0_12] : memref<288x128xbf16, #tpu.memory_space<vmem>>, vector<32x128xbf16>
    tpu.vector_store %arg7[%c160, %c0_12], %10 {strides = array<i32>} : memref<288x128xbf16, #tpu.memory_space<vmem>>, vector<32x128xbf16>,
    %c0_13 = arith.constant 0 : index
    %c12 = arith.constant 12 : index
    %12 = vector.load %arg1[%c0_13, %c12] : memref<32x256xbf16, #tpu.memory_space<vmem>>, vector<32x128xbf16>
    %c192 = arith.constant 192 : index
    %c0_14 = arith.constant 0 : index
    %13 = vector.load %arg7[%c192, %c0_14] : memref<288x128xbf16, #tpu.memory_space<vmem>>, vector<32x128xbf16>
    tpu.vector_store %arg7[%c192, %c0_14], %12 {strides = array<i32>} : memref<288x128xbf16, #tpu.memory_space<vmem>>, vector<32x128xbf16>,
    %c0_15 = arith.constant 0 : index
    %c13 = arith.constant 13 : index
    %14 = vector.load %arg1[%c0_15, %c13] : memref<32x256xbf16, #tpu.memory_space<vmem>>, vector<32x128xbf16>
    %c224 = arith.constant 224 : index
    %c0_16 = arith.constant 0 : index
    %15 = vector.load %arg7[%c224, %c0_16] : memref<288x128xbf16, #tpu.memory_space<vmem>>, vector<32x128xbf16>
    tpu.vector_store %arg7[%c224, %c0_16], %14 {strides = array<i32>} : memref<288x128xbf16, #tpu.memory_space<vmem>>, vector<32x128xbf16>,
    %c0_17 = arith.constant 0 : index
    %c14 = arith.constant 14 : index
    %16 = vector.load %arg1[%c0_17, %c14] : memref<32x256xbf16, #tpu.memory_space<vmem>>, vector<32x128xbf16>
    %c256 = arith.constant 256 : index
    %c0_18 = arith.constant 0 : index
    %17 = vector.load %arg7[%c256, %c0_18] : memref<288x128xbf16, #tpu.memory_space<vmem>>, vector<32x128xbf16>
    tpu.vector_store %arg7[%c256, %c0_18], %16 {strides = array<i32>} : memref<288x128xbf16, #tpu.memory_space<vmem>>, vector<32x128xbf16>,
    %c0_19 = arith.constant 0 : index
    %c0_20 = arith.constant 0 : index
    %18 = vector.load %arg2[%c0_19, %c0_20] : memref<64x288xbf16, #tpu.memory_space<vmem>>, vector<64x288xbf16>
    %c0_21 = arith.constant 0 : index
    %c0_22 = arith.constant 0 : index
    %19 = vector.load %arg7[%c0_21, %c0_22] : memref<288x128xbf16, #tpu.memory_space<vmem>>, vector<288x128xbf16>
    %cst = arith.constant dense<0.000000e+00> : vector<64x128xf32>
    %20 = tpu.matmul %18, %19, %cst {dimension_numbers = #tpu.dot_dimension_numbers<[1], [0], [0], [1], [0, 0, 1, 1], [], []>} : vector<64x288xbf16>, vector<288x128xbf16>, vector<64x128xf32> -> vector<64x128xf32>
    %c0_23 = arith.constant 0 : index
    %c0_24 = arith.constant 0 : index
    %21 = vector.load %arg8[%c0_23, %c0_24] : memref<64x128xf32, #tpu.memory_space<vmem>>, vector<64x128xf32>
    tpu.vector_store %arg8[%c0_23, %c0_24], %20 {strides = array<i32>} : memref<64x128xf32, #tpu.memory_space<vmem>>, vector<64x128xf32>,
    %c0_25 = arith.constant 0 : index
    %c0_26 = arith.constant 0 : index
    %22 = vector.load %arg5[%c0_25, %c0_26] : memref<1x128xf32, #tpu.memory_space<vmem>>, vector<1x128xf32>
    %cst_27 = arith.constant 0.000000e+00 : f32
    %23 = vector.broadcast %cst_27 : f32 to vector<16x1xf32>
    %c0_28 = arith.constant 0 : index
    %c0_29 = arith.constant 0 : index
    %24 = vector.load %arg8[%c0_28, %c0_29] : memref<64x128xf32, #tpu.memory_space<vmem>>, vector<16x128xf32>
    %25 = vector.broadcast %22 : vector<1x128xf32> to vector<16x128xf32>
    %26 = arith.mulf %24, %25 : vector<16x128xf32>
    %cst_30 = arith.constant dense<0.000000e+00> : vector<16xf32>
    %27 = vector.multi_reduction <add>, %26, %cst_30 [1] : vector<16x128xf32> to vector<16xf32>
    %28 = vector.shape_cast %27 : vector<16xf32> to vector<16x1xf32>
    %29 = arith.addf %23, %28 : vector<16x1xf32>
    %c16 = arith.constant 16 : index
    %c0_31 = arith.constant 0 : index
    %30 = vector.load %arg8[%c16, %c0_31] : memref<64x128xf32, #tpu.memory_space<vmem>>, vector<16x128xf32>
    %31 = vector.broadcast %22 : vector<1x128xf32> to vector<16x128xf32>
    %32 = arith.mulf %30, %31 : vector<16x128xf32>
    %cst_32 = arith.constant dense<0.000000e+00> : vector<16xf32>
    %33 = vector.multi_reduction <add>, %32, %cst_32 [1] : vector<16x128xf32> to vector<16xf32>
    %34 = vector.shape_cast %33 : vector<16xf32> to vector<16x1xf32>
    %35 = arith.addf %29, %34 : vector<16x1xf32>
    %c32_33 = arith.constant 32 : index
    %c0_34 = arith.constant 0 : index
    %36 = vector.load %arg8[%c32_33, %c0_34] : memref<64x128xf32, #tpu.memory_space<vmem>>, vector<16x128xf32>
    %37 = vector.broadcast %22 : vector<1x128xf32> to vector<16x128xf32>
    %38 = arith.mulf %36, %37 : vector<16x128xf32>
    %cst_35 = arith.constant dense<0.000000e+00> : vector<16xf32>
    %39 = vector.multi_reduction <add>, %38, %cst_35 [1] : vector<16x128xf32> to vector<16xf32>
    %40 = vector.shape_cast %39 : vector<16xf32> to vector<16x1xf32>
    %41 = arith.addf %35, %40 : vector<16x1xf32>
    %c48 = arith.constant 48 : index
    %c0_36 = arith.constant 0 : index
    %42 = vector.load %arg8[%c48, %c0_36] : memref<64x128xf32, #tpu.memory_space<vmem>>, vector<16x128xf32>
    %43 = vector.broadcast %22 : vector<1x128xf32> to vector<16x128xf32>
    %44 = arith.mulf %42, %43 : vector<16x128xf32>
    %cst_37 = arith.constant dense<0.000000e+00> : vector<16xf32>
    %45 = vector.multi_reduction <add>, %44, %cst_37 [1] : vector<16x128xf32> to vector<16xf32>
    %46 = vector.shape_cast %45 : vector<16xf32> to vector<16x1xf32>
    %47 = arith.addf %41, %46 : vector<16x1xf32>
    %cst_38 = arith.constant 7.812500e-03 : f32
    %48 = vector.broadcast %cst_38 : f32 to vector<16x1xf32>
    %49 = arith.mulf %47, %48 : vector<16x1xf32>
    %cst_39 = arith.constant 0.000000e+00 : f32
    %50 = vector.broadcast %cst_39 : f32 to vector<16x1xf32>
    %c0_40 = arith.constant 0 : index
    %c0_41 = arith.constant 0 : index
    %51 = vector.load %arg8[%c0_40, %c0_41] : memref<64x128xf32, #tpu.memory_space<vmem>>, vector<16x128xf32>
    %52 = vector.broadcast %49 : vector<16x1xf32> to vector<16x128xf32>
    %53 = arith.subf %51, %52 : vector<16x128xf32>
    %54 = vector.broadcast %22 : vector<1x128xf32> to vector<16x128xf32>
    %55 = arith.mulf %53, %54 : vector<16x128xf32>
    %56 = arith.mulf %55, %55 : vector<16x128xf32>
    %cst_42 = arith.constant dense<0.000000e+00> : vector<16xf32>
    %57 = vector.multi_reduction <add>, %56, %cst_42 [1] : vector<16x128xf32> to vector<16xf32>
    %58 = vector.shape_cast %57 : vector<16xf32> to vector<16x1xf32>
    %59 = arith.addf %50, %58 : vector<16x1xf32>
    %c16_43 = arith.constant 16 : index
    %c0_44 = arith.constant 0 : index
    %60 = vector.load %arg8[%c16_43, %c0_44] : memref<64x128xf32, #tpu.memory_space<vmem>>, vector<16x128xf32>
    %61 = vector.broadcast %49 : vector<16x1xf32> to vector<16x128xf32>
    %62 = arith.subf %60, %61 : vector<16x128xf32>
    %63 = vector.broadcast %22 : vector<1x128xf32> to vector<16x128xf32>
    %64 = arith.mulf %62, %63 : vector<16x128xf32>
    %65 = arith.mulf %64, %64 : vector<16x128xf32>
    %cst_45 = arith.constant dense<0.000000e+00> : vector<16xf32>
    %66 = vector.multi_reduction <add>, %65, %cst_45 [1] : vector<16x128xf32> to vector<16xf32>
    %67 = vector.shape_cast %66 : vector<16xf32> to vector<16x1xf32>
    %68 = arith.addf %59, %67 : vector<16x1xf32>
    %c32_46 = arith.constant 32 : index
    %c0_47 = arith.constant 0 : index
    %69 = vector.load %arg8[%c32_46, %c0_47] : memref<64x128xf32, #tpu.memory_space<vmem>>, vector<16x128xf32>
    %70 = vector.broadcast %49 : vector<16x1xf32> to vector<16x128xf32>
    %71 = arith.subf %69, %70 : vector<16x128xf32>
    %72 = vector.broadcast %22 : vector<1x128xf32> to vector<16x128xf32>
    %73 = arith.mulf %71, %72 : vector<16x128xf32>
    %74 = arith.mulf %73, %73 : vector<16x128xf32>
    %cst_48 = arith.constant dense<0.000000e+00> : vector<16xf32>
    %75 = vector.multi_reduction <add>, %74, %cst_48 [1] : vector<16x128xf32> to vector<16xf32>
    %76 = vector.shape_cast %75 : vector<16xf32> to vector<16x1xf32>
    %77 = arith.addf %68, %76 : vector<16x1xf32>
    %c48_49 = arith.constant 48 : index
    %c0_50 = arith.constant 0 : index
    %78 = vector.load %arg8[%c48_49, %c0_50] : memref<64x128xf32, #tpu.memory_space<vmem>>, vector<16x128xf32>
    %79 = vector.broadcast %49 : vector<16x1xf32> to vector<16x128xf32>
    %80 = arith.subf %78, %79 : vector<16x128xf32>
    %81 = vector.broadcast %22 : vector<1x128xf32> to vector<16x128xf32>
    %82 = arith.mulf %80, %81 : vector<16x128xf32>
    %83 = arith.mulf %82, %82 : vector<16x128xf32>
    %cst_51 = arith.constant dense<0.000000e+00> : vector<16xf32>
    %84 = vector.multi_reduction <add>, %83, %cst_51 [1] : vector<16x128xf32> to vector<16xf32>
    %85 = vector.shape_cast %84 : vector<16xf32> to vector<16x1xf32>
    %86 = arith.addf %77, %85 : vector<16x1xf32>
    %cst_52 = arith.constant 7.812500e-03 : f32
    %87 = vector.broadcast %cst_52 : f32 to vector<16x1xf32>
    %88 = arith.mulf %86, %87 : vector<16x1xf32>
    %c0_53 = arith.constant 0 : index
    %c0_54 = arith.constant 0 : index
    %89 = vector.load %arg3[%c0_53, %c0_54] : memref<16x1xf32, #tpu.memory_space<vmem>>, vector<16x1xf32>
    %cst_55 = arith.constant 9.99999974E-6 : f32
    %90 = vector.broadcast %cst_55 : f32 to vector<16x1xf32>
    %91 = arith.addf %88, %90 : vector<16x1xf32>
    %92 = math.rsqrt %91 : vector<16x1xf32>
    %93 = arith.mulf %89, %92 : vector<16x1xf32>
    %c0_56 = arith.constant 0 : index
    %c0_57 = arith.constant 0 : index
    %94 = vector.load %arg4[%c0_56, %c0_57] : memref<16x1xf32, #tpu.memory_space<vmem>>, vector<16x1xf32>
    %95 = arith.mulf %49, %93 : vector<16x1xf32>
    %96 = arith.subf %94, %95 : vector<16x1xf32>
    %c0_58 = arith.constant 0 : index
    %c0_59 = arith.constant 0 : index
    %97 = vector.load %arg8[%c0_58, %c0_59] : memref<64x128xf32, #tpu.memory_space<vmem>>, vector<16x128xf32>
    %98 = vector.broadcast %93 : vector<16x1xf32> to vector<16x128xf32>
    %99 = arith.mulf %97, %98 : vector<16x128xf32>
    %100 = vector.broadcast %96 : vector<16x1xf32> to vector<16x128xf32>
    %101 = arith.addf %99, %100 : vector<16x128xf32>
    %cst_60 = arith.constant 0.000000e+00 : f32
    %102 = vector.broadcast %cst_60 : f32 to vector<16x128xf32>
    %103 = arith.cmpf ogt, %101, %102 : vector<16x128xf32>
    %cst_61 = arith.constant 2.000000e-01 : f32
    %104 = vector.broadcast %cst_61 : f32 to vector<16x128xf32>
    %105 = arith.mulf %104, %101 : vector<16x128xf32>
    %106 = arith.select %103, %101, %105 : vector<16x128xi1>, vector<16x128xf32>
    %107 = arith.truncf %106 : vector<16x128xf32> to vector<16x128xbf16>
    %c0_62 = arith.constant 0 : index
    %c0_63 = arith.constant 0 : index
    %108 = vector.load %arg6[%c0_62, %c0_63] : memref<64x128xbf16, #tpu.memory_space<vmem>>, vector<16x128xbf16>
    tpu.vector_store %arg6[%c0_62, %c0_63], %107 {strides = array<i32>} : memref<64x128xbf16, #tpu.memory_space<vmem>>, vector<16x128xbf16>,
    %c16_64 = arith.constant 16 : index
    %c0_65 = arith.constant 0 : index
    %109 = vector.load %arg8[%c16_64, %c0_65] : memref<64x128xf32, #tpu.memory_space<vmem>>, vector<16x128xf32>
    %110 = vector.broadcast %93 : vector<16x1xf32> to vector<16x128xf32>
    %111 = arith.mulf %109, %110 : vector<16x128xf32>
    %112 = vector.broadcast %96 : vector<16x1xf32> to vector<16x128xf32>
    %113 = arith.addf %111, %112 : vector<16x128xf32>
    %cst_66 = arith.constant 0.000000e+00 : f32
    %114 = vector.broadcast %cst_66 : f32 to vector<16x128xf32>
    %115 = arith.cmpf ogt, %113, %114 : vector<16x128xf32>
    %cst_67 = arith.constant 2.000000e-01 : f32
    %116 = vector.broadcast %cst_67 : f32 to vector<16x128xf32>
    %117 = arith.mulf %116, %113 : vector<16x128xf32>
    %118 = arith.select %115, %113, %117 : vector<16x128xi1>, vector<16x128xf32>
    %119 = arith.truncf %118 : vector<16x128xf32> to vector<16x128xbf16>
    %c16_68 = arith.constant 16 : index
    %c0_69 = arith.constant 0 : index
    %120 = vector.load %arg6[%c16_68, %c0_69] : memref<64x128xbf16, #tpu.memory_space<vmem>>, vector<16x128xbf16>
    tpu.vector_store %arg6[%c16_68, %c0_69], %119 {strides = array<i32>} : memref<64x128xbf16, #tpu.memory_space<vmem>>, vector<16x128xbf16>,
    %c32_70 = arith.constant 32 : index
    %c0_71 = arith.constant 0 : index
    %121 = vector.load %arg8[%c32_70, %c0_71] : memref<64x128xf32, #tpu.memory_space<vmem>>, vector<16x128xf32>
    %122 = vector.broadcast %93 : vector<16x1xf32> to vector<16x128xf32>
    %123 = arith.mulf %121, %122 : vector<16x128xf32>
    %124 = vector.broadcast %96 : vector<16x1xf32> to vector<16x128xf32>
    %125 = arith.addf %123, %124 : vector<16x128xf32>
    %cst_72 = arith.constant 0.000000e+00 : f32
    %126 = vector.broadcast %cst_72 : f32 to vector<16x128xf32>
    %127 = arith.cmpf ogt, %125, %126 : vector<16x128xf32>
    %cst_73 = arith.constant 2.000000e-01 : f32
    %128 = vector.broadcast %cst_73 : f32 to vector<16x128xf32>
    %129 = arith.mulf %128, %125 : vector<16x128xf32>
    %130 = arith.select %127, %125, %129 : vector<16x128xi1>, vector<16x128xf32>
    %131 = arith.truncf %130 : vector<16x128xf32> to vector<16x128xbf16>
    %c32_74 = arith.constant 32 : index
    %c0_75 = arith.constant 0 : index
    %132 = vector.load %arg6[%c32_74, %c0_75] : memref<64x128xbf16, #tpu.memory_space<vmem>>, vector<16x128xbf16>
    tpu.vector_store %arg6[%c32_74, %c0_75], %131 {strides = array<i32>} : memref<64x128xbf16, #tpu.memory_space<vmem>>, vector<16x128xbf16>,
    %c48_76 = arith.constant 48 : index
    %c0_77 = arith.constant 0 : index
    %133 = vector.load %arg8[%c48_76, %c0_77] : memref<64x128xf32, #tpu.memory_space<vmem>>, vector<16x128xf32>
    %134 = vector.broadcast %93 : vector<16x1xf32> to vector<16x128xf32>
    %135 = arith.mulf %133, %134 : vector<16x128xf32>
    %136 = vector.broadcast %96 : vector<16x1xf32> to vector<16x128xf32>
    %137 = arith.addf %135, %136 : vector<16x128xf32>
    %cst_78 = arith.constant 0.000000e+00 : f32
    %138 = vector.broadcast %cst_78 : f32 to vector<16x128xf32>
    %139 = arith.cmpf ogt, %137, %138 : vector<16x128xf32>
    %cst_79 = arith.constant 2.000000e-01 : f32
    %140 = vector.broadcast %cst_79 : f32 to vector<16x128xf32>
    %141 = arith.mulf %140, %137 : vector<16x128xf32>
    %142 = arith.select %139, %137, %141 : vector<16x128xi1>, vector<16x128xf32>
    %143 = arith.truncf %142 : vector<16x128xf32> to vector<16x128xbf16>
    %c48_80 = arith.constant 48 : index
    %c0_81 = arith.constant 0 : index
    %144 = vector.load %arg6[%c48_80, %c0_81] : memref<64x128xbf16, #tpu.memory_space<vmem>>, vector<16x128xbf16>
    tpu.vector_store %arg6[%c48_80, %c0_81], %143 {strides = array<i32>} : memref<64x128xbf16, #tpu.memory_space<vmem>>, vector<16x128xbf16>,
    return
  }
  func.func @transform_0(%arg0: i32) -> (i32, i32) {
    %c0_i32 = arith.constant 0 : i32
    %c0_i32_0 = arith.constant 0 : i32
    %c0_i32_1 = arith.constant 0 : i32
    return %c0_i32, %c0_i32_0 : i32, i32
  }
  func.func @transform_1(%arg0: i32) -> (i32, i32) {
    %c0_i32 = arith.constant 0 : i32
    %c0_i32_0 = arith.constant 0 : i32
    %c0_i32_1 = arith.constant 0 : i32
    return %c0_i32, %c0_i32_0 : i32, i32
  }
  func.func @transform_2(%arg0: i32) -> (i32, i32) {
    %c0_i32 = arith.constant 0 : i32
    %c0_i32_0 = arith.constant 0 : i32
    %c0_i32_1 = arith.constant 0 : i32
    return %c0_i32, %c0_i32_0 : i32, i32
  }
  func.func @transform_3(%arg0: i32) -> (i32, i32) {
    %c0_i32 = arith.constant 0 : i32
    %c0_i32_0 = arith.constant 0 : i32
    %c0_i32_1 = arith.constant 0 : i32
    return %c0_i32, %c0_i32_0 : i32, i32
  }
  func.func @transform_4(%arg0: i32) -> (i32, i32) {
    %c0_i32 = arith.constant 0 : i32
    %c0_i32_0 = arith.constant 0 : i32
    %c0_i32_1 = arith.constant 0 : i32
    return %c0_i32, %c0_i32_0 : i32, i32
  }
  func.func @transform_5(%arg0: i32) -> (i32, i32) {
    %c0_i32 = arith.constant 0 : i32
    %c0_i32_0 = arith.constant 0 : i32
    %c0_i32_1 = arith.constant 0 : i32
    return %c0_i32, %c0_i32_0 : i32, i32
  }
}

module attributes {stable_mosaic.version = 11 : i64} {
  func.func @_convt_bn_lrelu_kernel(%arg0: i32, %arg1: memref<16x384xbf16, #tpu.memory_space<vmem>>, %arg2: memref<64x144xbf16, #tpu.memory_space<vmem>>, %arg3: memref<16x1xf32, #tpu.memory_space<vmem>>, %arg4: memref<16x1xf32, #tpu.memory_space<vmem>>, %arg5: memref<1x256xf32, #tpu.memory_space<vmem>>, %arg6: memref<64x256xbf16, #tpu.memory_space<vmem>>, %arg7: memref<144x256xbf16, #tpu.memory_space<vmem>>, %arg8: memref<64x256xf32, #tpu.memory_space<vmem>>) attributes {dimension_semantics = [#tpu.dimension_semantics<arbitrary>], iteration_bounds = array<i64: 1>, scalar_prefetch = 0 : i64, scratch_operands = 2 : i64, tpu.core_type = #tpu.core_type<tc>, window_params = [{pipeline_mode = #tpu.pipeline_mode<synchronous>, transform_indices = @transform_0, window_bounds = array<i64: 16, 384>}, {pipeline_mode = #tpu.pipeline_mode<synchronous>, transform_indices = @transform_1, window_bounds = array<i64: 64, 144>}, {pipeline_mode = #tpu.pipeline_mode<synchronous>, transform_indices = @transform_2, window_bounds = array<i64: 16, 1>}, {pipeline_mode = #tpu.pipeline_mode<synchronous>, transform_indices = @transform_3, window_bounds = array<i64: 16, 1>}, {pipeline_mode = #tpu.pipeline_mode<synchronous>, transform_indices = @transform_4, window_bounds = array<i64: 1, 256>}, {pipeline_mode = #tpu.pipeline_mode<synchronous>, transform_indices = @transform_5, window_bounds = array<i64: 64, 256>}]} {
    %c0 = arith.constant 0 : index
    %c0_0 = arith.constant 0 : index
    %0 = vector.load %arg1[%c0, %c0_0] : memref<16x384xbf16, #tpu.memory_space<vmem>>, vector<16x256xbf16>
    %c0_1 = arith.constant 0 : index
    %c0_2 = arith.constant 0 : index
    %1 = vector.load %arg7[%c0_1, %c0_2] : memref<144x256xbf16, #tpu.memory_space<vmem>>, vector<16x256xbf16>
    tpu.vector_store %arg7[%c0_1, %c0_2], %0 {strides = array<i32>} : memref<144x256xbf16, #tpu.memory_space<vmem>>, vector<16x256xbf16>,
    %c0_3 = arith.constant 0 : index
    %c1 = arith.constant 1 : index
    %2 = vector.load %arg1[%c0_3, %c1] : memref<16x384xbf16, #tpu.memory_space<vmem>>, vector<16x256xbf16>
    %c16 = arith.constant 16 : index
    %c0_4 = arith.constant 0 : index
    %3 = vector.load %arg7[%c16, %c0_4] : memref<144x256xbf16, #tpu.memory_space<vmem>>, vector<16x256xbf16>
    tpu.vector_store %arg7[%c16, %c0_4], %2 {strides = array<i32>} : memref<144x256xbf16, #tpu.memory_space<vmem>>, vector<16x256xbf16>,
    %c0_5 = arith.constant 0 : index
    %c2 = arith.constant 2 : index
    %4 = vector.load %arg1[%c0_5, %c2] : memref<16x384xbf16, #tpu.memory_space<vmem>>, vector<16x256xbf16>
    %c32 = arith.constant 32 : index
    %c0_6 = arith.constant 0 : index
    %5 = vector.load %arg7[%c32, %c0_6] : memref<144x256xbf16, #tpu.memory_space<vmem>>, vector<16x256xbf16>
    tpu.vector_store %arg7[%c32, %c0_6], %4 {strides = array<i32>} : memref<144x256xbf16, #tpu.memory_space<vmem>>, vector<16x256xbf16>,
    %c0_7 = arith.constant 0 : index
    %c10 = arith.constant 10 : index
    %6 = vector.load %arg1[%c0_7, %c10] : memref<16x384xbf16, #tpu.memory_space<vmem>>, vector<16x256xbf16>
    %c48 = arith.constant 48 : index
    %c0_8 = arith.constant 0 : index
    %7 = vector.load %arg7[%c48, %c0_8] : memref<144x256xbf16, #tpu.memory_space<vmem>>, vector<16x256xbf16>
    tpu.vector_store %arg7[%c48, %c0_8], %6 {strides = array<i32>} : memref<144x256xbf16, #tpu.memory_space<vmem>>, vector<16x256xbf16>,
    %c0_9 = arith.constant 0 : index
    %c11 = arith.constant 11 : index
    %8 = vector.load %arg1[%c0_9, %c11] : memref<16x384xbf16, #tpu.memory_space<vmem>>, vector<16x256xbf16>
    %c64 = arith.constant 64 : index
    %c0_10 = arith.constant 0 : index
    %9 = vector.load %arg7[%c64, %c0_10] : memref<144x256xbf16, #tpu.memory_space<vmem>>, vector<16x256xbf16>
    tpu.vector_store %arg7[%c64, %c0_10], %8 {strides = array<i32>} : memref<144x256xbf16, #tpu.memory_space<vmem>>, vector<16x256xbf16>,
    %c0_11 = arith.constant 0 : index
    %c12 = arith.constant 12 : index
    %10 = vector.load %arg1[%c0_11, %c12] : memref<16x384xbf16, #tpu.memory_space<vmem>>, vector<16x256xbf16>
    %c80 = arith.constant 80 : index
    %c0_12 = arith.constant 0 : index
    %11 = vector.load %arg7[%c80, %c0_12] : memref<144x256xbf16, #tpu.memory_space<vmem>>, vector<16x256xbf16>
    tpu.vector_store %arg7[%c80, %c0_12], %10 {strides = array<i32>} : memref<144x256xbf16, #tpu.memory_space<vmem>>, vector<16x256xbf16>,
    %c0_13 = arith.constant 0 : index
    %c20 = arith.constant 20 : index
    %12 = vector.load %arg1[%c0_13, %c20] : memref<16x384xbf16, #tpu.memory_space<vmem>>, vector<16x256xbf16>
    %c96 = arith.constant 96 : index
    %c0_14 = arith.constant 0 : index
    %13 = vector.load %arg7[%c96, %c0_14] : memref<144x256xbf16, #tpu.memory_space<vmem>>, vector<16x256xbf16>
    tpu.vector_store %arg7[%c96, %c0_14], %12 {strides = array<i32>} : memref<144x256xbf16, #tpu.memory_space<vmem>>, vector<16x256xbf16>,
    %c0_15 = arith.constant 0 : index
    %c21 = arith.constant 21 : index
    %14 = vector.load %arg1[%c0_15, %c21] : memref<16x384xbf16, #tpu.memory_space<vmem>>, vector<16x256xbf16>
    %c112 = arith.constant 112 : index
    %c0_16 = arith.constant 0 : index
    %15 = vector.load %arg7[%c112, %c0_16] : memref<144x256xbf16, #tpu.memory_space<vmem>>, vector<16x256xbf16>
    tpu.vector_store %arg7[%c112, %c0_16], %14 {strides = array<i32>} : memref<144x256xbf16, #tpu.memory_space<vmem>>, vector<16x256xbf16>,
    %c0_17 = arith.constant 0 : index
    %c22 = arith.constant 22 : index
    %16 = vector.load %arg1[%c0_17, %c22] : memref<16x384xbf16, #tpu.memory_space<vmem>>, vector<16x256xbf16>
    %c128 = arith.constant 128 : index
    %c0_18 = arith.constant 0 : index
    %17 = vector.load %arg7[%c128, %c0_18] : memref<144x256xbf16, #tpu.memory_space<vmem>>, vector<16x256xbf16>
    tpu.vector_store %arg7[%c128, %c0_18], %16 {strides = array<i32>} : memref<144x256xbf16, #tpu.memory_space<vmem>>, vector<16x256xbf16>,
    %c0_19 = arith.constant 0 : index
    %c0_20 = arith.constant 0 : index
    %18 = vector.load %arg2[%c0_19, %c0_20] : memref<64x144xbf16, #tpu.memory_space<vmem>>, vector<64x144xbf16>
    %c0_21 = arith.constant 0 : index
    %c0_22 = arith.constant 0 : index
    %19 = vector.load %arg7[%c0_21, %c0_22] : memref<144x256xbf16, #tpu.memory_space<vmem>>, vector<144x256xbf16>
    %cst = arith.constant dense<0.000000e+00> : vector<64x256xf32>
    %20 = tpu.matmul %18, %19, %cst {dimension_numbers = #tpu.dot_dimension_numbers<[1], [0], [0], [1], [0, 0, 1, 1], [], []>} : vector<64x144xbf16>, vector<144x256xbf16>, vector<64x256xf32> -> vector<64x256xf32>
    %c0_23 = arith.constant 0 : index
    %c0_24 = arith.constant 0 : index
    %21 = vector.load %arg8[%c0_23, %c0_24] : memref<64x256xf32, #tpu.memory_space<vmem>>, vector<64x256xf32>
    tpu.vector_store %arg8[%c0_23, %c0_24], %20 {strides = array<i32>} : memref<64x256xf32, #tpu.memory_space<vmem>>, vector<64x256xf32>,
    %c0_25 = arith.constant 0 : index
    %c0_26 = arith.constant 0 : index
    %22 = vector.load %arg5[%c0_25, %c0_26] : memref<1x256xf32, #tpu.memory_space<vmem>>, vector<1x256xf32>
    %cst_27 = arith.constant 0.000000e+00 : f32
    %23 = vector.broadcast %cst_27 : f32 to vector<16x1xf32>
    %c0_28 = arith.constant 0 : index
    %c0_29 = arith.constant 0 : index
    %24 = vector.load %arg8[%c0_28, %c0_29] : memref<64x256xf32, #tpu.memory_space<vmem>>, vector<16x256xf32>
    %25 = vector.broadcast %22 : vector<1x256xf32> to vector<16x256xf32>
    %26 = arith.mulf %24, %25 : vector<16x256xf32>
    %cst_30 = arith.constant dense<0.000000e+00> : vector<16xf32>
    %27 = vector.multi_reduction <add>, %26, %cst_30 [1] : vector<16x256xf32> to vector<16xf32>
    %28 = vector.shape_cast %27 : vector<16xf32> to vector<16x1xf32>
    %29 = arith.addf %23, %28 : vector<16x1xf32>
    %c16_31 = arith.constant 16 : index
    %c0_32 = arith.constant 0 : index
    %30 = vector.load %arg8[%c16_31, %c0_32] : memref<64x256xf32, #tpu.memory_space<vmem>>, vector<16x256xf32>
    %31 = vector.broadcast %22 : vector<1x256xf32> to vector<16x256xf32>
    %32 = arith.mulf %30, %31 : vector<16x256xf32>
    %cst_33 = arith.constant dense<0.000000e+00> : vector<16xf32>
    %33 = vector.multi_reduction <add>, %32, %cst_33 [1] : vector<16x256xf32> to vector<16xf32>
    %34 = vector.shape_cast %33 : vector<16xf32> to vector<16x1xf32>
    %35 = arith.addf %29, %34 : vector<16x1xf32>
    %c32_34 = arith.constant 32 : index
    %c0_35 = arith.constant 0 : index
    %36 = vector.load %arg8[%c32_34, %c0_35] : memref<64x256xf32, #tpu.memory_space<vmem>>, vector<16x256xf32>
    %37 = vector.broadcast %22 : vector<1x256xf32> to vector<16x256xf32>
    %38 = arith.mulf %36, %37 : vector<16x256xf32>
    %cst_36 = arith.constant dense<0.000000e+00> : vector<16xf32>
    %39 = vector.multi_reduction <add>, %38, %cst_36 [1] : vector<16x256xf32> to vector<16xf32>
    %40 = vector.shape_cast %39 : vector<16xf32> to vector<16x1xf32>
    %41 = arith.addf %35, %40 : vector<16x1xf32>
    %c48_37 = arith.constant 48 : index
    %c0_38 = arith.constant 0 : index
    %42 = vector.load %arg8[%c48_37, %c0_38] : memref<64x256xf32, #tpu.memory_space<vmem>>, vector<16x256xf32>
    %43 = vector.broadcast %22 : vector<1x256xf32> to vector<16x256xf32>
    %44 = arith.mulf %42, %43 : vector<16x256xf32>
    %cst_39 = arith.constant dense<0.000000e+00> : vector<16xf32>
    %45 = vector.multi_reduction <add>, %44, %cst_39 [1] : vector<16x256xf32> to vector<16xf32>
    %46 = vector.shape_cast %45 : vector<16xf32> to vector<16x1xf32>
    %47 = arith.addf %41, %46 : vector<16x1xf32>
    %cst_40 = arith.constant 0.001953125 : f32
    %48 = vector.broadcast %cst_40 : f32 to vector<16x1xf32>
    %49 = arith.mulf %47, %48 : vector<16x1xf32>
    %cst_41 = arith.constant 0.000000e+00 : f32
    %50 = vector.broadcast %cst_41 : f32 to vector<16x1xf32>
    %c0_42 = arith.constant 0 : index
    %c0_43 = arith.constant 0 : index
    %51 = vector.load %arg8[%c0_42, %c0_43] : memref<64x256xf32, #tpu.memory_space<vmem>>, vector<16x256xf32>
    %52 = vector.broadcast %49 : vector<16x1xf32> to vector<16x256xf32>
    %53 = arith.subf %51, %52 : vector<16x256xf32>
    %54 = vector.broadcast %22 : vector<1x256xf32> to vector<16x256xf32>
    %55 = arith.mulf %53, %54 : vector<16x256xf32>
    %56 = arith.mulf %55, %55 : vector<16x256xf32>
    %cst_44 = arith.constant dense<0.000000e+00> : vector<16xf32>
    %57 = vector.multi_reduction <add>, %56, %cst_44 [1] : vector<16x256xf32> to vector<16xf32>
    %58 = vector.shape_cast %57 : vector<16xf32> to vector<16x1xf32>
    %59 = arith.addf %50, %58 : vector<16x1xf32>
    %c16_45 = arith.constant 16 : index
    %c0_46 = arith.constant 0 : index
    %60 = vector.load %arg8[%c16_45, %c0_46] : memref<64x256xf32, #tpu.memory_space<vmem>>, vector<16x256xf32>
    %61 = vector.broadcast %49 : vector<16x1xf32> to vector<16x256xf32>
    %62 = arith.subf %60, %61 : vector<16x256xf32>
    %63 = vector.broadcast %22 : vector<1x256xf32> to vector<16x256xf32>
    %64 = arith.mulf %62, %63 : vector<16x256xf32>
    %65 = arith.mulf %64, %64 : vector<16x256xf32>
    %cst_47 = arith.constant dense<0.000000e+00> : vector<16xf32>
    %66 = vector.multi_reduction <add>, %65, %cst_47 [1] : vector<16x256xf32> to vector<16xf32>
    %67 = vector.shape_cast %66 : vector<16xf32> to vector<16x1xf32>
    %68 = arith.addf %59, %67 : vector<16x1xf32>
    %c32_48 = arith.constant 32 : index
    %c0_49 = arith.constant 0 : index
    %69 = vector.load %arg8[%c32_48, %c0_49] : memref<64x256xf32, #tpu.memory_space<vmem>>, vector<16x256xf32>
    %70 = vector.broadcast %49 : vector<16x1xf32> to vector<16x256xf32>
    %71 = arith.subf %69, %70 : vector<16x256xf32>
    %72 = vector.broadcast %22 : vector<1x256xf32> to vector<16x256xf32>
    %73 = arith.mulf %71, %72 : vector<16x256xf32>
    %74 = arith.mulf %73, %73 : vector<16x256xf32>
    %cst_50 = arith.constant dense<0.000000e+00> : vector<16xf32>
    %75 = vector.multi_reduction <add>, %74, %cst_50 [1] : vector<16x256xf32> to vector<16xf32>
    %76 = vector.shape_cast %75 : vector<16xf32> to vector<16x1xf32>
    %77 = arith.addf %68, %76 : vector<16x1xf32>
    %c48_51 = arith.constant 48 : index
    %c0_52 = arith.constant 0 : index
    %78 = vector.load %arg8[%c48_51, %c0_52] : memref<64x256xf32, #tpu.memory_space<vmem>>, vector<16x256xf32>
    %79 = vector.broadcast %49 : vector<16x1xf32> to vector<16x256xf32>
    %80 = arith.subf %78, %79 : vector<16x256xf32>
    %81 = vector.broadcast %22 : vector<1x256xf32> to vector<16x256xf32>
    %82 = arith.mulf %80, %81 : vector<16x256xf32>
    %83 = arith.mulf %82, %82 : vector<16x256xf32>
    %cst_53 = arith.constant dense<0.000000e+00> : vector<16xf32>
    %84 = vector.multi_reduction <add>, %83, %cst_53 [1] : vector<16x256xf32> to vector<16xf32>
    %85 = vector.shape_cast %84 : vector<16xf32> to vector<16x1xf32>
    %86 = arith.addf %77, %85 : vector<16x1xf32>
    %cst_54 = arith.constant 0.001953125 : f32
    %87 = vector.broadcast %cst_54 : f32 to vector<16x1xf32>
    %88 = arith.mulf %86, %87 : vector<16x1xf32>
    %c0_55 = arith.constant 0 : index
    %c0_56 = arith.constant 0 : index
    %89 = vector.load %arg3[%c0_55, %c0_56] : memref<16x1xf32, #tpu.memory_space<vmem>>, vector<16x1xf32>
    %cst_57 = arith.constant 9.99999974E-6 : f32
    %90 = vector.broadcast %cst_57 : f32 to vector<16x1xf32>
    %91 = arith.addf %88, %90 : vector<16x1xf32>
    %92 = math.rsqrt %91 : vector<16x1xf32>
    %93 = arith.mulf %89, %92 : vector<16x1xf32>
    %c0_58 = arith.constant 0 : index
    %c0_59 = arith.constant 0 : index
    %94 = vector.load %arg4[%c0_58, %c0_59] : memref<16x1xf32, #tpu.memory_space<vmem>>, vector<16x1xf32>
    %95 = arith.mulf %49, %93 : vector<16x1xf32>
    %96 = arith.subf %94, %95 : vector<16x1xf32>
    %c0_60 = arith.constant 0 : index
    %c0_61 = arith.constant 0 : index
    %97 = vector.load %arg8[%c0_60, %c0_61] : memref<64x256xf32, #tpu.memory_space<vmem>>, vector<16x256xf32>
    %98 = vector.broadcast %93 : vector<16x1xf32> to vector<16x256xf32>
    %99 = arith.mulf %97, %98 : vector<16x256xf32>
    %100 = vector.broadcast %96 : vector<16x1xf32> to vector<16x256xf32>
    %101 = arith.addf %99, %100 : vector<16x256xf32>
    %cst_62 = arith.constant 0.000000e+00 : f32
    %102 = vector.broadcast %cst_62 : f32 to vector<16x256xf32>
    %103 = arith.cmpf ogt, %101, %102 : vector<16x256xf32>
    %cst_63 = arith.constant 2.000000e-01 : f32
    %104 = vector.broadcast %cst_63 : f32 to vector<16x256xf32>
    %105 = arith.mulf %104, %101 : vector<16x256xf32>
    %106 = arith.select %103, %101, %105 : vector<16x256xi1>, vector<16x256xf32>
    %107 = arith.truncf %106 : vector<16x256xf32> to vector<16x256xbf16>
    %c0_64 = arith.constant 0 : index
    %c0_65 = arith.constant 0 : index
    %108 = vector.load %arg6[%c0_64, %c0_65] : memref<64x256xbf16, #tpu.memory_space<vmem>>, vector<16x256xbf16>
    tpu.vector_store %arg6[%c0_64, %c0_65], %107 {strides = array<i32>} : memref<64x256xbf16, #tpu.memory_space<vmem>>, vector<16x256xbf16>,
    %c16_66 = arith.constant 16 : index
    %c0_67 = arith.constant 0 : index
    %109 = vector.load %arg8[%c16_66, %c0_67] : memref<64x256xf32, #tpu.memory_space<vmem>>, vector<16x256xf32>
    %110 = vector.broadcast %93 : vector<16x1xf32> to vector<16x256xf32>
    %111 = arith.mulf %109, %110 : vector<16x256xf32>
    %112 = vector.broadcast %96 : vector<16x1xf32> to vector<16x256xf32>
    %113 = arith.addf %111, %112 : vector<16x256xf32>
    %cst_68 = arith.constant 0.000000e+00 : f32
    %114 = vector.broadcast %cst_68 : f32 to vector<16x256xf32>
    %115 = arith.cmpf ogt, %113, %114 : vector<16x256xf32>
    %cst_69 = arith.constant 2.000000e-01 : f32
    %116 = vector.broadcast %cst_69 : f32 to vector<16x256xf32>
    %117 = arith.mulf %116, %113 : vector<16x256xf32>
    %118 = arith.select %115, %113, %117 : vector<16x256xi1>, vector<16x256xf32>
    %119 = arith.truncf %118 : vector<16x256xf32> to vector<16x256xbf16>
    %c16_70 = arith.constant 16 : index
    %c0_71 = arith.constant 0 : index
    %120 = vector.load %arg6[%c16_70, %c0_71] : memref<64x256xbf16, #tpu.memory_space<vmem>>, vector<16x256xbf16>
    tpu.vector_store %arg6[%c16_70, %c0_71], %119 {strides = array<i32>} : memref<64x256xbf16, #tpu.memory_space<vmem>>, vector<16x256xbf16>,
    %c32_72 = arith.constant 32 : index
    %c0_73 = arith.constant 0 : index
    %121 = vector.load %arg8[%c32_72, %c0_73] : memref<64x256xf32, #tpu.memory_space<vmem>>, vector<16x256xf32>
    %122 = vector.broadcast %93 : vector<16x1xf32> to vector<16x256xf32>
    %123 = arith.mulf %121, %122 : vector<16x256xf32>
    %124 = vector.broadcast %96 : vector<16x1xf32> to vector<16x256xf32>
    %125 = arith.addf %123, %124 : vector<16x256xf32>
    %cst_74 = arith.constant 0.000000e+00 : f32
    %126 = vector.broadcast %cst_74 : f32 to vector<16x256xf32>
    %127 = arith.cmpf ogt, %125, %126 : vector<16x256xf32>
    %cst_75 = arith.constant 2.000000e-01 : f32
    %128 = vector.broadcast %cst_75 : f32 to vector<16x256xf32>
    %129 = arith.mulf %128, %125 : vector<16x256xf32>
    %130 = arith.select %127, %125, %129 : vector<16x256xi1>, vector<16x256xf32>
    %131 = arith.truncf %130 : vector<16x256xf32> to vector<16x256xbf16>
    %c32_76 = arith.constant 32 : index
    %c0_77 = arith.constant 0 : index
    %132 = vector.load %arg6[%c32_76, %c0_77] : memref<64x256xbf16, #tpu.memory_space<vmem>>, vector<16x256xbf16>
    tpu.vector_store %arg6[%c32_76, %c0_77], %131 {strides = array<i32>} : memref<64x256xbf16, #tpu.memory_space<vmem>>, vector<16x256xbf16>,
    %c48_78 = arith.constant 48 : index
    %c0_79 = arith.constant 0 : index
    %133 = vector.load %arg8[%c48_78, %c0_79] : memref<64x256xf32, #tpu.memory_space<vmem>>, vector<16x256xf32>
    %134 = vector.broadcast %93 : vector<16x1xf32> to vector<16x256xf32>
    %135 = arith.mulf %133, %134 : vector<16x256xf32>
    %136 = vector.broadcast %96 : vector<16x1xf32> to vector<16x256xf32>
    %137 = arith.addf %135, %136 : vector<16x256xf32>
    %cst_80 = arith.constant 0.000000e+00 : f32
    %138 = vector.broadcast %cst_80 : f32 to vector<16x256xf32>
    %139 = arith.cmpf ogt, %137, %138 : vector<16x256xf32>
    %cst_81 = arith.constant 2.000000e-01 : f32
    %140 = vector.broadcast %cst_81 : f32 to vector<16x256xf32>
    %141 = arith.mulf %140, %137 : vector<16x256xf32>
    %142 = arith.select %139, %137, %141 : vector<16x256xi1>, vector<16x256xf32>
    %143 = arith.truncf %142 : vector<16x256xf32> to vector<16x256xbf16>
    %c48_82 = arith.constant 48 : index
    %c0_83 = arith.constant 0 : index
    %144 = vector.load %arg6[%c48_82, %c0_83] : memref<64x256xbf16, #tpu.memory_space<vmem>>, vector<16x256xbf16>
    tpu.vector_store %arg6[%c48_82, %c0_83], %143 {strides = array<i32>} : memref<64x256xbf16, #tpu.memory_space<vmem>>, vector<16x256xbf16>,
    return
  }
  func.func @transform_0(%arg0: i32) -> (i32, i32) {
    %c0_i32 = arith.constant 0 : i32
    %c0_i32_0 = arith.constant 0 : i32
    %c0_i32_1 = arith.constant 0 : i32
    return %c0_i32, %c0_i32_0 : i32, i32
  }
  func.func @transform_1(%arg0: i32) -> (i32, i32) {
    %c0_i32 = arith.constant 0 : i32
    %c0_i32_0 = arith.constant 0 : i32
    %c0_i32_1 = arith.constant 0 : i32
    return %c0_i32, %c0_i32_0 : i32, i32
  }
  func.func @transform_2(%arg0: i32) -> (i32, i32) {
    %c0_i32 = arith.constant 0 : i32
    %c0_i32_0 = arith.constant 0 : i32
    %c0_i32_1 = arith.constant 0 : i32
    return %c0_i32, %c0_i32_0 : i32, i32
  }
  func.func @transform_3(%arg0: i32) -> (i32, i32) {
    %c0_i32 = arith.constant 0 : i32
    %c0_i32_0 = arith.constant 0 : i32
    %c0_i32_1 = arith.constant 0 : i32
    return %c0_i32, %c0_i32_0 : i32, i32
  }
  func.func @transform_4(%arg0: i32) -> (i32, i32) {
    %c0_i32 = arith.constant 0 : i32
    %c0_i32_0 = arith.constant 0 : i32
    %c0_i32_1 = arith.constant 0 : i32
    return %c0_i32, %c0_i32_0 : i32, i32
  }
  func.func @transform_5(%arg0: i32) -> (i32, i32) {
    %c0_i32 = arith.constant 0 : i32
    %c0_i32_0 = arith.constant 0 : i32
    %c0_i32_1 = arith.constant 0 : i32
    return %c0_i32, %c0_i32_0 : i32, i32
  }
}

module attributes {stable_mosaic.version = 11 : i64} {
  func.func @_convt_bn_lrelu_kernel(%arg0: i32, %arg1: memref<16x896xbf16, #tpu.memory_space<vmem>>, %arg2: memref<32x144xbf16, #tpu.memory_space<vmem>>, %arg3: memref<8x1xf32, #tpu.memory_space<vmem>>, %arg4: memref<8x1xf32, #tpu.memory_space<vmem>>, %arg5: memref<1x768xf32, #tpu.memory_space<vmem>>, %arg6: memref<32x768xbf16, #tpu.memory_space<vmem>>, %arg7: memref<144x768xbf16, #tpu.memory_space<vmem>>, %arg8: memref<32x768xf32, #tpu.memory_space<vmem>>) attributes {dimension_semantics = [#tpu.dimension_semantics<arbitrary>], iteration_bounds = array<i64: 1>, scalar_prefetch = 0 : i64, scratch_operands = 2 : i64, tpu.core_type = #tpu.core_type<tc>, window_params = [{pipeline_mode = #tpu.pipeline_mode<synchronous>, transform_indices = @transform_0, window_bounds = array<i64: 16, 896>}, {pipeline_mode = #tpu.pipeline_mode<synchronous>, transform_indices = @transform_1, window_bounds = array<i64: 32, 144>}, {pipeline_mode = #tpu.pipeline_mode<synchronous>, transform_indices = @transform_2, window_bounds = array<i64: 8, 1>}, {pipeline_mode = #tpu.pipeline_mode<synchronous>, transform_indices = @transform_3, window_bounds = array<i64: 8, 1>}, {pipeline_mode = #tpu.pipeline_mode<synchronous>, transform_indices = @transform_4, window_bounds = array<i64: 1, 768>}, {pipeline_mode = #tpu.pipeline_mode<synchronous>, transform_indices = @transform_5, window_bounds = array<i64: 32, 768>}]} {
    %c0 = arith.constant 0 : index
    %c0_0 = arith.constant 0 : index
    %0 = vector.load %arg1[%c0, %c0_0] : memref<16x896xbf16, #tpu.memory_space<vmem>>, vector<16x768xbf16>
    %c0_1 = arith.constant 0 : index
    %c0_2 = arith.constant 0 : index
    %1 = vector.load %arg7[%c0_1, %c0_2] : memref<144x768xbf16, #tpu.memory_space<vmem>>, vector<16x768xbf16>
    tpu.vector_store %arg7[%c0_1, %c0_2], %0 {strides = array<i32>} : memref<144x768xbf16, #tpu.memory_space<vmem>>, vector<16x768xbf16>,
    %c0_3 = arith.constant 0 : index
    %c1 = arith.constant 1 : index
    %2 = vector.load %arg1[%c0_3, %c1] : memref<16x896xbf16, #tpu.memory_space<vmem>>, vector<16x768xbf16>
    %c16 = arith.constant 16 : index
    %c0_4 = arith.constant 0 : index
    %3 = vector.load %arg7[%c16, %c0_4] : memref<144x768xbf16, #tpu.memory_space<vmem>>, vector<16x768xbf16>
    tpu.vector_store %arg7[%c16, %c0_4], %2 {strides = array<i32>} : memref<144x768xbf16, #tpu.memory_space<vmem>>, vector<16x768xbf16>,
    %c0_5 = arith.constant 0 : index
    %c2 = arith.constant 2 : index
    %4 = vector.load %arg1[%c0_5, %c2] : memref<16x896xbf16, #tpu.memory_space<vmem>>, vector<16x768xbf16>
    %c32 = arith.constant 32 : index
    %c0_6 = arith.constant 0 : index
    %5 = vector.load %arg7[%c32, %c0_6] : memref<144x768xbf16, #tpu.memory_space<vmem>>, vector<16x768xbf16>
    tpu.vector_store %arg7[%c32, %c0_6], %4 {strides = array<i32>} : memref<144x768xbf16, #tpu.memory_space<vmem>>, vector<16x768xbf16>,
    %c0_7 = arith.constant 0 : index
    %c18 = arith.constant 18 : index
    %6 = vector.load %arg1[%c0_7, %c18] : memref<16x896xbf16, #tpu.memory_space<vmem>>, vector<16x768xbf16>
    %c48 = arith.constant 48 : index
    %c0_8 = arith.constant 0 : index
    %7 = vector.load %arg7[%c48, %c0_8] : memref<144x768xbf16, #tpu.memory_space<vmem>>, vector<16x768xbf16>
    tpu.vector_store %arg7[%c48, %c0_8], %6 {strides = array<i32>} : memref<144x768xbf16, #tpu.memory_space<vmem>>, vector<16x768xbf16>,
    %c0_9 = arith.constant 0 : index
    %c19 = arith.constant 19 : index
    %8 = vector.load %arg1[%c0_9, %c19] : memref<16x896xbf16, #tpu.memory_space<vmem>>, vector<16x768xbf16>
    %c64 = arith.constant 64 : index
    %c0_10 = arith.constant 0 : index
    %9 = vector.load %arg7[%c64, %c0_10] : memref<144x768xbf16, #tpu.memory_space<vmem>>, vector<16x768xbf16>
    tpu.vector_store %arg7[%c64, %c0_10], %8 {strides = array<i32>} : memref<144x768xbf16, #tpu.memory_space<vmem>>, vector<16x768xbf16>,
    %c0_11 = arith.constant 0 : index
    %c20 = arith.constant 20 : index
    %10 = vector.load %arg1[%c0_11, %c20] : memref<16x896xbf16, #tpu.memory_space<vmem>>, vector<16x768xbf16>
    %c80 = arith.constant 80 : index
    %c0_12 = arith.constant 0 : index
    %11 = vector.load %arg7[%c80, %c0_12] : memref<144x768xbf16, #tpu.memory_space<vmem>>, vector<16x768xbf16>
    tpu.vector_store %arg7[%c80, %c0_12], %10 {strides = array<i32>} : memref<144x768xbf16, #tpu.memory_space<vmem>>, vector<16x768xbf16>,
    %c0_13 = arith.constant 0 : index
    %c36 = arith.constant 36 : index
    %12 = vector.load %arg1[%c0_13, %c36] : memref<16x896xbf16, #tpu.memory_space<vmem>>, vector<16x768xbf16>
    %c96 = arith.constant 96 : index
    %c0_14 = arith.constant 0 : index
    %13 = vector.load %arg7[%c96, %c0_14] : memref<144x768xbf16, #tpu.memory_space<vmem>>, vector<16x768xbf16>
    tpu.vector_store %arg7[%c96, %c0_14], %12 {strides = array<i32>} : memref<144x768xbf16, #tpu.memory_space<vmem>>, vector<16x768xbf16>,
    %c0_15 = arith.constant 0 : index
    %c37 = arith.constant 37 : index
    %14 = vector.load %arg1[%c0_15, %c37] : memref<16x896xbf16, #tpu.memory_space<vmem>>, vector<16x768xbf16>
    %c112 = arith.constant 112 : index
    %c0_16 = arith.constant 0 : index
    %15 = vector.load %arg7[%c112, %c0_16] : memref<144x768xbf16, #tpu.memory_space<vmem>>, vector<16x768xbf16>
    tpu.vector_store %arg7[%c112, %c0_16], %14 {strides = array<i32>} : memref<144x768xbf16, #tpu.memory_space<vmem>>, vector<16x768xbf16>,
    %c0_17 = arith.constant 0 : index
    %c38 = arith.constant 38 : index
    %16 = vector.load %arg1[%c0_17, %c38] : memref<16x896xbf16, #tpu.memory_space<vmem>>, vector<16x768xbf16>
    %c128 = arith.constant 128 : index
    %c0_18 = arith.constant 0 : index
    %17 = vector.load %arg7[%c128, %c0_18] : memref<144x768xbf16, #tpu.memory_space<vmem>>, vector<16x768xbf16>
    tpu.vector_store %arg7[%c128, %c0_18], %16 {strides = array<i32>} : memref<144x768xbf16, #tpu.memory_space<vmem>>, vector<16x768xbf16>,
    %c0_19 = arith.constant 0 : index
    %c0_20 = arith.constant 0 : index
    %18 = vector.load %arg2[%c0_19, %c0_20] : memref<32x144xbf16, #tpu.memory_space<vmem>>, vector<32x144xbf16>
    %c0_21 = arith.constant 0 : index
    %c0_22 = arith.constant 0 : index
    %19 = vector.load %arg7[%c0_21, %c0_22] : memref<144x768xbf16, #tpu.memory_space<vmem>>, vector<144x768xbf16>
    %cst = arith.constant dense<0.000000e+00> : vector<32x768xf32>
    %20 = tpu.matmul %18, %19, %cst {dimension_numbers = #tpu.dot_dimension_numbers<[1], [0], [0], [1], [0, 0, 1, 1], [], []>} : vector<32x144xbf16>, vector<144x768xbf16>, vector<32x768xf32> -> vector<32x768xf32>
    %c0_23 = arith.constant 0 : index
    %c0_24 = arith.constant 0 : index
    %21 = vector.load %arg8[%c0_23, %c0_24] : memref<32x768xf32, #tpu.memory_space<vmem>>, vector<32x768xf32>
    tpu.vector_store %arg8[%c0_23, %c0_24], %20 {strides = array<i32>} : memref<32x768xf32, #tpu.memory_space<vmem>>, vector<32x768xf32>,
    %c0_25 = arith.constant 0 : index
    %c0_26 = arith.constant 0 : index
    %22 = vector.load %arg5[%c0_25, %c0_26] : memref<1x768xf32, #tpu.memory_space<vmem>>, vector<1x768xf32>
    %cst_27 = arith.constant 0.000000e+00 : f32
    %23 = vector.broadcast %cst_27 : f32 to vector<8x1xf32>
    %c0_28 = arith.constant 0 : index
    %c0_29 = arith.constant 0 : index
    %24 = vector.load %arg8[%c0_28, %c0_29] : memref<32x768xf32, #tpu.memory_space<vmem>>, vector<8x768xf32>
    %25 = vector.broadcast %22 : vector<1x768xf32> to vector<8x768xf32>
    %26 = arith.mulf %24, %25 : vector<8x768xf32>
    %cst_30 = arith.constant dense<0.000000e+00> : vector<8xf32>
    %27 = vector.multi_reduction <add>, %26, %cst_30 [1] : vector<8x768xf32> to vector<8xf32>
    %28 = vector.shape_cast %27 : vector<8xf32> to vector<8x1xf32>
    %29 = arith.addf %23, %28 : vector<8x1xf32>
    %c8 = arith.constant 8 : index
    %c0_31 = arith.constant 0 : index
    %30 = vector.load %arg8[%c8, %c0_31] : memref<32x768xf32, #tpu.memory_space<vmem>>, vector<8x768xf32>
    %31 = vector.broadcast %22 : vector<1x768xf32> to vector<8x768xf32>
    %32 = arith.mulf %30, %31 : vector<8x768xf32>
    %cst_32 = arith.constant dense<0.000000e+00> : vector<8xf32>
    %33 = vector.multi_reduction <add>, %32, %cst_32 [1] : vector<8x768xf32> to vector<8xf32>
    %34 = vector.shape_cast %33 : vector<8xf32> to vector<8x1xf32>
    %35 = arith.addf %29, %34 : vector<8x1xf32>
    %c16_33 = arith.constant 16 : index
    %c0_34 = arith.constant 0 : index
    %36 = vector.load %arg8[%c16_33, %c0_34] : memref<32x768xf32, #tpu.memory_space<vmem>>, vector<8x768xf32>
    %37 = vector.broadcast %22 : vector<1x768xf32> to vector<8x768xf32>
    %38 = arith.mulf %36, %37 : vector<8x768xf32>
    %cst_35 = arith.constant dense<0.000000e+00> : vector<8xf32>
    %39 = vector.multi_reduction <add>, %38, %cst_35 [1] : vector<8x768xf32> to vector<8xf32>
    %40 = vector.shape_cast %39 : vector<8xf32> to vector<8x1xf32>
    %41 = arith.addf %35, %40 : vector<8x1xf32>
    %c24 = arith.constant 24 : index
    %c0_36 = arith.constant 0 : index
    %42 = vector.load %arg8[%c24, %c0_36] : memref<32x768xf32, #tpu.memory_space<vmem>>, vector<8x768xf32>
    %43 = vector.broadcast %22 : vector<1x768xf32> to vector<8x768xf32>
    %44 = arith.mulf %42, %43 : vector<8x768xf32>
    %cst_37 = arith.constant dense<0.000000e+00> : vector<8xf32>
    %45 = vector.multi_reduction <add>, %44, %cst_37 [1] : vector<8x768xf32> to vector<8xf32>
    %46 = vector.shape_cast %45 : vector<8xf32> to vector<8x1xf32>
    %47 = arith.addf %41, %46 : vector<8x1xf32>
    %cst_38 = arith.constant 4.8828125E-4 : f32
    %48 = vector.broadcast %cst_38 : f32 to vector<8x1xf32>
    %49 = arith.mulf %47, %48 : vector<8x1xf32>
    %cst_39 = arith.constant 0.000000e+00 : f32
    %50 = vector.broadcast %cst_39 : f32 to vector<8x1xf32>
    %c0_40 = arith.constant 0 : index
    %c0_41 = arith.constant 0 : index
    %51 = vector.load %arg8[%c0_40, %c0_41] : memref<32x768xf32, #tpu.memory_space<vmem>>, vector<8x768xf32>
    %52 = vector.broadcast %49 : vector<8x1xf32> to vector<8x768xf32>
    %53 = arith.subf %51, %52 : vector<8x768xf32>
    %54 = vector.broadcast %22 : vector<1x768xf32> to vector<8x768xf32>
    %55 = arith.mulf %53, %54 : vector<8x768xf32>
    %56 = arith.mulf %55, %55 : vector<8x768xf32>
    %cst_42 = arith.constant dense<0.000000e+00> : vector<8xf32>
    %57 = vector.multi_reduction <add>, %56, %cst_42 [1] : vector<8x768xf32> to vector<8xf32>
    %58 = vector.shape_cast %57 : vector<8xf32> to vector<8x1xf32>
    %59 = arith.addf %50, %58 : vector<8x1xf32>
    %c8_43 = arith.constant 8 : index
    %c0_44 = arith.constant 0 : index
    %60 = vector.load %arg8[%c8_43, %c0_44] : memref<32x768xf32, #tpu.memory_space<vmem>>, vector<8x768xf32>
    %61 = vector.broadcast %49 : vector<8x1xf32> to vector<8x768xf32>
    %62 = arith.subf %60, %61 : vector<8x768xf32>
    %63 = vector.broadcast %22 : vector<1x768xf32> to vector<8x768xf32>
    %64 = arith.mulf %62, %63 : vector<8x768xf32>
    %65 = arith.mulf %64, %64 : vector<8x768xf32>
    %cst_45 = arith.constant dense<0.000000e+00> : vector<8xf32>
    %66 = vector.multi_reduction <add>, %65, %cst_45 [1] : vector<8x768xf32> to vector<8xf32>
    %67 = vector.shape_cast %66 : vector<8xf32> to vector<8x1xf32>
    %68 = arith.addf %59, %67 : vector<8x1xf32>
    %c16_46 = arith.constant 16 : index
    %c0_47 = arith.constant 0 : index
    %69 = vector.load %arg8[%c16_46, %c0_47] : memref<32x768xf32, #tpu.memory_space<vmem>>, vector<8x768xf32>
    %70 = vector.broadcast %49 : vector<8x1xf32> to vector<8x768xf32>
    %71 = arith.subf %69, %70 : vector<8x768xf32>
    %72 = vector.broadcast %22 : vector<1x768xf32> to vector<8x768xf32>
    %73 = arith.mulf %71, %72 : vector<8x768xf32>
    %74 = arith.mulf %73, %73 : vector<8x768xf32>
    %cst_48 = arith.constant dense<0.000000e+00> : vector<8xf32>
    %75 = vector.multi_reduction <add>, %74, %cst_48 [1] : vector<8x768xf32> to vector<8xf32>
    %76 = vector.shape_cast %75 : vector<8xf32> to vector<8x1xf32>
    %77 = arith.addf %68, %76 : vector<8x1xf32>
    %c24_49 = arith.constant 24 : index
    %c0_50 = arith.constant 0 : index
    %78 = vector.load %arg8[%c24_49, %c0_50] : memref<32x768xf32, #tpu.memory_space<vmem>>, vector<8x768xf32>
    %79 = vector.broadcast %49 : vector<8x1xf32> to vector<8x768xf32>
    %80 = arith.subf %78, %79 : vector<8x768xf32>
    %81 = vector.broadcast %22 : vector<1x768xf32> to vector<8x768xf32>
    %82 = arith.mulf %80, %81 : vector<8x768xf32>
    %83 = arith.mulf %82, %82 : vector<8x768xf32>
    %cst_51 = arith.constant dense<0.000000e+00> : vector<8xf32>
    %84 = vector.multi_reduction <add>, %83, %cst_51 [1] : vector<8x768xf32> to vector<8xf32>
    %85 = vector.shape_cast %84 : vector<8xf32> to vector<8x1xf32>
    %86 = arith.addf %77, %85 : vector<8x1xf32>
    %cst_52 = arith.constant 4.8828125E-4 : f32
    %87 = vector.broadcast %cst_52 : f32 to vector<8x1xf32>
    %88 = arith.mulf %86, %87 : vector<8x1xf32>
    %c0_53 = arith.constant 0 : index
    %c0_54 = arith.constant 0 : index
    %89 = vector.load %arg3[%c0_53, %c0_54] : memref<8x1xf32, #tpu.memory_space<vmem>>, vector<8x1xf32>
    %cst_55 = arith.constant 9.99999974E-6 : f32
    %90 = vector.broadcast %cst_55 : f32 to vector<8x1xf32>
    %91 = arith.addf %88, %90 : vector<8x1xf32>
    %92 = math.rsqrt %91 : vector<8x1xf32>
    %93 = arith.mulf %89, %92 : vector<8x1xf32>
    %c0_56 = arith.constant 0 : index
    %c0_57 = arith.constant 0 : index
    %94 = vector.load %arg4[%c0_56, %c0_57] : memref<8x1xf32, #tpu.memory_space<vmem>>, vector<8x1xf32>
    %95 = arith.mulf %49, %93 : vector<8x1xf32>
    %96 = arith.subf %94, %95 : vector<8x1xf32>
    %c0_58 = arith.constant 0 : index
    %c0_59 = arith.constant 0 : index
    %97 = vector.load %arg8[%c0_58, %c0_59] : memref<32x768xf32, #tpu.memory_space<vmem>>, vector<8x768xf32>
    %98 = vector.broadcast %93 : vector<8x1xf32> to vector<8x768xf32>
    %99 = arith.mulf %97, %98 : vector<8x768xf32>
    %100 = vector.broadcast %96 : vector<8x1xf32> to vector<8x768xf32>
    %101 = arith.addf %99, %100 : vector<8x768xf32>
    %cst_60 = arith.constant 0.000000e+00 : f32
    %102 = vector.broadcast %cst_60 : f32 to vector<8x768xf32>
    %103 = arith.cmpf ogt, %101, %102 : vector<8x768xf32>
    %cst_61 = arith.constant 2.000000e-01 : f32
    %104 = vector.broadcast %cst_61 : f32 to vector<8x768xf32>
    %105 = arith.mulf %104, %101 : vector<8x768xf32>
    %106 = arith.select %103, %101, %105 : vector<8x768xi1>, vector<8x768xf32>
    %107 = arith.truncf %106 : vector<8x768xf32> to vector<8x768xbf16>
    %c0_62 = arith.constant 0 : index
    %c0_63 = arith.constant 0 : index
    %108 = vector.load %arg6[%c0_62, %c0_63] : memref<32x768xbf16, #tpu.memory_space<vmem>>, vector<8x768xbf16>
    tpu.vector_store %arg6[%c0_62, %c0_63], %107 {strides = array<i32>} : memref<32x768xbf16, #tpu.memory_space<vmem>>, vector<8x768xbf16>,
    %c8_64 = arith.constant 8 : index
    %c0_65 = arith.constant 0 : index
    %109 = vector.load %arg8[%c8_64, %c0_65] : memref<32x768xf32, #tpu.memory_space<vmem>>, vector<8x768xf32>
    %110 = vector.broadcast %93 : vector<8x1xf32> to vector<8x768xf32>
    %111 = arith.mulf %109, %110 : vector<8x768xf32>
    %112 = vector.broadcast %96 : vector<8x1xf32> to vector<8x768xf32>
    %113 = arith.addf %111, %112 : vector<8x768xf32>
    %cst_66 = arith.constant 0.000000e+00 : f32
    %114 = vector.broadcast %cst_66 : f32 to vector<8x768xf32>
    %115 = arith.cmpf ogt, %113, %114 : vector<8x768xf32>
    %cst_67 = arith.constant 2.000000e-01 : f32
    %116 = vector.broadcast %cst_67 : f32 to vector<8x768xf32>
    %117 = arith.mulf %116, %113 : vector<8x768xf32>
    %118 = arith.select %115, %113, %117 : vector<8x768xi1>, vector<8x768xf32>
    %119 = arith.truncf %118 : vector<8x768xf32> to vector<8x768xbf16>
    %c8_68 = arith.constant 8 : index
    %c0_69 = arith.constant 0 : index
    %120 = vector.load %arg6[%c8_68, %c0_69] : memref<32x768xbf16, #tpu.memory_space<vmem>>, vector<8x768xbf16>
    tpu.vector_store %arg6[%c8_68, %c0_69], %119 {strides = array<i32>} : memref<32x768xbf16, #tpu.memory_space<vmem>>, vector<8x768xbf16>,
    %c16_70 = arith.constant 16 : index
    %c0_71 = arith.constant 0 : index
    %121 = vector.load %arg8[%c16_70, %c0_71] : memref<32x768xf32, #tpu.memory_space<vmem>>, vector<8x768xf32>
    %122 = vector.broadcast %93 : vector<8x1xf32> to vector<8x768xf32>
    %123 = arith.mulf %121, %122 : vector<8x768xf32>
    %124 = vector.broadcast %96 : vector<8x1xf32> to vector<8x768xf32>
    %125 = arith.addf %123, %124 : vector<8x768xf32>
    %cst_72 = arith.constant 0.000000e+00 : f32
    %126 = vector.broadcast %cst_72 : f32 to vector<8x768xf32>
    %127 = arith.cmpf ogt, %125, %126 : vector<8x768xf32>
    %cst_73 = arith.constant 2.000000e-01 : f32
    %128 = vector.broadcast %cst_73 : f32 to vector<8x768xf32>
    %129 = arith.mulf %128, %125 : vector<8x768xf32>
    %130 = arith.select %127, %125, %129 : vector<8x768xi1>, vector<8x768xf32>
    %131 = arith.truncf %130 : vector<8x768xf32> to vector<8x768xbf16>
    %c16_74 = arith.constant 16 : index
    %c0_75 = arith.constant 0 : index
    %132 = vector.load %arg6[%c16_74, %c0_75] : memref<32x768xbf16, #tpu.memory_space<vmem>>, vector<8x768xbf16>
    tpu.vector_store %arg6[%c16_74, %c0_75], %131 {strides = array<i32>} : memref<32x768xbf16, #tpu.memory_space<vmem>>, vector<8x768xbf16>,
    %c24_76 = arith.constant 24 : index
    %c0_77 = arith.constant 0 : index
    %133 = vector.load %arg8[%c24_76, %c0_77] : memref<32x768xf32, #tpu.memory_space<vmem>>, vector<8x768xf32>
    %134 = vector.broadcast %93 : vector<8x1xf32> to vector<8x768xf32>
    %135 = arith.mulf %133, %134 : vector<8x768xf32>
    %136 = vector.broadcast %96 : vector<8x1xf32> to vector<8x768xf32>
    %137 = arith.addf %135, %136 : vector<8x768xf32>
    %cst_78 = arith.constant 0.000000e+00 : f32
    %138 = vector.broadcast %cst_78 : f32 to vector<8x768xf32>
    %139 = arith.cmpf ogt, %137, %138 : vector<8x768xf32>
    %cst_79 = arith.constant 2.000000e-01 : f32
    %140 = vector.broadcast %cst_79 : f32 to vector<8x768xf32>
    %141 = arith.mulf %140, %137 : vector<8x768xf32>
    %142 = arith.select %139, %137, %141 : vector<8x768xi1>, vector<8x768xf32>
    %143 = arith.truncf %142 : vector<8x768xf32> to vector<8x768xbf16>
    %c24_80 = arith.constant 24 : index
    %c0_81 = arith.constant 0 : index
    %144 = vector.load %arg6[%c24_80, %c0_81] : memref<32x768xbf16, #tpu.memory_space<vmem>>, vector<8x768xbf16>
    tpu.vector_store %arg6[%c24_80, %c0_81], %143 {strides = array<i32>} : memref<32x768xbf16, #tpu.memory_space<vmem>>, vector<8x768xbf16>,
    return
  }
  func.func @transform_0(%arg0: i32) -> (i32, i32) {
    %c0_i32 = arith.constant 0 : i32
    %c0_i32_0 = arith.constant 0 : i32
    %c0_i32_1 = arith.constant 0 : i32
    return %c0_i32, %c0_i32_0 : i32, i32
  }
  func.func @transform_1(%arg0: i32) -> (i32, i32) {
    %c0_i32 = arith.constant 0 : i32
    %c0_i32_0 = arith.constant 0 : i32
    %c0_i32_1 = arith.constant 0 : i32
    return %c0_i32, %c0_i32_0 : i32, i32
  }
  func.func @transform_2(%arg0: i32) -> (i32, i32) {
    %c0_i32 = arith.constant 0 : i32
    %c0_i32_0 = arith.constant 0 : i32
    %c0_i32_1 = arith.constant 0 : i32
    return %c0_i32, %c0_i32_0 : i32, i32
  }
  func.func @transform_3(%arg0: i32) -> (i32, i32) {
    %c0_i32 = arith.constant 0 : i32
    %c0_i32_0 = arith.constant 0 : i32
    %c0_i32_1 = arith.constant 0 : i32
    return %c0_i32, %c0_i32_0 : i32, i32
  }
  func.func @transform_4(%arg0: i32) -> (i32, i32) {
    %c0_i32 = arith.constant 0 : i32
    %c0_i32_0 = arith.constant 0 : i32
    %c0_i32_1 = arith.constant 0 : i32
    return %c0_i32, %c0_i32_0 : i32, i32
  }
  func.func @transform_5(%arg0: i32) -> (i32, i32) {
    %c0_i32 = arith.constant 0 : i32
    %c0_i32_0 = arith.constant 0 : i32
    %c0_i32_1 = arith.constant 0 : i32
    return %c0_i32, %c0_i32_0 : i32, i32
  }
}

module attributes {stable_mosaic.version = 11 : i64} {
  func.func @_conv_tanh_kernel(%arg0: i32, %arg1: memref<8x2560xbf16, #tpu.memory_space<vmem>>, %arg2: memref<3x72xbf16, #tpu.memory_space<vmem>>, %arg3: memref<3x1xf32, #tpu.memory_space<vmem>>, %arg4: memref<3x2432xf32, #tpu.memory_space<vmem>>, %arg5: memref<72x2432xbf16, #tpu.memory_space<vmem>>) attributes {dimension_semantics = [#tpu.dimension_semantics<arbitrary>], iteration_bounds = array<i64: 1>, scalar_prefetch = 0 : i64, scratch_operands = 1 : i64, tpu.core_type = #tpu.core_type<tc>, window_params = [{pipeline_mode = #tpu.pipeline_mode<synchronous>, transform_indices = @transform_0, window_bounds = array<i64: 8, 2560>}, {pipeline_mode = #tpu.pipeline_mode<synchronous>, transform_indices = @transform_1, window_bounds = array<i64: 3, 72>}, {pipeline_mode = #tpu.pipeline_mode<synchronous>, transform_indices = @transform_2, window_bounds = array<i64: 3, 1>}, {pipeline_mode = #tpu.pipeline_mode<synchronous>, transform_indices = @transform_3, window_bounds = array<i64: 3, 2432>}]} {
    %c0 = arith.constant 0 : index
    %c0_0 = arith.constant 0 : index
    %0 = vector.load %arg1[%c0, %c0_0] : memref<8x2560xbf16, #tpu.memory_space<vmem>>, vector<8x2432xbf16>
    %c0_1 = arith.constant 0 : index
    %c0_2 = arith.constant 0 : index
    %1 = vector.load %arg5[%c0_1, %c0_2] : memref<72x2432xbf16, #tpu.memory_space<vmem>>, vector<8x2432xbf16>
    tpu.vector_store %arg5[%c0_1, %c0_2], %0 {strides = array<i32>} : memref<72x2432xbf16, #tpu.memory_space<vmem>>, vector<8x2432xbf16>,
    %c0_3 = arith.constant 0 : index
    %c1 = arith.constant 1 : index
    %2 = vector.load %arg1[%c0_3, %c1] : memref<8x2560xbf16, #tpu.memory_space<vmem>>, vector<8x2432xbf16>
    %c8 = arith.constant 8 : index
    %c0_4 = arith.constant 0 : index
    %3 = vector.load %arg5[%c8, %c0_4] : memref<72x2432xbf16, #tpu.memory_space<vmem>>, vector<8x2432xbf16>
    tpu.vector_store %arg5[%c8, %c0_4], %2 {strides = array<i32>} : memref<72x2432xbf16, #tpu.memory_space<vmem>>, vector<8x2432xbf16>,
    %c0_5 = arith.constant 0 : index
    %c2 = arith.constant 2 : index
    %4 = vector.load %arg1[%c0_5, %c2] : memref<8x2560xbf16, #tpu.memory_space<vmem>>, vector<8x2432xbf16>
    %c16 = arith.constant 16 : index
    %c0_6 = arith.constant 0 : index
    %5 = vector.load %arg5[%c16, %c0_6] : memref<72x2432xbf16, #tpu.memory_space<vmem>>, vector<8x2432xbf16>
    tpu.vector_store %arg5[%c16, %c0_6], %4 {strides = array<i32>} : memref<72x2432xbf16, #tpu.memory_space<vmem>>, vector<8x2432xbf16>,
    %c0_7 = arith.constant 0 : index
    %c34 = arith.constant 34 : index
    %6 = vector.load %arg1[%c0_7, %c34] : memref<8x2560xbf16, #tpu.memory_space<vmem>>, vector<8x2432xbf16>
    %c24 = arith.constant 24 : index
    %c0_8 = arith.constant 0 : index
    %7 = vector.load %arg5[%c24, %c0_8] : memref<72x2432xbf16, #tpu.memory_space<vmem>>, vector<8x2432xbf16>
    tpu.vector_store %arg5[%c24, %c0_8], %6 {strides = array<i32>} : memref<72x2432xbf16, #tpu.memory_space<vmem>>, vector<8x2432xbf16>,
    %c0_9 = arith.constant 0 : index
    %c35 = arith.constant 35 : index
    %8 = vector.load %arg1[%c0_9, %c35] : memref<8x2560xbf16, #tpu.memory_space<vmem>>, vector<8x2432xbf16>
    %c32 = arith.constant 32 : index
    %c0_10 = arith.constant 0 : index
    %9 = vector.load %arg5[%c32, %c0_10] : memref<72x2432xbf16, #tpu.memory_space<vmem>>, vector<8x2432xbf16>
    tpu.vector_store %arg5[%c32, %c0_10], %8 {strides = array<i32>} : memref<72x2432xbf16, #tpu.memory_space<vmem>>, vector<8x2432xbf16>,
    %c0_11 = arith.constant 0 : index
    %c36 = arith.constant 36 : index
    %10 = vector.load %arg1[%c0_11, %c36] : memref<8x2560xbf16, #tpu.memory_space<vmem>>, vector<8x2432xbf16>
    %c40 = arith.constant 40 : index
    %c0_12 = arith.constant 0 : index
    %11 = vector.load %arg5[%c40, %c0_12] : memref<72x2432xbf16, #tpu.memory_space<vmem>>, vector<8x2432xbf16>
    tpu.vector_store %arg5[%c40, %c0_12], %10 {strides = array<i32>} : memref<72x2432xbf16, #tpu.memory_space<vmem>>, vector<8x2432xbf16>,
    %c0_13 = arith.constant 0 : index
    %c68 = arith.constant 68 : index
    %12 = vector.load %arg1[%c0_13, %c68] : memref<8x2560xbf16, #tpu.memory_space<vmem>>, vector<8x2432xbf16>
    %c48 = arith.constant 48 : index
    %c0_14 = arith.constant 0 : index
    %13 = vector.load %arg5[%c48, %c0_14] : memref<72x2432xbf16, #tpu.memory_space<vmem>>, vector<8x2432xbf16>
    tpu.vector_store %arg5[%c48, %c0_14], %12 {strides = array<i32>} : memref<72x2432xbf16, #tpu.memory_space<vmem>>, vector<8x2432xbf16>,
    %c0_15 = arith.constant 0 : index
    %c69 = arith.constant 69 : index
    %14 = vector.load %arg1[%c0_15, %c69] : memref<8x2560xbf16, #tpu.memory_space<vmem>>, vector<8x2432xbf16>
    %c56 = arith.constant 56 : index
    %c0_16 = arith.constant 0 : index
    %15 = vector.load %arg5[%c56, %c0_16] : memref<72x2432xbf16, #tpu.memory_space<vmem>>, vector<8x2432xbf16>
    tpu.vector_store %arg5[%c56, %c0_16], %14 {strides = array<i32>} : memref<72x2432xbf16, #tpu.memory_space<vmem>>, vector<8x2432xbf16>,
    %c0_17 = arith.constant 0 : index
    %c70 = arith.constant 70 : index
    %16 = vector.load %arg1[%c0_17, %c70] : memref<8x2560xbf16, #tpu.memory_space<vmem>>, vector<8x2432xbf16>
    %c64 = arith.constant 64 : index
    %c0_18 = arith.constant 0 : index
    %17 = vector.load %arg5[%c64, %c0_18] : memref<72x2432xbf16, #tpu.memory_space<vmem>>, vector<8x2432xbf16>
    tpu.vector_store %arg5[%c64, %c0_18], %16 {strides = array<i32>} : memref<72x2432xbf16, #tpu.memory_space<vmem>>, vector<8x2432xbf16>,
    %c0_19 = arith.constant 0 : index
    %c0_20 = arith.constant 0 : index
    %18 = vector.load %arg2[%c0_19, %c0_20] : memref<3x72xbf16, #tpu.memory_space<vmem>>, vector<3x72xbf16>
    %c0_21 = arith.constant 0 : index
    %c0_22 = arith.constant 0 : index
    %19 = vector.load %arg5[%c0_21, %c0_22] : memref<72x2432xbf16, #tpu.memory_space<vmem>>, vector<72x2432xbf16>
    %cst = arith.constant dense<0.000000e+00> : vector<3x2432xf32>
    %20 = tpu.matmul %18, %19, %cst {dimension_numbers = #tpu.dot_dimension_numbers<[1], [0], [0], [1], [0, 0, 1, 1], [], []>} : vector<3x72xbf16>, vector<72x2432xbf16>, vector<3x2432xf32> -> vector<3x2432xf32>
    %c0_23 = arith.constant 0 : index
    %c0_24 = arith.constant 0 : index
    %21 = vector.load %arg3[%c0_23, %c0_24] : memref<3x1xf32, #tpu.memory_space<vmem>>, vector<3x1xf32>
    %22 = vector.broadcast %21 : vector<3x1xf32> to vector<3x2432xf32>
    %23 = arith.addf %20, %22 : vector<3x2432xf32>
    %24 = math.tanh %23 : vector<3x2432xf32>
    %c0_25 = arith.constant 0 : index
    %c0_26 = arith.constant 0 : index
    %25 = vector.load %arg4[%c0_25, %c0_26] : memref<3x2432xf32, #tpu.memory_space<vmem>>, vector<3x2432xf32>
    tpu.vector_store %arg4[%c0_25, %c0_26], %24 {strides = array<i32>} : memref<3x2432xf32, #tpu.memory_space<vmem>>, vector<3x2432xf32>,
    return
  }
  func.func @transform_0(%arg0: i32) -> (i32, i32) {
    %c0_i32 = arith.constant 0 : i32
    %c0_i32_0 = arith.constant 0 : i32
    %c0_i32_1 = arith.constant 0 : i32
    return %c0_i32, %c0_i32_0 : i32, i32
  }
  func.func @transform_1(%arg0: i32) -> (i32, i32) {
    %c0_i32 = arith.constant 0 : i32
    %c0_i32_0 = arith.constant 0 : i32
    %c0_i32_1 = arith.constant 0 : i32
    return %c0_i32, %c0_i32_0 : i32, i32
  }
  func.func @transform_2(%arg0: i32) -> (i32, i32) {
    %c0_i32 = arith.constant 0 : i32
    %c0_i32_0 = arith.constant 0 : i32
    %c0_i32_1 = arith.constant 0 : i32
    return %c0_i32, %c0_i32_0 : i32, i32
  }
  func.func @transform_3(%arg0: i32) -> (i32, i32) {
    %c0_i32 = arith.constant 0 : i32
    %c0_i32_0 = arith.constant 0 : i32
    %c0_i32_1 = arith.constant 0 : i32
    return %c0_i32, %c0_i32_0 : i32, i32
  }
}

</mosaic_0001>

<llo_original>
// kernel: generator_forward.5
$region0: #{generator_forward.5}
  #allocation0 [shape = 'u32[]', space=smem, size = 0x4, offset = 0x4, fixed_abs, tag = 'smem constant byte address 0x4 - core index']
  #allocation1 [shape = 'u32[144,128]{1,0:T(1,128)}', space=vmem, size = 0x12000, scoped, tag = 'internal scratch']
  %s0 = inlined_call_operand.vmem [shape: bf16[2,32], index: 0, kind: input, shape index: {}]
  %s1 = inlined_call_operand.hbm [shape: bf16[32,512], index: 1, kind: input, shape index: {}]
  %s2 = inlined_call_operand.vmem [shape: f32[1,512], index: 2, kind: input, shape index: {}]
  %s3 = inlined_call_operand.vmem [shape: bf16[2,512], index: 3, kind: output, shape index: {}]
  %s4 = sld [smem:[#allocation0]]
  $region26: #{generator_forward.5} parent=0
    _
  %s6 = ssub.s32 1, %s4
  %s7 = scalar_select 0, %s6, %s4
  $region1: #{generator_forward.5} parent=0
    #allocation2 [shape = 'u8[32768]{0}', space=vmem, size = 0x8000, scoped, tag = 'input window, operand 1, single buffered']
    #allocation3 [shape = 's32[1]{0}', space=sflag, size = 0x4, scoped, tag = 'scoped memory for generator_forward.5']
    %8 = vsyncpa [#allocation3], 0
    // Predicated region
    $region2: #{generator_forward.5} parent=1 // pred_check
      _
    $region3: #{generator_forward.5} parent=1 // pred_check_branch
      %10 = sbr.rel (0) target = $region5
    $region4: #{generator_forward.5} parent=1 // pred_region
      _
    $region5: #{generator_forward.5} parent=1 // pred_fallthru
      _
    // Predicated region
    $region6: #{generator_forward.5} parent=1 // pred_check
      _
    $region7: #{generator_forward.5} parent=1 // pred_check_branch
      %12 = sbr.rel (0) target = $region9
    $region8: #{generator_forward.5} parent=1 // pred_region
      %s14 = ssub.s32 1024, 1024
      %15 = vsyncadd [#allocation3], %s14
      %s16 = sshll.u32 [#allocation2], 4
      %s17 = int_to_ptr.vmem [resolvable:$true] %s16
      %22 = dma.hbm_to_vmem [thread:$0]  %s1, 1024, %s17, [#allocation3], 256, 256, 16
    $region9: #{generator_forward.5} parent=1 // pred_fallthru
      _
    // Predicated region
    $region10: #{generator_forward.5} parent=1 // pred_check
      _
    $region11: #{generator_forward.5} parent=1 // pred_check_branch
      %24 = sbr.rel (0) target = $region13
    $region12: #{generator_forward.5} parent=1 // pred_region
      _
    $region13: #{generator_forward.5} parent=1 // pred_fallthru
      _
    // Predicated region
    $region14: #{generator_forward.5} parent=1 // pred_check
      _
    $region15: #{generator_forward.5} parent=1 // pred_check_branch
      %26 = sbr.rel (0) target = $region17
    $region16: #{generator_forward.5} parent=1 // pred_region
      %27 = dma.done [#allocation3], 1024
    $region17: #{generator_forward.5} parent=1 // pred_fallthru
      _
    %v29 = vld [vmem:[%s0] sm:$0x1]
    %v30 = vld [vmem:[#allocation2] sm:$0xff]
    %v31 = vld [vmem:[#allocation2 + $0x8] sm:$0xff]
    %v32 = vld [vmem:[#allocation2 + $0x10] sm:$0xff]
    %v33 = vld [vmem:[#allocation2 + $0x18] sm:$0xff]
    %v34 = vld [vmem:[#allocation2 + $0x20] sm:$0xff]
    %v35 = vld [vmem:[#allocation2 + $0x28] sm:$0xff]
    %v36 = vld [vmem:[#allocation2 + $0x30] sm:$0xff]
    %v37 = vld [vmem:[#allocation2 + $0x38] sm:$0xff]
    %v38 = vld [vmem:[%s2] sm:$0xf]
    %v40 = vlaneseq
    %v41 = vshrl.u32 %v40, 7
    %v42 = vsub.s32 0, %v41
    %v43 = vrot.slane %v38, %v42
    %v44 = vlaneseq
    %v45 = vshrl.u32 %v44, 7
    %v46 = vsub.s32 1, %v45
    %v47 = vrot.slane %v38, %v46
    %v48 = vlaneseq
    %v49 = vshrl.u32 %v48, 7
    %v50 = vsub.s32 2, %v49
    %v51 = vrot.slane %v38, %v50
    %v52 = vlaneseq
    %v53 = vshrl.u32 %v52, 7
    %v54 = vsub.s32 3, %v53
    %v55 = vrot.slane %v38, %v54
    %v68 = vunpack.c.l.b16 %v30
    %v69 = vunpack.c.h.b16 %v30
    %v70 = vunpack.c.l.b16 %v31
    %v71 = vunpack.c.h.b16 %v31
    %v72 = vunpack.c.l.b16 %v32
    %v73 = vunpack.c.h.b16 %v32
    %v74 = vunpack.c.l.b16 %v33
    %v75 = vunpack.c.h.b16 %v33
    %v76 = vunpack.c.l.b16 %v34
    %v77 = vunpack.c.h.b16 %v34
    %v78 = vunpack.c.l.b16 %v35
    %v79 = vunpack.c.h.b16 %v35
    %v80 = vunpack.c.l.b16 %v36
    %v81 = vunpack.c.h.b16 %v36
    %v82 = vunpack.c.l.b16 %v37
    %v83 = vunpack.c.h.b16 %v37
    %v84 = vpack.c.b16 %v72, %v68
    %v85 = vpack.c.b16 %v73, %v69
    %v86 = vpack.c.b16 %v74, %v70
    %v87 = vpack.c.b16 %v75, %v71
    %v88 = vpack.c.b16 %v80, %v76
    %v89 = vpack.c.b16 %v81, %v77
    %v90 = vpack.c.b16 %v82, %v78
    %v91 = vpack.c.b16 %v83, %v79
    %vm100 = vcmask 261120
    %v102 = vsel %vm100, %v29, 0
    %104 = vmatprep.subr.bf16.mxu0 0
    %105 = vmatpush1.bf16.msra.mxu0 0
    %106 = vmatprep.subr.bf16.mxu0 0
    %107 = vmatpush1.bf16.msra.mxu0 0
    %108 = vmatprep.subr.bf16.mxu0 0
    %109 = vmatpush1.bf16.msra.mxu0 0
    %110 = vmatprep.subr.bf16.mxu0 0
    %111 = vmatpush1.bf16.msra.mxu0 0
    %112 = vmatprep.subr.bf16.mxu0 0
    %113 = vmatpush1.bf16.msra.mxu0 0
    %114 = vmatprep.subr.bf16.mxu0 0
    %115 = vmatpush1.bf16.msra.mxu0 0
    %116 = vmatprep.subr.bf16.mxu0 %v89
    %117 = vmatpush1.bf16.msra.mxu0 %v88
    %118 = vmatprep.subr.bf16.mxu0 %v85
    %119 = vmatpush1.bf16.msra.mxu0 %v84
    %120 = vmatprep.subr.bf16.mxu0 0
    %121 = vmatpush2.bf16.msra.mxu0 0
    %122 = vmatprep.subr.bf16.mxu0 0
    %123 = vmatpush2.bf16.msra.mxu0 0
    %124 = vmatprep.subr.bf16.mxu0 0
    %125 = vmatpush2.bf16.msra.mxu0 0
    %126 = vmatprep.subr.bf16.mxu0 0
    %127 = vmatpush2.bf16.msra.mxu0 0
    %128 = vmatprep.subr.bf16.mxu0 0
    %129 = vmatpush2.bf16.msra.mxu0 0
    %130 = vmatprep.subr.bf16.mxu0 0
    %131 = vmatpush2.bf16.msra.mxu0 0
    %132 = vmatprep.subr.bf16.mxu0 0
    %133 = vmatpush2.bf16.msra.mxu0 0
    %134 = vmatprep.subr.bf16.mxu0 0
    %135 = vmatpush2.bf16.msra.mxu0 0
    %136 = vmatprep.mubr.bf16.mxu0 0
    %137 = vmatmul.mubr.bf16.gmra.mxu0 %v102
    %v138 = vpop.f32.mrf.mxu0
    %v139 = vadd.f32 %v43, %v138
    %v140 = vpop.f32.mrf.mxu0
    %v141 = vadd.f32 %v47, %v140
    %v142 = vpop.f32.mrf.mxu0
    %v143 = vpop.f32.mrf.mxu0
    %144 = vdwg.mxu0
    %145 = vmatprep.subr.bf16.mxu0 0
    %146 = vmatpush1.bf16.msra.mxu0 0
    %147 = vmatprep.subr.bf16.mxu0 0
    %148 = vmatpush1.bf16.msra.mxu0 0
    %149 = vmatprep.subr.bf16.mxu0 0
    %150 = vmatpush1.bf16.msra.mxu0 0
    %151 = vmatprep.subr.bf16.mxu0 0
    %152 = vmatpush1.bf16.msra.mxu0 0
    %153 = vmatprep.subr.bf16.mxu0 0
    %154 = vmatpush1.bf16.msra.mxu0 0
    %155 = vmatprep.subr.bf16.mxu0 0
    %156 = vmatpush1.bf16.msra.mxu0 0
    %157 = vmatprep.subr.bf16.mxu0 %v91
    %158 = vmatpush1.bf16.msra.mxu0 %v90
    %159 = vmatprep.subr.bf16.mxu0 %v87
    %160 = vmatpush1.bf16.msra.mxu0 %v86
    %161 = vmatprep.subr.bf16.mxu0 0
    %162 = vmatpush2.bf16.msra.mxu0 0
    %163 = vmatprep.subr.bf16.mxu0 0
    %164 = vmatpush2.bf16.msra.mxu0 0
    %165 = vmatprep.subr.bf16.mxu0 0
    %166 = vmatpush2.bf16.msra.mxu0 0
    %167 = vmatprep.subr.bf16.mxu0 0
    %168 = vmatpush2.bf16.msra.mxu0 0
    %169 = vmatprep.subr.bf16.mxu0 0
    %170 = vmatpush2.bf16.msra.mxu0 0
    %171 = vmatprep.subr.bf16.mxu0 0
    %172 = vmatpush2.bf16.msra.mxu0 0
    %173 = vmatprep.subr.bf16.mxu0 0
    %174 = vmatpush2.bf16.msra.mxu0 0
    %175 = vmatprep.subr.bf16.mxu0 0
    %176 = vmatpush2.bf16.msra.mxu0 0
    %177 = vmatprep.mubr.bf16.mxu0 0
    %178 = vmatmul.mubr.bf16.gmra.mxu0 %v102
    %v179 = vpop.f32.mrf.mxu0
    %v180 = vadd.f32 %v51, %v179
    %v181 = vpop.f32.mrf.mxu0
    %v182 = vadd.f32 %v55, %v181
    %v183 = vpop.f32.mrf.mxu0
    %v184 = vpop.f32.mrf.mxu0
    %185 = vdwg.mxu0
    %vm186 = vcmp.gt.f32.partialorder %v139, 0.0
    %vm187 = vcmp.gt.f32.partialorder %v141, 0.0
    %vm188 = vcmp.gt.f32.partialorder %v180, 0.0
    %vm189 = vcmp.gt.f32.partialorder %v182, 0.0
    %v190 = vmul.f32 %v139, 0.2
    %v191 = vmul.f32 %v141, 0.2
    %v192 = vmul.f32 %v180, 0.2
    %v193 = vmul.f32 %v182, 0.2
    %v194 = vsel %vm186, %v139, %v190
    %v195 = vsel %vm187, %v141, %v191
    %v196 = vsel %vm188, %v180, %v192
    %v197 = vsel %vm189, %v182, %v193
    %v198 = vpack.c.bf16 %v194, %v194
    %v199 = vpack.c.bf16 %v195, %v195
    %v200 = vpack.c.bf16 %v196, %v196
    %v201 = vpack.c.bf16 %v197, %v197
    %v206 = vcombine.low %v198, %v199
    %v207 = vcombine.low %v200, %v201
    %v209 = vunpack.c.l.s4 1966171168
    %v210 = vunpack.c.0.s8 %v209
    %v211 = vlaneseq
    %v212 = vshrl.u32 %v211, 7
    %v213 = vsub.s32 %v210, %v212
    %v214 = vrot.slane %v206, %v213
    %v216 = vunpack.c.l.s4 1966171168
    %v217 = vunpack.c.0.s8 %v216
    %v218 = vlaneseq
    %v219 = vshrl.u32 %v218, 7
    %v220 = vsub.s32 %v217, %v219
    %v221 = vrot.slane %v207, %v220
    %v222 = vcombine.low %v214, %v221
    %v224 = vunpack.c.l.s4 1966171168
    %v225 = vunpack.c.0.s8 %v224
    %v226 = vlaneseq
    %v227 = vshrl.u32 %v226, 7
    %v228 = vsub.s32 %v225, %v227
    %v229 = vrot.slane %v222, %v228
    %231 = vst [vmem:[%s3] sm:$0xf] %v229
    // Predicated region
    $region18: #{generator_forward.5} parent=1 // pred_check
      _
    $region19: #{generator_forward.5} parent=1 // pred_check_branch
      %233 = sbr.rel (0) target = $region21
    $region20: #{generator_forward.5} parent=1 // pred_region
      _
    $region21: #{generator_forward.5} parent=1 // pred_fallthru
      _
    // Predicated region
    $region22: #{generator_forward.5} parent=1 // pred_check
      _
    $region23: #{generator_forward.5} parent=1 // pred_check_branch
      %235 = sbr.rel (0) target = $region25
    $region24: #{generator_forward.5} parent=1 // pred_region
      _
    $region25: #{generator_forward.5} parent=1 // pred_fallthru
      _
    %236 = vsyncpa [#allocation3], 1

// kernel: generator_forward.6
$region0: #{generator_forward.6}
  #allocation0 [shape = 'u32[]', space=smem, size = 0x4, offset = 0x4, fixed_abs, tag = 'smem constant byte address 0x4 - core index']
  #allocation1 [shape = 'u32[144,128]{1,0:T(1,128)}', space=vmem, size = 0x12000, scoped, tag = 'internal scratch']
  #allocation2 [shape = 'bf16[288,128]{1,0:T(8,128)(2,1)}', space=vmem, size = 0x12000, scoped, tag = 'scratch operand']
  #allocation3 [shape = 'f32[64,128]{1,0:T(8,128)}', space=vmem, size = 0x8000, scoped, tag = 'scratch operand']
  %s0 = inlined_call_operand.vmem [shape: bf16[32,256], index: 0, kind: input, shape index: {}]
  %s1 = inlined_call_operand.vmem [shape: bf16[64,288], index: 1, kind: input, shape index: {}]
  %s2 = inlined_call_operand.vmem [shape: f32[16,1], index: 2, kind: input, shape index: {}]
  %s3 = inlined_call_operand.vmem [shape: f32[16,1], index: 3, kind: input, shape index: {}]
  %s4 = inlined_call_operand.vmem [shape: f32[1,128], index: 4, kind: input, shape index: {}]
  %s5 = inlined_call_operand.vmem [shape: bf16[64,128], index: 5, kind: output, shape index: {}]
  %s6 = sld [smem:[#allocation0]]
  $region30: #{generator_forward.6} parent=0
    _
  %s8 = ssub.s32 1, %s6
  %s9 = scalar_select 0, %s8, %s6
  // Predicated region
  $region2: #{generator_forward.6} parent=0 // pred_check
    _
  $region3: #{generator_forward.6} parent=0 // pred_check_branch
    %11 = sbr.rel (0) target = $region5
  $region4: #{generator_forward.6} parent=0 // pred_region
    _
  $region5: #{generator_forward.6} parent=0 // pred_fallthru
    _
  // Predicated region
  $region6: #{generator_forward.6} parent=0 // pred_check
    _
  $region7: #{generator_forward.6} parent=0 // pred_check_branch
    %13 = sbr.rel (0) target = $region9
  $region8: #{generator_forward.6} parent=0 // pred_region
    _
  $region9: #{generator_forward.6} parent=0 // pred_fallthru
    _
  // Predicated region
  $region10: #{generator_forward.6} parent=0 // pred_check
    _
  $region11: #{generator_forward.6} parent=0 // pred_check_branch
    %15 = sbr.rel (0) target = $region13
  $region12: #{generator_forward.6} parent=0 // pred_region
    _
  $region13: #{generator_forward.6} parent=0 // pred_fallthru
    _
  // Predicated region
  $region14: #{generator_forward.6} parent=0 // pred_check
    _
  $region15: #{generator_forward.6} parent=0 // pred_check_branch
    %17 = sbr.rel (0) target = $region17
  $region16: #{generator_forward.6} parent=0 // pred_region
    _
  $region17: #{generator_forward.6} parent=0 // pred_fallthru
    _
  // Predicated region
  $region18: #{generator_forward.6} parent=0 // pred_check
    _
  $region19: #{generator_forward.6} parent=0 // pred_check_branch
    %19 = sbr.rel (0) target = $region21
  $region20: #{generator_forward.6} parent=0 // pred_region
    _
  $region21: #{generator_forward.6} parent=0 // pred_fallthru
    _
  %v21 = vld [vmem:[%s0] sm:$0xf]
  %v22 = vld [vmem:[%s0 + $0x8] sm:$0xf]
  %v23 = vld [vmem:[%s0 + $0x10] sm:$0xf]
  %v24 = vld [vmem:[%s0 + $0x18] sm:$0xf]
  %25 = vst [vmem:[#allocation2] sm:$0xf] %v21
  %26 = vst [vmem:[#allocation2 + $0x4] sm:$0xf] %v22
  %27 = vst [vmem:[#allocation2 + $0x8] sm:$0xf] %v23
  %28 = vst [vmem:[#allocation2 + $0xc] sm:$0xf] %v24
  %v29 = vld [vmem:[%s0] sm:$0xff]
  %v30 = vld [vmem:[%s0 + $0x8] sm:$0xff]
  %v31 = vld [vmem:[%s0 + $0x10] sm:$0xff]
  %v32 = vld [vmem:[%s0 + $0x18] sm:$0xff]
  %37 = vrot.lane.b32.xlu0 %v29, 127
  %v38 = vpop.permute.xlu0 %37
  %39 = vrot.lane.b32.xlu0 %v30, 127
  %v40 = vpop.permute.xlu0 %39
  %41 = vrot.lane.b32.xlu0 %v31, 127
  %v42 = vpop.permute.xlu0 %41
  %43 = vrot.lane.b32.xlu0 %v32, 127
  %v44 = vpop.permute.xlu0 %43
  %v45 = vrot.slane %v38, 4
  %v46 = vrot.slane %v40, 4
  %v47 = vrot.slane %v42, 4
  %v48 = vrot.slane %v44, 4
  %vm49 = vcmask 1039360
  %v50 = vsel %vm49, %v38, %v45
  %v51 = vsel %vm49, %v40, %v46
  %v52 = vsel %vm49, %v42, %v47
  %v53 = vsel %vm49, %v44, %v48
  %58 = vst [vmem:[#allocation2 + $0x10] sm:$0xf] %v50
  %59 = vst [vmem:[#allocation2 + $0x14] sm:$0xf] %v51
  %60 = vst [vmem:[#allocation2 + $0x18] sm:$0xf] %v52
  %61 = vst [vmem:[#allocation2 + $0x1c] sm:$0xf] %v53
  %v62 = vld [vmem:[%s0] sm:$0xff]
  %v63 = vld [vmem:[%s0 + $0x8] sm:$0xff]
  %v64 = vld [vmem:[%s0 + $0x10] sm:$0xff]
  %v65 = vld [vmem:[%s0 + $0x18] sm:$0xff]
  %70 = vrot.lane.b32.xlu0 %v62, 126
  %v71 = vpop.permute.xlu0 %70
  %72 = vrot.lane.b32.xlu0 %v63, 126
  %v73 = vpop.permute.xlu0 %72
  %74 = vrot.lane.b32.xlu0 %v64, 126
  %v75 = vpop.permute.xlu0 %74
  %76 = vrot.lane.b32.xlu0 %v65, 126
  %v77 = vpop.permute.xlu0 %76
  %v78 = vrot.slane %v71, 4
  %v79 = vrot.slane %v73, 4
  %v80 = vrot.slane %v75, 4
  %v81 = vrot.slane %v77, 4
  %vm82 = vcmask 1031168
  %v83 = vsel %vm82, %v71, %v78
  %v84 = vsel %vm82, %v73, %v79
  %v85 = vsel %vm82, %v75, %v80
  %v86 = vsel %vm82, %v77, %v81
  %91 = vst [vmem:[#allocation2 + $0x20] sm:$0xf] %v83
  %92 = vst [vmem:[#allocation2 + $0x24] sm:$0xf] %v84
  %93 = vst [vmem:[#allocation2 + $0x28] sm:$0xf] %v85
  %94 = vst [vmem:[#allocation2 + $0x2c] sm:$0xf] %v86
  %v95 = vld [vmem:[%s0] sm:$0xff]
  %v96 = vld [vmem:[%s0 + $0x8] sm:$0xff]
  %v97 = vld [vmem:[%s0 + $0x10] sm:$0xff]
  %v98 = vld [vmem:[%s0 + $0x18] sm:$0xff]
  %103 = vrot.lane.b32.xlu0 %v95, 122
  %v104 = vpop.permute.xlu0 %103
  %105 = vrot.lane.b32.xlu0 %v96, 122
  %v106 = vpop.permute.xlu0 %105
  %107 = vrot.lane.b32.xlu0 %v97, 122
  %v108 = vpop.permute.xlu0 %107
  %109 = vrot.lane.b32.xlu0 %v98, 122
  %v110 = vpop.permute.xlu0 %109
  %v111 = vrot.slane %v104, 4
  %v112 = vrot.slane %v106, 4
  %v113 = vrot.slane %v108, 4
  %v114 = vrot.slane %v110, 4
  %vm115 = vcmask 998400
  %v116 = vsel %vm115, %v104, %v111
  %v117 = vsel %vm115, %v106, %v112
  %v118 = vsel %vm115, %v108, %v113
  %v119 = vsel %vm115, %v110, %v114
  %124 = vst [vmem:[#allocation2 + $0x30] sm:$0xf] %v116
  %125 = vst [vmem:[#allocation2 + $0x34] sm:$0xf] %v117
  %126 = vst [vmem:[#allocation2 + $0x38] sm:$0xf] %v118
  %127 = vst [vmem:[#allocation2 + $0x3c] sm:$0xf] %v119
  %v128 = vld [vmem:[%s0] sm:$0xff]
  %v129 = vld [vmem:[%s0 + $0x8] sm:$0xff]
  %v130 = vld [vmem:[%s0 + $0x10] sm:$0xff]
  %v131 = vld [vmem:[%s0 + $0x18] sm:$0xff]
  %136 = vrot.lane.b32.xlu0 %v128, 121
  %v137 = vpop.permute.xlu0 %136
  %138 = vrot.lane.b32.xlu0 %v129, 121
  %v139 = vpop.permute.xlu0 %138
  %140 = vrot.lane.b32.xlu0 %v130, 121
  %v141 = vpop.permute.xlu0 %140
  %142 = vrot.lane.b32.xlu0 %v131, 121
  %v143 = vpop.permute.xlu0 %142
  %v144 = vrot.slane %v137, 4
  %v145 = vrot.slane %v139, 4
  %v146 = vrot.slane %v141, 4
  %v147 = vrot.slane %v143, 4
  %vm148 = vcmask 990208
  %v149 = vsel %vm148, %v137, %v144
  %v150 = vsel %vm148, %v139, %v145
  %v151 = vsel %vm148, %v141, %v146
  %v152 = vsel %vm148, %v143, %v147
  %157 = vst [vmem:[#allocation2 + $0x40] sm:$0xf] %v149
  %158 = vst [vmem:[#allocation2 + $0x44] sm:$0xf] %v150
  %159 = vst [vmem:[#allocation2 + $0x48] sm:$0xf] %v151
  %160 = vst [vmem:[#allocation2 + $0x4c] sm:$0xf] %v152
  %v161 = vld [vmem:[%s0] sm:$0xff]
  %v162 = vld [vmem:[%s0 + $0x8] sm:$0xff]
  %v163 = vld [vmem:[%s0 + $0x10] sm:$0xff]
  %v164 = vld [vmem:[%s0 + $0x18] sm:$0xff]
  %169 = vrot.lane.b32.xlu0 %v161, 120
  %v170 = vpop.permute.xlu0 %169
  %171 = vrot.lane.b32.xlu0 %v162, 120
  %v172 = vpop.permute.xlu0 %171
  %173 = vrot.lane.b32.xlu0 %v163, 120
  %v174 = vpop.permute.xlu0 %173
  %175 = vrot.lane.b32.xlu0 %v164, 120
  %v176 = vpop.permute.xlu0 %175
  %v177 = vrot.slane %v170, 4
  %v178 = vrot.slane %v172, 4
  %v179 = vrot.slane %v174, 4
  %v180 = vrot.slane %v176, 4
  %vm181 = vcmask 982016
  %v182 = vsel %vm181, %v170, %v177
  %v183 = vsel %vm181, %v172, %v178
  %v184 = vsel %vm181, %v174, %v179
  %v185 = vsel %vm181, %v176, %v180
  %190 = vst [vmem:[#allocation2 + $0x50] sm:$0xf] %v182
  %191 = vst [vmem:[#allocation2 + $0x54] sm:$0xf] %v183
  %192 = vst [vmem:[#allocation2 + $0x58] sm:$0xf] %v184
  %193 = vst [vmem:[#allocation2 + $0x5c] sm:$0xf] %v185
  %v194 = vld [vmem:[%s0] sm:$0xff]
  %v195 = vld [vmem:[%s0 + $0x8] sm:$0xff]
  %v196 = vld [vmem:[%s0 + $0x10] sm:$0xff]
  %v197 = vld [vmem:[%s0 + $0x18] sm:$0xff]
  %202 = vrot.lane.b32.xlu0 %v194, 116
  %v203 = vpop.permute.xlu0 %202
  %204 = vrot.lane.b32.xlu0 %v195, 116
  %v205 = vpop.permute.xlu0 %204
  %206 = vrot.lane.b32.xlu0 %v196, 116
  %v207 = vpop.permute.xlu0 %206
  %208 = vrot.lane.b32.xlu0 %v197, 116
  %v209 = vpop.permute.xlu0 %208
  %v210 = vrot.slane %v203, 4
  %v211 = vrot.slane %v205, 4
  %v212 = vrot.slane %v207, 4
  %v213 = vrot.slane %v209, 4
  %vm214 = vcmask 949248
  %v215 = vsel %vm214, %v203, %v210
  %v216 = vsel %vm214, %v205, %v211
  %v217 = vsel %vm214, %v207, %v212
  %v218 = vsel %vm214, %v209, %v213
  %223 = vst [vmem:[#allocation2 + $0x60] sm:$0xf] %v215
  %224 = vst [vmem:[#allocation2 + $0x64] sm:$0xf] %v216
  %225 = vst [vmem:[#allocation2 + $0x68] sm:$0xf] %v217
  %226 = vst [vmem:[#allocation2 + $0x6c] sm:$0xf] %v218
  %v227 = vld [vmem:[%s0] sm:$0xff]
  %v228 = vld [vmem:[%s0 + $0x8] sm:$0xff]
  %v229 = vld [vmem:[%s0 + $0x10] sm:$0xff]
  %v230 = vld [vmem:[%s0 + $0x18] sm:$0xff]
  %235 = vrot.lane.b32.xlu0 %v227, 115
  %v236 = vpop.permute.xlu0 %235
  %237 = vrot.lane.b32.xlu0 %v228, 115
  %v238 = vpop.permute.xlu0 %237
  %239 = vrot.lane.b32.xlu0 %v229, 115
  %v240 = vpop.permute.xlu0 %239
  %241 = vrot.lane.b32.xlu0 %v230, 115
  %v242 = vpop.permute.xlu0 %241
  %v243 = vrot.slane %v236, 4
  %v244 = vrot.slane %v238, 4
  %v245 = vrot.slane %v240, 4
  %v246 = vrot.slane %v242, 4
  %vm247 = vcmask 941056
  %v248 = vsel %vm247, %v236, %v243
  %v249 = vsel %vm247, %v238, %v244
  %v250 = vsel %vm247, %v240, %v245
  %v251 = vsel %vm247, %v242, %v246
  %256 = vst [vmem:[#allocation2 + $0x70] sm:$0xf] %v248
  %257 = vst [vmem:[#allocation2 + $0x74] sm:$0xf] %v249
  %258 = vst [vmem:[#allocation2 + $0x78] sm:$0xf] %v250
  %259 = vst [vmem:[#allocation2 + $0x7c] sm:$0xf] %v251
  %v260 = vld [vmem:[%s0] sm:$0xff]
  %v261 = vld [vmem:[%s0 + $0x8] sm:$0xff]
  %v262 = vld [vmem:[%s0 + $0x10] sm:$0xff]
  %v263 = vld [vmem:[%s0 + $0x18] sm:$0xff]
  %268 = vrot.lane.b32.xlu0 %v260, 114
  %v269 = vpop.permute.xlu0 %268
  %270 = vrot.lane.b32.xlu0 %v261, 114
  %v271 = vpop.permute.xlu0 %270
  %272 = vrot.lane.b32.xlu0 %v262, 114
  %v273 = vpop.permute.xlu0 %272
  %274 = vrot.lane.b32.xlu0 %v263, 114
  %v275 = vpop.permute.xlu0 %274
  %v276 = vrot.slane %v269, 4
  %v277 = vrot.slane %v271, 4
  %v278 = vrot.slane %v273, 4
  %v279 = vrot.slane %v275, 4
  %vm280 = vcmask 932864
  %v281 = vsel %vm280, %v269, %v276
  %v282 = vsel %vm280, %v271, %v277
  %v283 = vsel %vm280, %v273, %v278
  %v284 = vsel %vm280, %v275, %v279
  %289 = vst [vmem:[#allocation2 + $0x80] sm:$0xf] %v281
  %290 = vst [vmem:[#allocation2 + $0x84] sm:$0xf] %v282
  %291 = vst [vmem:[#allocation2 + $0x88] sm:$0xf] %v283
  %292 = vst [vmem:[#allocation2 + $0x8c] sm:$0xf] %v284
  %v293 = vld [vmem:[%s1] sm:$0xff]
  %v294 = vld [vmem:[%s1 + $0x8] sm:$0xf]
  %v295 = vld [vmem:[%s1 + $0xc] sm:$0xff]
  %v296 = vld [vmem:[%s1 + $0x14] sm:$0xf]
  %v297 = vld [vmem:[%s1 + $0x18] sm:$0xff]
  %v298 = vld [vmem:[%s1 + $0x20] sm:$0xf]
  %v299 = vld [vmem:[%s1 + $0x24] sm:$0xff]
  %v300 = vld [vmem:[%s1 + $0x2c] sm:$0xf]
  %v301 = vld [vmem:[%s1 + $0x30] sm:$0xff]
  %v302 = vld [vmem:[%s1 + $0x38] sm:$0xf]
  %v303 = vld [vmem:[%s1 + $0x3c] sm:$0xff]
  %v304 = vld [vmem:[%s1 + $0x44] sm:$0xf]
  %v305 = vld [vmem:[%s1 + $0x48] sm:$0xff]
  %v306 = vld [vmem:[%s1 + $0x50] sm:$0xf]
  %v307 = vld [vmem:[%s1 + $0x54] sm:$0xff]
  %v308 = vld [vmem:[%s1 + $0x5c] sm:$0xf]
  %v309 = vld [vmem:[#allocation2] sm:$0xf]
  %v310 = vld [vmem:[#allocation2 + $0x4] sm:$0xf]
  %v311 = vld [vmem:[#allocation2 + $0x8] sm:$0xf]
  %v312 = vld [vmem:[#allocation2 + $0xc] sm:$0xf]
  %v313 = vld [vmem:[#allocation2 + $0x10] sm:$0xf]
  %v314 = vld [vmem:[#allocation2 + $0x14] sm:$0xf]
  %v315 = vld [vmem:[#allocation2 + $0x18] sm:$0xf]
  %v316 = vld [vmem:[#allocation2 + $0x1c] sm:$0xf]
  %v317 = vld [vmem:[#allocation2 + $0x20] sm:$0xf]
  %v318 = vld [vmem:[#allocation2 + $0x24] sm:$0xf]
  %v319 = vld [vmem:[#allocation2 + $0x28] sm:$0xf]
  %v320 = vld [vmem:[#allocation2 + $0x2c] sm:$0xf]
  %v321 = vld [vmem:[#allocation2 + $0x30] sm:$0xf]
  %v322 = vld [vmem:[#allocation2 + $0x34] sm:$0xf]
  %v323 = vld [vmem:[#allocation2 + $0x38] sm:$0xf]
  %v324 = vld [vmem:[#allocation2 + $0x3c] sm:$0xf]
  %v325 = vld [vmem:[#allocation2 + $0x40] sm:$0xf]
  %v326 = vld [vmem:[#allocation2 + $0x44] sm:$0xf]
  %v327 = vld [vmem:[#allocation2 + $0x48] sm:$0xf]
  %v328 = vld [vmem:[#allocation2 + $0x4c] sm:$0xf]
  %v329 = vld [vmem:[#allocation2 + $0x50] sm:$0xf]
  %v330 = vld [vmem:[#allocation2 + $0x54] sm:$0xf]
  %v331 = vld [vmem:[#allocation2 + $0x58] sm:$0xf]
  %v332 = vld [vmem:[#allocation2 + $0x5c] sm:$0xf]
  %v333 = vld [vmem:[#allocation2 + $0x60] sm:$0xf]
  %v334 = vld [vmem:[#allocation2 + $0x64] sm:$0xf]
  %v335 = vld [vmem:[#allocation2 + $0x68] sm:$0xf]
  %v336 = vld [vmem:[#allocation2 + $0x6c] sm:$0xf]
  %v337 = vld [vmem:[#allocation2 + $0x70] sm:$0xf]
  %v338 = vld [vmem:[#allocation2 + $0x74] sm:$0xf]
  %v339 = vld [vmem:[#allocation2 + $0x78] sm:$0xf]
  %v340 = vld [vmem:[#allocation2 + $0x7c] sm:$0xf]
  %v341 = vld [vmem:[#allocation2 + $0x80] sm:$0xf]
  %v342 = vld [vmem:[#allocation2 + $0x84] sm:$0xf]
  %v343 = vld [vmem:[#allocation2 + $0x88] sm:$0xf]
  %v344 = vld [vmem:[#allocation2 + $0x8c] sm:$0xf]
  %v361 = vunpack.c.l.b16 %v293
  %v362 = vunpack.c.h.b16 %v293
  %v363 = vunpack.c.l.b16 %v294
  %v364 = vunpack.c.l.b16 %v295
  %v365 = vunpack.c.h.b16 %v295
  %v366 = vunpack.c.l.b16 %v296
  %v367 = vunpack.c.l.b16 %v297
  %v368 = vunpack.c.h.b16 %v297
  %v369 = vunpack.c.l.b16 %v298
  %v370 = vunpack.c.l.b16 %v299
  %v371 = vunpack.c.h.b16 %v299
  %v372 = vunpack.c.l.b16 %v300
  %v373 = vunpack.c.l.b16 %v301
  %v374 = vunpack.c.h.b16 %v301
  %v375 = vunpack.c.l.b16 %v302
  %v376 = vunpack.c.l.b16 %v303
  %v377 = vunpack.c.h.b16 %v303
  %v378 = vunpack.c.l.b16 %v304
  %v379 = vunpack.c.l.b16 %v305
  %v380 = vunpack.c.h.b16 %v305
  %v381 = vunpack.c.l.b16 %v306
  %v382 = vunpack.c.l.b16 %v307
  %v383 = vunpack.c.h.b16 %v307
  %v384 = vunpack.c.l.b16 %v308
  %v385 = vpack.c.b16 %v364, %v361
  %v386 = vpack.c.b16 %v365, %v362
  %v387 = vpack.c.b16 %v366, %v363
  %v388 = vpack.c.b16 %v370, %v367
  %v389 = vpack.c.b16 %v371, %v368
  %v390 = vpack.c.b16 %v372, %v369
  %v391 = vpack.c.b16 %v376, %v373
  %v392 = vpack.c.b16 %v377, %v374
  %v393 = vpack.c.b16 %v378, %v375
  %v394 = vpack.c.b16 %v382, %v379
  %v395 = vpack.c.b16 %v383, %v380
  %v396 = vpack.c.b16 %v384, %v381
  %v441 = vunpack.c.l.b16 %v309
  %v442 = vunpack.c.l.b16 %v310
  %v443 = vunpack.c.l.b16 %v311
  %v444 = vunpack.c.l.b16 %v312
  %v445 = vunpack.c.l.b16 %v313
  %v446 = vunpack.c.l.b16 %v314
  %v447 = vunpack.c.l.b16 %v315
  %v448 = vunpack.c.l.b16 %v316
  %v449 = vunpack.c.l.b16 %v317
  %v450 = vunpack.c.l.b16 %v318
  %v451 = vunpack.c.l.b16 %v319
  %v452 = vunpack.c.l.b16 %v320
  %v453 = vunpack.c.l.b16 %v321
  %v454 = vunpack.c.l.b16 %v322
  %v455 = vunpack.c.l.b16 %v323
  %v456 = vunpack.c.l.b16 %v324
  %v457 = vunpack.c.l.b16 %v325
  %v458 = vunpack.c.l.b16 %v326
  %v459 = vunpack.c.l.b16 %v327
  %v460 = vunpack.c.l.b16 %v328
  %v461 = vunpack.c.l.b16 %v329
  %v462 = vunpack.c.l.b16 %v330
  %v463 = vunpack.c.l.b16 %v331
  %v464 = vunpack.c.l.b16 %v332
  %v465 = vunpack.c.l.b16 %v333
  %v466 = vunpack.c.l.b16 %v334
  %v467 = vunpack.c.l.b16 %v335
  %v468 = vunpack.c.l.b16 %v336
  %v469 = vunpack.c.l.b16 %v337
  %v470 = vunpack.c.l.b16 %v338
  %v471 = vunpack.c.l.b16 %v339
  %v472 = vunpack.c.l.b16 %v340
  %v473 = vunpack.c.l.b16 %v341
  %v474 = vunpack.c.l.b16 %v342
  %v475 = vunpack.c.l.b16 %v343
  %v476 = vunpack.c.l.b16 %v344
  %v477 = vpack.c.b16 %v442, %v441
  %v478 = vpack.c.b16 %v444, %v443
  %v479 = vpack.c.b16 %v446, %v445
  %v480 = vpack.c.b16 %v448, %v447
  %v481 = vpack.c.b16 %v450, %v449
  %v482 = vpack.c.b16 %v452, %v451
  %v483 = vpack.c.b16 %v454, %v453
  %v484 = vpack.c.b16 %v456, %v455
  %v485 = vpack.c.b16 %v458, %v457
  %v486 = vpack.c.b16 %v460, %v459
  %v487 = vpack.c.b16 %v462, %v461
  %v488 = vpack.c.b16 %v464, %v463
  %v489 = vpack.c.b16 %v466, %v465
  %v490 = vpack.c.b16 %v468, %v467
  %v491 = vpack.c.b16 %v470, %v469
  %v492 = vpack.c.b16 %v472, %v471
  %v493 = vpack.c.b16 %v474, %v473
  %v494 = vpack.c.b16 %v476, %v475
  %vm513 = vcmask 261120
  %v515 = vsel %vm513, %v387, 0
  %v518 = vsel %vm513, %v390, 0
  %v521 = vsel %vm513, %v393, 0
  %v524 = vsel %vm513, %v396, 0
  %526 = vmatprep.subr.bf16.mxu0 0
  %527 = vmatpush1.bf16.msra.mxu0 %v484
  %528 = vmatprep.subr.bf16.mxu0 0
  %529 = vmatpush1.bf16.msra.mxu0 %v483
  %530 = vmatprep.subr.bf16.mxu0 0
  %531 = vmatpush1.bf16.msra.mxu0 %v482
  %532 = vmatprep.subr.bf16.mxu0 0
  %533 = vmatpush1.bf16.msra.mxu0 %v481
  %534 = vmatprep.subr.bf16.mxu0 0
  %535 = vmatpush1.bf16.msra.mxu0 %v480
  %536 = vmatprep.subr.bf16.mxu0 0
  %537 = vmatpush1.bf16.msra.mxu0 %v479
  %538 = vmatprep.subr.bf16.mxu0 0
  %539 = vmatpush1.bf16.msra.mxu0 %v478
  %540 = vmatprep.subr.bf16.mxu0 0
  %541 = vmatpush1.bf16.msra.mxu0 %v477
  %542 = vmatprep.subr.bf16.mxu0 0
  %543 = vmatpush2.bf16.msra.mxu0 %v492
  %544 = vmatprep.subr.bf16.mxu0 0
  %545 = vmatpush2.bf16.msra.mxu0 %v491
  %546 = vmatprep.subr.bf16.mxu0 0
  %547 = vmatpush2.bf16.msra.mxu0 %v490
  %548 = vmatprep.subr.bf16.mxu0 0
  %549 = vmatpush2.bf16.msra.mxu0 %v489
  %550 = vmatprep.subr.bf16.mxu0 0
  %551 = vmatpush2.bf16.msra.mxu0 %v488
  %552 = vmatprep.subr.bf16.mxu0 0
  %553 = vmatpush2.bf16.msra.mxu0 %v487
  %554 = vmatprep.subr.bf16.mxu0 0
  %555 = vmatpush2.bf16.msra.mxu0 %v486
  %556 = vmatprep.subr.bf16.mxu0 0
  %557 = vmatpush2.bf16.msra.mxu0 %v485
  %558 = vmatprep.mubr.bf16.mxu0 %v386
  %559 = vmatmul.mubr.bf16.gmra.mxu0 %v385
  %v560 = vpop.f32.mrf.mxu0
  %v561 = vadd.f32 0.0, %v560
  %v562 = vpop.f32.mrf.mxu0
  %v563 = vpop.f32.mrf.mxu0
  %v564 = vadd.f32 0.0, %v563
  %v565 = vpop.f32.mrf.mxu0
  %566 = vmatprep.mubr.bf16.mxu0 %v389
  %567 = vmatmul.mubr.bf16.gmra.mxu0 %v388
  %v568 = vpop.f32.mrf.mxu0
  %v569 = vadd.f32 0.0, %v568
  %v570 = vpop.f32.mrf.mxu0
  %v571 = vpop.f32.mrf.mxu0
  %v572 = vadd.f32 0.0, %v571
  %v573 = vpop.f32.mrf.mxu0
  %574 = vmatprep.mubr.bf16.mxu0 %v392
  %575 = vmatmul.mubr.bf16.gmra.mxu0 %v391
  %v576 = vpop.f32.mrf.mxu0
  %v577 = vadd.f32 0.0, %v576
  %v578 = vpop.f32.mrf.mxu0
  %v579 = vpop.f32.mrf.mxu0
  %v580 = vadd.f32 0.0, %v579
  %v581 = vpop.f32.mrf.mxu0
  %582 = vmatprep.mubr.bf16.mxu0 %v395
  %583 = vmatmul.mubr.bf16.gmra.mxu0 %v394
  %v584 = vpop.f32.mrf.mxu0
  %v585 = vadd.f32 0.0, %v584
  %v586 = vpop.f32.mrf.mxu0
  %v587 = vpop.f32.mrf.mxu0
  %v588 = vadd.f32 0.0, %v587
  %v589 = vpop.f32.mrf.mxu0
  %590 = vdwg.mxu0
  %591 = vmatprep.subr.bf16.mxu0 0
  %592 = vmatpush1.bf16.msra.mxu0 0
  %593 = vmatprep.subr.bf16.mxu0 0
  %594 = vmatpush1.bf16.msra.mxu0 0
  %595 = vmatprep.subr.bf16.mxu0 0
  %596 = vmatpush1.bf16.msra.mxu0 0
  %597 = vmatprep.subr.bf16.mxu0 0
  %598 = vmatpush1.bf16.msra.mxu0 0
  %599 = vmatprep.subr.bf16.mxu0 0
  %600 = vmatpush1.bf16.msra.mxu0 0
  %601 = vmatprep.subr.bf16.mxu0 0
  %602 = vmatpush1.bf16.msra.mxu0 0
  %603 = vmatprep.subr.bf16.mxu0 0
  %604 = vmatpush1.bf16.msra.mxu0 %v494
  %605 = vmatprep.subr.bf16.mxu0 0
  %606 = vmatpush1.bf16.msra.mxu0 %v493
  %607 = vmatprep.subr.bf16.mxu0 0
  %608 = vmatpush2.bf16.msra.mxu0 0
  %609 = vmatprep.subr.bf16.mxu0 0
  %610 = vmatpush2.bf16.msra.mxu0 0
  %611 = vmatprep.subr.bf16.mxu0 0
  %612 = vmatpush2.bf16.msra.mxu0 0
  %613 = vmatprep.subr.bf16.mxu0 0
  %614 = vmatpush2.bf16.msra.mxu0 0
  %615 = vmatprep.subr.bf16.mxu0 0
  %616 = vmatpush2.bf16.msra.mxu0 0
  %617 = vmatprep.subr.bf16.mxu0 0
  %618 = vmatpush2.bf16.msra.mxu0 0
  %619 = vmatprep.subr.bf16.mxu0 0
  %620 = vmatpush2.bf16.msra.mxu0 0
  %621 = vmatprep.subr.bf16.mxu0 0
  %622 = vmatpush2.bf16.msra.mxu0 0
  %623 = vmatprep.mubr.bf16.mxu0 0
  %624 = vmatmul.mubr.bf16.gmra.mxu0 %v515
  %v625 = vpop.f32.mrf.mxu0
  %v626 = vadd.f32 %v561, %v625
  %v627 = vpop.f32.mrf.mxu0
  %v628 = vpop.f32.mrf.mxu0
  %v629 = vadd.f32 %v564, %v628
  %v630 = vpop.f32.mrf.mxu0
  %631 = vmatprep.mubr.bf16.mxu0 0
  %632 = vmatmul.mubr.bf16.gmra.mxu0 %v518
  %v633 = vpop.f32.mrf.mxu0
  %v634 = vadd.f32 %v569, %v633
  %v635 = vpop.f32.mrf.mxu0
  %v636 = vpop.f32.mrf.mxu0
  %v637 = vadd.f32 %v572, %v636
  %v638 = vpop.f32.mrf.mxu0
  %639 = vmatprep.mubr.bf16.mxu0 0
  %640 = vmatmul.mubr.bf16.gmra.mxu0 %v521
  %v641 = vpop.f32.mrf.mxu0
  %v642 = vadd.f32 %v577, %v641
  %v643 = vpop.f32.mrf.mxu0
  %v644 = vpop.f32.mrf.mxu0
  %v645 = vadd.f32 %v580, %v644
  %v646 = vpop.f32.mrf.mxu0
  %647 = vmatprep.mubr.bf16.mxu0 0
  %648 = vmatmul.mubr.bf16.gmra.mxu0 %v524
  %v649 = vpop.f32.mrf.mxu0
  %v650 = vadd.f32 %v585, %v649
  %v651 = vpop.f32.mrf.mxu0
  %v652 = vpop.f32.mrf.mxu0
  %v653 = vadd.f32 %v588, %v652
  %v654 = vpop.f32.mrf.mxu0
  %655 = vdwg.mxu0
  %656 = vst [vmem:[#allocation3] sm:$0xff] %v626
  %657 = vst [vmem:[#allocation3 + $0x8] sm:$0xff] %v629
  %658 = vst [vmem:[#allocation3 + $0x10] sm:$0xff] %v634
  %659 = vst [vmem:[#allocation3 + $0x18] sm:$0xff] %v637
  %660 = vst [vmem:[#allocation3 + $0x20] sm:$0xff] %v642
  %661 = vst [vmem:[#allocation3 + $0x28] sm:$0xff] %v645
  %662 = vst [vmem:[#allocation3 + $0x30] sm:$0xff] %v650
  %663 = vst [vmem:[#allocation3 + $0x38] sm:$0xff] %v653
  %v664 = vld [vmem:[%s4] sm:$0x1]
  %v665 = vld [vmem:[#allocation3] sm:$0xff]
  %v666 = vld [vmem:[#allocation3 + $0x8] sm:$0xff]
  %v668 = vlaneseq
  %v669 = vshrl.u32 %v668, 7
  %v670 = vsub.s32 0, %v669
  %v671 = vrot.slane %v664, %v670
  %v673 = vmul.f32 %v665, %v671
  %v674 = vmul.f32 %v666, %v671
  %675 = vadd.xlane.f32.xlu0 %v673
  %v676 = vpop.xlane.xlu0 %675
  %677 = vadd.xlane.f32.xlu0 %v674
  %v678 = vpop.xlane.xlu0 %677
  %v679 = vadd.f32 %v676, 0.0
  %v680 = vadd.f32 %v678, 0.0
  %v681 = vld [vmem:[#allocation3 + $0x10] sm:$0xff]
  %v682 = vld [vmem:[#allocation3 + $0x18] sm:$0xff]
  %v683 = vmul.f32 %v681, %v671
  %v684 = vmul.f32 %v682, %v671
  %685 = vadd.xlane.f32.xlu0 %v683
  %v686 = vpop.xlane.xlu0 %685
  %687 = vadd.xlane.f32.xlu0 %v684
  %v688 = vpop.xlane.xlu0 %687
  %v689 = vadd.f32 %v679, %v686
  %v690 = vadd.f32 %v680, %v688
  %v691 = vld [vmem:[#allocation3 + $0x20] sm:$0xff]
  %v692 = vld [vmem:[#allocation3 + $0x28] sm:$0xff]
  %v693 = vmul.f32 %v691, %v671
  %v694 = vmul.f32 %v692, %v671
  %695 = vadd.xlane.f32.xlu0 %v693
  %v696 = vpop.xlane.xlu0 %695
  %697 = vadd.xlane.f32.xlu0 %v694
  %v698 = vpop.xlane.xlu0 %697
  %v699 = vadd.f32 %v689, %v696
  %v700 = vadd.f32 %v690, %v698
  %v701 = vld [vmem:[#allocation3 + $0x30] sm:$0xff]
  %v702 = vld [vmem:[#allocation3 + $0x38] sm:$0xff]
  %v703 = vmul.f32 %v701, %v671
  %v704 = vmul.f32 %v702, %v671
  %705 = vadd.xlane.f32.xlu0 %v703
  %v706 = vpop.xlane.xlu0 %705
  %707 = vadd.xlane.f32.xlu0 %v704
  %v708 = vpop.xlane.xlu0 %707
  %v709 = vadd.f32 %v699, %v706
  %v710 = vadd.f32 %v700, %v708
  %v711 = vmul.f32 %v709, 0.0078125
  %v712 = vmul.f32 %v710, 0.0078125
  %v713 = vsub.f32 %v665, %v711
  %v714 = vsub.f32 %v666, %v712
  %v715 = vmul.f32 %v713, %v671
  %v716 = vmul.f32 %v714, %v671
  %v717 = vmul.f32 %v715, %v715
  %v718 = vmul.f32 %v716, %v716
  %719 = vadd.xlane.f32.xlu0 %v717
  %v720 = vpop.xlane.xlu0 %719
  %721 = vadd.xlane.f32.xlu0 %v718
  %v722 = vpop.xlane.xlu0 %721
  %v723 = vadd.f32 %v720, 0.0
  %v724 = vadd.f32 %v722, 0.0
  %v725 = vsub.f32 %v681, %v711
  %v726 = vsub.f32 %v682, %v712
  %v727 = vmul.f32 %v725, %v671
  %v728 = vmul.f32 %v726, %v671
  %v729 = vmul.f32 %v727, %v727
  %v730 = vmul.f32 %v728, %v728
  %731 = vadd.xlane.f32.xlu0 %v729
  %v732 = vpop.xlane.xlu0 %731
  %733 = vadd.xlane.f32.xlu0 %v730
  %v734 = vpop.xlane.xlu0 %733
  %v735 = vadd.f32 %v723, %v732
  %v736 = vadd.f32 %v724, %v734
  %v737 = vsub.f32 %v691, %v711
  %v738 = vsub.f32 %v692, %v712
  %v739 = vmul.f32 %v737, %v671
  %v740 = vmul.f32 %v738, %v671
  %v741 = vmul.f32 %v739, %v739
  %v742 = vmul.f32 %v740, %v740
  %743 = vadd.xlane.f32.xlu0 %v741
  %v744 = vpop.xlane.xlu0 %743
  %745 = vadd.xlane.f32.xlu0 %v742
  %v746 = vpop.xlane.xlu0 %745
  %v747 = vadd.f32 %v735, %v744
  %v748 = vadd.f32 %v736, %v746
  %v749 = vsub.f32 %v701, %v711
  %v750 = vsub.f32 %v702, %v712
  %v751 = vmul.f32 %v749, %v671
  %v752 = vmul.f32 %v750, %v671
  %v753 = vmul.f32 %v751, %v751
  %v754 = vmul.f32 %v752, %v752
  %755 = vadd.xlane.f32.xlu0 %v753
  %v756 = vpop.xlane.xlu0 %755
  %757 = vadd.xlane.f32.xlu0 %v754
  %v758 = vpop.xlane.xlu0 %757
  %v759 = vadd.f32 %v747, %v756
  %v760 = vadd.f32 %v748, %v758
  %v761 = vmul.f32 %v759, 0.0078125
  %v762 = vmul.f32 %v760, 0.0078125
  %v763 = vld [vmem:[%s2] sm:$0xff]
  %v764 = vld [vmem:[%s2 + $0x8] sm:$0xff]
  %v765 = vadd.f32 %v761, 1e-05
  %v766 = vadd.f32 %v762, 1e-05
  %v767 = vrsqrt.pop %v765
  %v768 = vrsqrt.pop %v766
  %v769 = vmul.f32 %v763, %v767
  %v770 = vmul.f32 %v764, %v768
  %v771 = vld [vmem:[%s3] sm:$0xff]
  %v772 = vld [vmem:[%s3 + $0x8] sm:$0xff]
  %v773 = vmul.f32 %v711, %v769
  %v774 = vmul.f32 %v712, %v770
  %v775 = vsub.f32 %v771, %v773
  %v776 = vsub.f32 %v772, %v774
  %778 = vset.pattern.permute.xlu0 0
  %779 = vperm.xlu0 %778, %v769
  %v780 = vpop.permute.xlu0 %779
  %783 = vset.pattern.permute.xlu0 0
  %784 = vperm.xlu0 %783, %v770
  %v785 = vpop.permute.xlu0 %784
  %v787 = vmul.f32 %v665, %v780
  %v788 = vmul.f32 %v666, %v785
  %790 = vset.pattern.permute.xlu0 0
  %791 = vperm.xlu0 %790, %v775
  %v792 = vpop.permute.xlu0 %791
  %795 = vset.pattern.permute.xlu0 0
  %796 = vperm.xlu0 %795, %v776
  %v797 = vpop.permute.xlu0 %796
  %v799 = vadd.f32 %v787, %v792
  %v800 = vadd.f32 %v788, %v797
  %vm801 = vcmp.gt.f32.partialorder %v799, 0.0
  %vm802 = vcmp.gt.f32.partialorder %v800, 0.0
  %v803 = vmul.f32 %v799, 0.2
  %v804 = vmul.f32 %v800, 0.2
  %v805 = vsel %vm801, %v799, %v803
  %v806 = vsel %vm802, %v800, %v804
  %v807 = vpack.c.bf16 %v806, %v805
  %v809 = vunpack.c.l.b16 %v807
  %v810 = vunpack.c.h.b16 %v807
  %v811 = vpack.c.b16 %v809, %v809
  %v812 = vpack.c.b16 %v810, %v810
  %815 = vst [vmem:[%s5] sm:$0xf] %v811
  %816 = vst [vmem:[%s5 + $0x4] sm:$0xf] %v812
  %v817 = vld [vmem:[#allocation3 + $0x10] sm:$0xff]
  %v818 = vld [vmem:[#allocation3 + $0x18] sm:$0xff]
  %v819 = vmul.f32 %v817, %v780
  %v820 = vmul.f32 %v818, %v785
  %v821 = vadd.f32 %v819, %v792
  %v822 = vadd.f32 %v820, %v797
  %vm823 = vcmp.gt.f32.partialorder %v821, 0.0
  %vm824 = vcmp.gt.f32.partialorder %v822, 0.0
  %v825 = vmul.f32 %v821, 0.2
  %v826 = vmul.f32 %v822, 0.2
  %v827 = vsel %vm823, %v821, %v825
  %v828 = vsel %vm824, %v822, %v826
  %v829 = vpack.c.bf16 %v828, %v827
  %v831 = vunpack.c.l.b16 %v829
  %v832 = vunpack.c.h.b16 %v829
  %v833 = vpack.c.b16 %v831, %v831
  %v834 = vpack.c.b16 %v832, %v832
  %837 = vst [vmem:[%s5 + $0x8] sm:$0xf] %v833
  %838 = vst [vmem:[%s5 + $0xc] sm:$0xf] %v834
  %v839 = vld [vmem:[#allocation3 + $0x20] sm:$0xff]
  %v840 = vld [vmem:[#allocation3 + $0x28] sm:$0xff]
  %v841 = vmul.f32 %v839, %v780
  %v842 = vmul.f32 %v840, %v785
  %v843 = vadd.f32 %v841, %v792
  %v844 = vadd.f32 %v842, %v797
  %vm845 = vcmp.gt.f32.partialorder %v843, 0.0
  %vm846 = vcmp.gt.f32.partialorder %v844, 0.0
  %v847 = vmul.f32 %v843, 0.2
  %v848 = vmul.f32 %v844, 0.2
  %v849 = vsel %vm845, %v843, %v847
  %v850 = vsel %vm846, %v844, %v848
  %v851 = vpack.c.bf16 %v850, %v849
  %v853 = vunpack.c.l.b16 %v851
  %v854 = vunpack.c.h.b16 %v851
  %v855 = vpack.c.b16 %v853, %v853
  %v856 = vpack.c.b16 %v854, %v854
  %859 = vst [vmem:[%s5 + $0x10] sm:$0xf] %v855
  %860 = vst [vmem:[%s5 + $0x14] sm:$0xf] %v856
  %v861 = vld [vmem:[#allocation3 + $0x30] sm:$0xff]
  %v862 = vld [vmem:[#allocation3 + $0x38] sm:$0xff]
  %v863 = vmul.f32 %v861, %v780
  %v864 = vmul.f32 %v862, %v785
  %v865 = vadd.f32 %v863, %v792
  %v866 = vadd.f32 %v864, %v797
  %vm867 = vcmp.gt.f32.partialorder %v865, 0.0
  %vm868 = vcmp.gt.f32.partialorder %v866, 0.0
  %v869 = vmul.f32 %v865, 0.2
  %v870 = vmul.f32 %v866, 0.2
  %v871 = vsel %vm867, %v865, %v869
  %v872 = vsel %vm868, %v866, %v870
  %v873 = vpack.c.bf16 %v872, %v871
  %v875 = vunpack.c.l.b16 %v873
  %v876 = vunpack.c.h.b16 %v873
  %v877 = vpack.c.b16 %v875, %v875
  %v878 = vpack.c.b16 %v876, %v876
  %881 = vst [vmem:[%s5 + $0x18] sm:$0xf] %v877
  %882 = vst [vmem:[%s5 + $0x1c] sm:$0xf] %v878
  // Predicated region
  $region22: #{generator_forward.6} parent=0 // pred_check
    _
  $region23: #{generator_forward.6} parent=0 // pred_check_branch
    %884 = sbr.rel (0) target = $region25
  $region24: #{generator_forward.6} parent=0 // pred_region
    _
  $region25: #{generator_forward.6} parent=0 // pred_fallthru
    _
  // Predicated region
  $region26: #{generator_forward.6} parent=0 // pred_check
    _
  $region27: #{generator_forward.6} parent=0 // pred_check_branch
    %886 = sbr.rel (0) target = $region29
  $region28: #{generator_forward.6} parent=0 // pred_region
    _
  $region29: #{generator_forward.6} parent=0 // pred_fallthru
    _

// kernel: generator_forward.7
$region0: #{generator_forward.7}
  #allocation0 [shape = 'u32[]', space=smem, size = 0x4, offset = 0x4, fixed_abs, tag = 'smem constant byte address 0x4 - core index']
  #allocation1 [shape = 'u32[144,128]{1,0:T(1,128)}', space=vmem, size = 0x12000, scoped, tag = 'internal scratch']
  #allocation2 [shape = 'bf16[144,256]{1,0:T(8,128)(2,1)}', space=vmem, size = 0x12000, scoped, tag = 'scratch operand']
  #allocation3 [shape = 'f32[64,256]{1,0:T(8,128)}', space=vmem, size = 0x10000, scoped, tag = 'scratch operand']
  %s0 = inlined_call_operand.vmem [shape: bf16[16,384], index: 0, kind: input, shape index: {}]
  %s1 = inlined_call_operand.vmem [shape: bf16[64,144], index: 1, kind: input, shape index: {}]
  %s2 = inlined_call_operand.vmem [shape: f32[16,1], index: 2, kind: input, shape index: {}]
  %s3 = inlined_call_operand.vmem [shape: f32[16,1], index: 3, kind: input, shape index: {}]
  %s4 = inlined_call_operand.vmem [shape: f32[1,256], index: 4, kind: input, shape index: {}]
  %s5 = inlined_call_operand.vmem [shape: bf16[64,256], index: 5, kind: output, shape index: {}]
  %s6 = sld [smem:[#allocation0]]
  $region30: #{generator_forward.7} parent=0
    _
  %s8 = ssub.s32 1, %s6
  %s9 = scalar_select 0, %s8, %s6
  // Predicated region
  $region2: #{generator_forward.7} parent=0 // pred_check
    _
  $region3: #{generator_forward.7} parent=0 // pred_check_branch
    %11 = sbr.rel (0) target = $region5
  $region4: #{generator_forward.7} parent=0 // pred_region
    _
  $region5: #{generator_forward.7} parent=0 // pred_fallthru
    _
  // Predicated region
  $region6: #{generator_forward.7} parent=0 // pred_check
    _
  $region7: #{generator_forward.7} parent=0 // pred_check_branch
    %13 = sbr.rel (0) target = $region9
  $region8: #{generator_forward.7} parent=0 // pred_region
    _
  $region9: #{generator_forward.7} parent=0 // pred_fallthru
    _
  // Predicated region
  $region10: #{generator_forward.7} parent=0 // pred_check
    _
  $region11: #{generator_forward.7} parent=0 // pred_check_branch
    %15 = sbr.rel (0) target = $region13
  $region12: #{generator_forward.7} parent=0 // pred_region
    _
  $region13: #{generator_forward.7} parent=0 // pred_fallthru
    _
  // Predicated region
  $region14: #{generator_forward.7} parent=0 // pred_check
    _
  $region15: #{generator_forward.7} parent=0 // pred_check_branch
    %17 = sbr.rel (0) target = $region17
  $region16: #{generator_forward.7} parent=0 // pred_region
    _
  $region17: #{generator_forward.7} parent=0 // pred_fallthru
    _
  // Predicated region
  $region18: #{generator_forward.7} parent=0 // pred_check
    _
  $region19: #{generator_forward.7} parent=0 // pred_check_branch
    %19 = sbr.rel (0) target = $region21
  $region20: #{generator_forward.7} parent=0 // pred_region
    _
  $region21: #{generator_forward.7} parent=0 // pred_fallthru
    _
  %v21 = vld [vmem:[%s0] sm:$0xff]
  %v22 = vld [vmem:[%s0 + $0xc] sm:$0xff]
  %23 = vst [vmem:[#allocation2] sm:$0xff] %v21
  %24 = vst [vmem:[#allocation2 + $0x8] sm:$0xff] %v22
  %v25 = vld [vmem:[%s0] sm:$0xff]
  %v26 = vld [vmem:[%s0 + $0x8] sm:$0xf]
  %v27 = vld [vmem:[%s0 + $0xc] sm:$0xff]
  %v28 = vld [vmem:[%s0 + $0x14] sm:$0xf]
  %33 = vrot.lane.b32.xlu0 %v25, 127
  %v34 = vpop.permute.xlu0 %33
  %35 = vrot.lane.b32.xlu0 %v26, 127
  %v36 = vpop.permute.xlu0 %35
  %37 = vrot.lane.b32.xlu0 %v27, 127
  %v38 = vpop.permute.xlu0 %37
  %39 = vrot.lane.b32.xlu0 %v28, 127
  %v40 = vpop.permute.xlu0 %39
  %v41 = vrot.slane %v34, 4
  %v42 = vrot.slane %v36, 4
  %v43 = vrot.slane %v38, 4
  %v44 = vrot.slane %v40, 4
  %vm45 = vcmask 1043456
  %v46 = vsel %vm45, %v41, %v42
  %vm47 = vcmask 1039360
  %v48 = vsel %vm47, %v34, %v46
  %v49 = vsel %vm45, %v43, %v44
  %v50 = vsel %vm47, %v38, %v49
  %53 = vst [vmem:[#allocation2 + $0x10] sm:$0xff] %v48
  %54 = vst [vmem:[#allocation2 + $0x18] sm:$0xff] %v50
  %v55 = vld [vmem:[%s0] sm:$0xff]
  %v56 = vld [vmem:[%s0 + $0x8] sm:$0xf]
  %v57 = vld [vmem:[%s0 + $0xc] sm:$0xff]
  %v58 = vld [vmem:[%s0 + $0x14] sm:$0xf]
  %63 = vrot.lane.b32.xlu0 %v55, 126
  %v64 = vpop.permute.xlu0 %63
  %65 = vrot.lane.b32.xlu0 %v56, 126
  %v66 = vpop.permute.xlu0 %65
  %67 = vrot.lane.b32.xlu0 %v57, 126
  %v68 = vpop.permute.xlu0 %67
  %69 = vrot.lane.b32.xlu0 %v58, 126
  %v70 = vpop.permute.xlu0 %69
  %v71 = vrot.slane %v64, 4
  %v72 = vrot.slane %v66, 4
  %v73 = vrot.slane %v68, 4
  %v74 = vrot.slane %v70, 4
  %v75 = vsel %vm45, %v71, %v72
  %vm76 = vcmask 1031168
  %v77 = vsel %vm76, %v64, %v75
  %v78 = vsel %vm45, %v73, %v74
  %v79 = vsel %vm76, %v68, %v78
  %82 = vst [vmem:[#allocation2 + $0x20] sm:$0xff] %v77
  %83 = vst [vmem:[#allocation2 + $0x28] sm:$0xff] %v79
  %v84 = vld [vmem:[%s0] sm:$0xff]
  %v85 = vld [vmem:[%s0 + $0x8] sm:$0xf]
  %v86 = vld [vmem:[%s0 + $0xc] sm:$0xff]
  %v87 = vld [vmem:[%s0 + $0x14] sm:$0xf]
  %92 = vrot.lane.b32.xlu0 %v84, 118
  %v93 = vpop.permute.xlu0 %92
  %94 = vrot.lane.b32.xlu0 %v85, 118
  %v95 = vpop.permute.xlu0 %94
  %96 = vrot.lane.b32.xlu0 %v86, 118
  %v97 = vpop.permute.xlu0 %96
  %98 = vrot.lane.b32.xlu0 %v87, 118
  %v99 = vpop.permute.xlu0 %98
  %v100 = vrot.slane %v93, 4
  %v101 = vrot.slane %v95, 4
  %v102 = vrot.slane %v97, 4
  %v103 = vrot.slane %v99, 4
  %v104 = vsel %vm45, %v100, %v101
  %vm105 = vcmask 965632
  %v106 = vsel %vm105, %v93, %v104
  %v107 = vsel %vm45, %v102, %v103
  %v108 = vsel %vm105, %v97, %v107
  %111 = vst [vmem:[#allocation2 + $0x30] sm:$0xff] %v106
  %112 = vst [vmem:[#allocation2 + $0x38] sm:$0xff] %v108
  %v113 = vld [vmem:[%s0] sm:$0xff]
  %v114 = vld [vmem:[%s0 + $0x8] sm:$0xf]
  %v115 = vld [vmem:[%s0 + $0xc] sm:$0xff]
  %v116 = vld [vmem:[%s0 + $0x14] sm:$0xf]
  %121 = vrot.lane.b32.xlu0 %v113, 117
  %v122 = vpop.permute.xlu0 %121
  %123 = vrot.lane.b32.xlu0 %v114, 117
  %v124 = vpop.permute.xlu0 %123
  %125 = vrot.lane.b32.xlu0 %v115, 117
  %v126 = vpop.permute.xlu0 %125
  %127 = vrot.lane.b32.xlu0 %v116, 117
  %v128 = vpop.permute.xlu0 %127
  %v129 = vrot.slane %v122, 4
  %v130 = vrot.slane %v124, 4
  %v131 = vrot.slane %v126, 4
  %v132 = vrot.slane %v128, 4
  %v133 = vsel %vm45, %v129, %v130
  %vm134 = vcmask 957440
  %v135 = vsel %vm134, %v122, %v133
  %v136 = vsel %vm45, %v131, %v132
  %v137 = vsel %vm134, %v126, %v136
  %140 = vst [vmem:[#allocation2 + $0x40] sm:$0xff] %v135
  %141 = vst [vmem:[#allocation2 + $0x48] sm:$0xff] %v137
  %v142 = vld [vmem:[%s0] sm:$0xff]
  %v143 = vld [vmem:[%s0 + $0x8] sm:$0xf]
  %v144 = vld [vmem:[%s0 + $0xc] sm:$0xff]
  %v145 = vld [vmem:[%s0 + $0x14] sm:$0xf]
  %150 = vrot.lane.b32.xlu0 %v142, 116
  %v151 = vpop.permute.xlu0 %150
  %152 = vrot.lane.b32.xlu0 %v143, 116
  %v153 = vpop.permute.xlu0 %152
  %154 = vrot.lane.b32.xlu0 %v144, 116
  %v155 = vpop.permute.xlu0 %154
  %156 = vrot.lane.b32.xlu0 %v145, 116
  %v157 = vpop.permute.xlu0 %156
  %v158 = vrot.slane %v151, 4
  %v159 = vrot.slane %v153, 4
  %v160 = vrot.slane %v155, 4
  %v161 = vrot.slane %v157, 4
  %v162 = vsel %vm45, %v158, %v159
  %vm163 = vcmask 949248
  %v164 = vsel %vm163, %v151, %v162
  %v165 = vsel %vm45, %v160, %v161
  %v166 = vsel %vm163, %v155, %v165
  %169 = vst [vmem:[#allocation2 + $0x50] sm:$0xff] %v164
  %170 = vst [vmem:[#allocation2 + $0x58] sm:$0xff] %v166
  %v171 = vld [vmem:[%s0] sm:$0xff]
  %v172 = vld [vmem:[%s0 + $0x8] sm:$0xf]
  %v173 = vld [vmem:[%s0 + $0xc] sm:$0xff]
  %v174 = vld [vmem:[%s0 + $0x14] sm:$0xf]
  %179 = vrot.lane.b32.xlu0 %v171, 108
  %v180 = vpop.permute.xlu0 %179
  %181 = vrot.lane.b32.xlu0 %v172, 108
  %v182 = vpop.permute.xlu0 %181
  %183 = vrot.lane.b32.xlu0 %v173, 108
  %v184 = vpop.permute.xlu0 %183
  %185 = vrot.lane.b32.xlu0 %v174, 108
  %v186 = vpop.permute.xlu0 %185
  %v187 = vrot.slane %v180, 4
  %v188 = vrot.slane %v182, 4
  %v189 = vrot.slane %v184, 4
  %v190 = vrot.slane %v186, 4
  %v191 = vsel %vm45, %v187, %v188
  %vm192 = vcmask 883712
  %v193 = vsel %vm192, %v180, %v191
  %v194 = vsel %vm45, %v189, %v190
  %v195 = vsel %vm192, %v184, %v194
  %198 = vst [vmem:[#allocation2 + $0x60] sm:$0xff] %v193
  %199 = vst [vmem:[#allocation2 + $0x68] sm:$0xff] %v195
  %v200 = vld [vmem:[%s0] sm:$0xff]
  %v201 = vld [vmem:[%s0 + $0x8] sm:$0xf]
  %v202 = vld [vmem:[%s0 + $0xc] sm:$0xff]
  %v203 = vld [vmem:[%s0 + $0x14] sm:$0xf]
  %208 = vrot.lane.b32.xlu0 %v200, 107
  %v209 = vpop.permute.xlu0 %208
  %210 = vrot.lane.b32.xlu0 %v201, 107
  %v211 = vpop.permute.xlu0 %210
  %212 = vrot.lane.b32.xlu0 %v202, 107
  %v213 = vpop.permute.xlu0 %212
  %214 = vrot.lane.b32.xlu0 %v203, 107
  %v215 = vpop.permute.xlu0 %214
  %v216 = vrot.slane %v209, 4
  %v217 = vrot.slane %v211, 4
  %v218 = vrot.slane %v213, 4
  %v219 = vrot.slane %v215, 4
  %v220 = vsel %vm45, %v216, %v217
  %vm221 = vcmask 875520
  %v222 = vsel %vm221, %v209, %v220
  %v223 = vsel %vm45, %v218, %v219
  %v224 = vsel %vm221, %v213, %v223
  %227 = vst [vmem:[#allocation2 + $0x70] sm:$0xff] %v222
  %228 = vst [vmem:[#allocation2 + $0x78] sm:$0xff] %v224
  %v229 = vld [vmem:[%s0] sm:$0xff]
  %v230 = vld [vmem:[%s0 + $0x8] sm:$0xf]
  %v231 = vld [vmem:[%s0 + $0xc] sm:$0xff]
  %v232 = vld [vmem:[%s0 + $0x14] sm:$0xf]
  %237 = vrot.lane.b32.xlu0 %v229, 106
  %v238 = vpop.permute.xlu0 %237
  %239 = vrot.lane.b32.xlu0 %v230, 106
  %v240 = vpop.permute.xlu0 %239
  %241 = vrot.lane.b32.xlu0 %v231, 106
  %v242 = vpop.permute.xlu0 %241
  %243 = vrot.lane.b32.xlu0 %v232, 106
  %v244 = vpop.permute.xlu0 %243
  %v245 = vrot.slane %v238, 4
  %v246 = vrot.slane %v240, 4
  %v247 = vrot.slane %v242, 4
  %v248 = vrot.slane %v244, 4
  %v249 = vsel %vm45, %v245, %v246
  %vm250 = vcmask 867328
  %v251 = vsel %vm250, %v238, %v249
  %v252 = vsel %vm45, %v247, %v248
  %v253 = vsel %vm250, %v242, %v252
  %256 = vst [vmem:[#allocation2 + $0x80] sm:$0xff] %v251
  %257 = vst [vmem:[#allocation2 + $0x88] sm:$0xff] %v253
  %v258 = vld [vmem:[%s1] sm:$0xff]
  %v259 = vld [vmem:[%s1 + $0x8] sm:$0xff]
  %v260 = vld [vmem:[%s1 + $0x10] sm:$0xff]
  %v261 = vld [vmem:[%s1 + $0x18] sm:$0xff]
  %v262 = vld [vmem:[%s1 + $0x20] sm:$0xff]
  %v263 = vld [vmem:[%s1 + $0x28] sm:$0xff]
  %v264 = vld [vmem:[%s1 + $0x30] sm:$0xff]
  %v265 = vld [vmem:[%s1 + $0x38] sm:$0xff]
  %v266 = vld [vmem:[#allocation2] sm:$0xff]
  %v267 = vld [vmem:[#allocation2 + $0x8] sm:$0xff]
  %v268 = vld [vmem:[#allocation2 + $0x10] sm:$0xff]
  %v269 = vld [vmem:[#allocation2 + $0x18] sm:$0xff]
  %v270 = vld [vmem:[#allocation2 + $0x20] sm:$0xff]
  %v271 = vld [vmem:[#allocation2 + $0x28] sm:$0xff]
  %v272 = vld [vmem:[#allocation2 + $0x30] sm:$0xff]
  %v273 = vld [vmem:[#allocation2 + $0x38] sm:$0xff]
  %v274 = vld [vmem:[#allocation2 + $0x40] sm:$0xff]
  %v275 = vld [vmem:[#allocation2 + $0x48] sm:$0xff]
  %v276 = vld [vmem:[#allocation2 + $0x50] sm:$0xff]
  %v277 = vld [vmem:[#allocation2 + $0x58] sm:$0xff]
  %v278 = vld [vmem:[#allocation2 + $0x60] sm:$0xff]
  %v279 = vld [vmem:[#allocation2 + $0x68] sm:$0xff]
  %v280 = vld [vmem:[#allocation2 + $0x70] sm:$0xff]
  %v281 = vld [vmem:[#allocation2 + $0x78] sm:$0xff]
  %v282 = vld [vmem:[#allocation2 + $0x80] sm:$0xff]
  %v283 = vld [vmem:[#allocation2 + $0x88] sm:$0xff]
  %v292 = vunpack.c.l.b16 %v258
  %v293 = vunpack.c.h.b16 %v258
  %v294 = vunpack.c.l.b16 %v259
  %v295 = vunpack.c.h.b16 %v259
  %v296 = vunpack.c.l.b16 %v260
  %v297 = vunpack.c.h.b16 %v260
  %v298 = vunpack.c.l.b16 %v261
  %v299 = vunpack.c.h.b16 %v261
  %v300 = vunpack.c.l.b16 %v262
  %v301 = vunpack.c.h.b16 %v262
  %v302 = vunpack.c.l.b16 %v263
  %v303 = vunpack.c.h.b16 %v263
  %v304 = vunpack.c.l.b16 %v264
  %v305 = vunpack.c.h.b16 %v264
  %v306 = vunpack.c.l.b16 %v265
  %v307 = vunpack.c.h.b16 %v265
  %v308 = vpack.c.b16 %v294, %v292
  %v309 = vpack.c.b16 %v295, %v293
  %v310 = vpack.c.b16 %v298, %v296
  %v311 = vpack.c.b16 %v299, %v297
  %v312 = vpack.c.b16 %v302, %v300
  %v313 = vpack.c.b16 %v303, %v301
  %v314 = vpack.c.b16 %v306, %v304
  %v315 = vpack.c.b16 %v307, %v305
  %v338 = vunpack.c.l.b16 %v266
  %v339 = vunpack.c.h.b16 %v266
  %v340 = vunpack.c.l.b16 %v267
  %v341 = vunpack.c.h.b16 %v267
  %v342 = vunpack.c.l.b16 %v268
  %v343 = vunpack.c.h.b16 %v268
  %v344 = vunpack.c.l.b16 %v269
  %v345 = vunpack.c.h.b16 %v269
  %v346 = vunpack.c.l.b16 %v270
  %v347 = vunpack.c.h.b16 %v270
  %v348 = vunpack.c.l.b16 %v271
  %v349 = vunpack.c.h.b16 %v271
  %v350 = vunpack.c.l.b16 %v272
  %v351 = vunpack.c.h.b16 %v272
  %v352 = vunpack.c.l.b16 %v273
  %v353 = vunpack.c.h.b16 %v273
  %v354 = vunpack.c.l.b16 %v274
  %v355 = vunpack.c.h.b16 %v274
  %v356 = vunpack.c.l.b16 %v275
  %v357 = vunpack.c.h.b16 %v275
  %v358 = vunpack.c.l.b16 %v276
  %v359 = vunpack.c.h.b16 %v276
  %v360 = vunpack.c.l.b16 %v277
  %v361 = vunpack.c.h.b16 %v277
  %v362 = vunpack.c.l.b16 %v278
  %v363 = vunpack.c.h.b16 %v278
  %v364 = vunpack.c.l.b16 %v279
  %v365 = vunpack.c.h.b16 %v279
  %v366 = vunpack.c.l.b16 %v280
  %v367 = vunpack.c.h.b16 %v280
  %v368 = vunpack.c.l.b16 %v281
  %v369 = vunpack.c.h.b16 %v281
  %v370 = vunpack.c.l.b16 %v282
  %v371 = vunpack.c.h.b16 %v282
  %v372 = vunpack.c.l.b16 %v283
  %v373 = vunpack.c.h.b16 %v283
  %v374 = vpack.c.b16 %v340, %v338
  %v375 = vpack.c.b16 %v341, %v339
  %v376 = vpack.c.b16 %v344, %v342
  %v377 = vpack.c.b16 %v345, %v343
  %v378 = vpack.c.b16 %v348, %v346
  %v379 = vpack.c.b16 %v349, %v347
  %v380 = vpack.c.b16 %v352, %v350
  %v381 = vpack.c.b16 %v353, %v351
  %v382 = vpack.c.b16 %v356, %v354
  %v383 = vpack.c.b16 %v357, %v355
  %v384 = vpack.c.b16 %v360, %v358
  %v385 = vpack.c.b16 %v361, %v359
  %v386 = vpack.c.b16 %v364, %v362
  %v387 = vpack.c.b16 %v365, %v363
  %v388 = vpack.c.b16 %v368, %v366
  %v389 = vpack.c.b16 %v369, %v367
  %v390 = vpack.c.b16 %v372, %v370
  %v391 = vpack.c.b16 %v373, %v371
  %vm410 = vcmask 130048
  %v412 = vsel %vm410, %v309, 0
  %v415 = vsel %vm410, %v311, 0
  %v418 = vsel %vm410, %v313, 0
  %v421 = vsel %vm410, %v315, 0
  %423 = vmatprep.subr.bf16.mxu0 %v389
  %424 = vmatpush1.bf16.msra.mxu0 %v388
  %425 = vmatprep.subr.bf16.mxu0 %v387
  %426 = vmatpush1.bf16.msra.mxu0 %v386
  %427 = vmatprep.subr.bf16.mxu0 %v385
  %428 = vmatpush1.bf16.msra.mxu0 %v384
  %429 = vmatprep.subr.bf16.mxu0 %v383
  %430 = vmatpush1.bf16.msra.mxu0 %v382
  %431 = vmatprep.subr.bf16.mxu0 %v381
  %432 = vmatpush1.bf16.msra.mxu0 %v380
  %433 = vmatprep.subr.bf16.mxu0 %v379
  %434 = vmatpush1.bf16.msra.mxu0 %v378
  %435 = vmatprep.subr.bf16.mxu0 %v377
  %436 = vmatpush1.bf16.msra.mxu0 %v376
  %437 = vmatprep.subr.bf16.mxu0 %v375
  %438 = vmatpush1.bf16.msra.mxu0 %v374
  %439 = vmatprep.subr.bf16.mxu0 0
  %440 = vmatpush2.bf16.msra.mxu0 0
  %441 = vmatprep.subr.bf16.mxu0 0
  %442 = vmatpush2.bf16.msra.mxu0 0
  %443 = vmatprep.subr.bf16.mxu0 0
  %444 = vmatpush2.bf16.msra.mxu0 0
  %445 = vmatprep.subr.bf16.mxu0 0
  %446 = vmatpush2.bf16.msra.mxu0 0
  %447 = vmatprep.subr.bf16.mxu0 0
  %448 = vmatpush2.bf16.msra.mxu0 0
  %449 = vmatprep.subr.bf16.mxu0 0
  %450 = vmatpush2.bf16.msra.mxu0 0
  %451 = vmatprep.subr.bf16.mxu0 0
  %452 = vmatpush2.bf16.msra.mxu0 0
  %453 = vmatprep.subr.bf16.mxu0 %v391
  %454 = vmatpush2.bf16.msra.mxu0 %v390
  %455 = vmatprep.mubr.bf16.mxu0 %v412
  %456 = vmatmul.mubr.bf16.gmra.mxu0 %v308
  %v457 = vpop.f32.mrf.mxu0
  %v458 = vadd.f32 0.0, %v457
  %v459 = vpop.f32.mrf.mxu0
  %v460 = vadd.f32 0.0, %v459
  %v461 = vpop.f32.mrf.mxu0
  %v462 = vadd.f32 0.0, %v461
  %v463 = vpop.f32.mrf.mxu0
  %v464 = vadd.f32 0.0, %v463
  %465 = vmatprep.mubr.bf16.mxu0 %v415
  %466 = vmatmul.mubr.bf16.gmra.mxu0 %v310
  %v467 = vpop.f32.mrf.mxu0
  %v468 = vadd.f32 0.0, %v467
  %v469 = vpop.f32.mrf.mxu0
  %v470 = vadd.f32 0.0, %v469
  %v471 = vpop.f32.mrf.mxu0
  %v472 = vadd.f32 0.0, %v471
  %v473 = vpop.f32.mrf.mxu0
  %v474 = vadd.f32 0.0, %v473
  %475 = vmatprep.mubr.bf16.mxu0 %v418
  %476 = vmatmul.mubr.bf16.gmra.mxu0 %v312
  %v477 = vpop.f32.mrf.mxu0
  %v478 = vadd.f32 0.0, %v477
  %v479 = vpop.f32.mrf.mxu0
  %v480 = vadd.f32 0.0, %v479
  %v481 = vpop.f32.mrf.mxu0
  %v482 = vadd.f32 0.0, %v481
  %v483 = vpop.f32.mrf.mxu0
  %v484 = vadd.f32 0.0, %v483
  %485 = vmatprep.mubr.bf16.mxu0 %v421
  %486 = vmatmul.mubr.bf16.gmra.mxu0 %v314
  %v487 = vpop.f32.mrf.mxu0
  %v488 = vadd.f32 0.0, %v487
  %v489 = vpop.f32.mrf.mxu0
  %v490 = vadd.f32 0.0, %v489
  %v491 = vpop.f32.mrf.mxu0
  %v492 = vadd.f32 0.0, %v491
  %v493 = vpop.f32.mrf.mxu0
  %v494 = vadd.f32 0.0, %v493
  %495 = vdwg.mxu0
  %496 = vst [vmem:[#allocation3] sm:$0xff] %v458
  %497 = vst [vmem:[#allocation3 + $0x8] sm:$0xff] %v460
  %498 = vst [vmem:[#allocation3 + $0x10] sm:$0xff] %v462
  %499 = vst [vmem:[#allocation3 + $0x18] sm:$0xff] %v464
  %500 = vst [vmem:[#allocation3 + $0x20] sm:$0xff] %v468
  %501 = vst [vmem:[#allocation3 + $0x28] sm:$0xff] %v470
  %502 = vst [vmem:[#allocation3 + $0x30] sm:$0xff] %v472
  %503 = vst [vmem:[#allocation3 + $0x38] sm:$0xff] %v474
  %504 = vst [vmem:[#allocation3 + $0x40] sm:$0xff] %v478
  %505 = vst [vmem:[#allocation3 + $0x48] sm:$0xff] %v480
  %506 = vst [vmem:[#allocation3 + $0x50] sm:$0xff] %v482
  %507 = vst [vmem:[#allocation3 + $0x58] sm:$0xff] %v484
  %508 = vst [vmem:[#allocation3 + $0x60] sm:$0xff] %v488
  %509 = vst [vmem:[#allocation3 + $0x68] sm:$0xff] %v490
  %510 = vst [vmem:[#allocation3 + $0x70] sm:$0xff] %v492
  %511 = vst [vmem:[#allocation3 + $0x78] sm:$0xff] %v494
  %v512 = vld [vmem:[%s4] sm:$0x3]
  %v513 = vld [vmem:[#allocation3] sm:$0xff]
  %v514 = vld [vmem:[#allocation3 + $0x8] sm:$0xff]
  %v515 = vld [vmem:[#allocation3 + $0x10] sm:$0xff]
  %v516 = vld [vmem:[#allocation3 + $0x18] sm:$0xff]
  %v518 = vlaneseq
  %v519 = vshrl.u32 %v518, 7
  %v520 = vsub.s32 0, %v519
  %v521 = vrot.slane %v512, %v520
  %v522 = vlaneseq
  %v523 = vshrl.u32 %v522, 7
  %v524 = vsub.s32 1, %v523
  %v525 = vrot.slane %v512, %v524
  %v528 = vmul.f32 %v513, %v521
  %v529 = vmul.f32 %v514, %v525
  %v530 = vmul.f32 %v515, %v521
  %v531 = vmul.f32 %v516, %v525
  %v532 = vadd.f32 %v528, %v529
  %533 = vadd.xlane.f32.xlu0 %v532
  %v534 = vpop.xlane.xlu0 %533
  %v535 = vadd.f32 %v530, %v531
  %536 = vadd.xlane.f32.xlu0 %v535
  %v537 = vpop.xlane.xlu0 %536
  %v538 = vadd.f32 %v534, 0.0
  %v539 = vadd.f32 %v537, 0.0
  %v540 = vld [vmem:[#allocation3 + $0x20] sm:$0xff]
  %v541 = vld [vmem:[#allocation3 + $0x28] sm:$0xff]
  %v542 = vld [vmem:[#allocation3 + $0x30] sm:$0xff]
  %v543 = vld [vmem:[#allocation3 + $0x38] sm:$0xff]
  %v544 = vmul.f32 %v540, %v521
  %v545 = vmul.f32 %v541, %v525
  %v546 = vmul.f32 %v542, %v521
  %v547 = vmul.f32 %v543, %v525
  %v548 = vadd.f32 %v544, %v545
  %549 = vadd.xlane.f32.xlu0 %v548
  %v550 = vpop.xlane.xlu0 %549
  %v551 = vadd.f32 %v546, %v547
  %552 = vadd.xlane.f32.xlu0 %v551
  %v553 = vpop.xlane.xlu0 %552
  %v554 = vadd.f32 %v538, %v550
  %v555 = vadd.f32 %v539, %v553
  %v556 = vld [vmem:[#allocation3 + $0x40] sm:$0xff]
  %v557 = vld [vmem:[#allocation3 + $0x48] sm:$0xff]
  %v558 = vld [vmem:[#allocation3 + $0x50] sm:$0xff]
  %v559 = vld [vmem:[#allocation3 + $0x58] sm:$0xff]
  %v560 = vmul.f32 %v556, %v521
  %v561 = vmul.f32 %v557, %v525
  %v562 = vmul.f32 %v558, %v521
  %v563 = vmul.f32 %v559, %v525
  %v564 = vadd.f32 %v560, %v561
  %565 = vadd.xlane.f32.xlu0 %v564
  %v566 = vpop.xlane.xlu0 %565
  %v567 = vadd.f32 %v562, %v563
  %568 = vadd.xlane.f32.xlu0 %v567
  %v569 = vpop.xlane.xlu0 %568
  %v570 = vadd.f32 %v554, %v566
  %v571 = vadd.f32 %v555, %v569
  %v572 = vld [vmem:[#allocation3 + $0x60] sm:$0xff]
  %v573 = vld [vmem:[#allocation3 + $0x68] sm:$0xff]
  %v574 = vld [vmem:[#allocation3 + $0x70] sm:$0xff]
  %v575 = vld [vmem:[#allocation3 + $0x78] sm:$0xff]
  %v576 = vmul.f32 %v572, %v521
  %v577 = vmul.f32 %v573, %v525
  %v578 = vmul.f32 %v574, %v521
  %v579 = vmul.f32 %v575, %v525
  %v580 = vadd.f32 %v576, %v577
  %581 = vadd.xlane.f32.xlu0 %v580
  %v582 = vpop.xlane.xlu0 %581
  %v583 = vadd.f32 %v578, %v579
  %584 = vadd.xlane.f32.xlu0 %v583
  %v585 = vpop.xlane.xlu0 %584
  %v586 = vadd.f32 %v570, %v582
  %v587 = vadd.f32 %v571, %v585
  %v588 = vmul.f32 %v586, 0.001953125
  %v589 = vmul.f32 %v587, 0.001953125
  %v590 = vsub.f32 %v513, %v588
  %v591 = vsub.f32 %v514, %v588
  %v592 = vsub.f32 %v515, %v589
  %v593 = vsub.f32 %v516, %v589
  %v594 = vmul.f32 %v590, %v521
  %v595 = vmul.f32 %v591, %v525
  %v596 = vmul.f32 %v592, %v521
  %v597 = vmul.f32 %v593, %v525
  %v598 = vmul.f32 %v594, %v594
  %v599 = vmul.f32 %v595, %v595
  %v600 = vmul.f32 %v596, %v596
  %v601 = vmul.f32 %v597, %v597
  %v602 = vadd.f32 %v598, %v599
  %603 = vadd.xlane.f32.xlu0 %v602
  %v604 = vpop.xlane.xlu0 %603
  %v605 = vadd.f32 %v600, %v601
  %606 = vadd.xlane.f32.xlu0 %v605
  %v607 = vpop.xlane.xlu0 %606
  %v608 = vadd.f32 %v604, 0.0
  %v609 = vadd.f32 %v607, 0.0
  %v610 = vsub.f32 %v540, %v588
  %v611 = vsub.f32 %v541, %v588
  %v612 = vsub.f32 %v542, %v589
  %v613 = vsub.f32 %v543, %v589
  %v614 = vmul.f32 %v610, %v521
  %v615 = vmul.f32 %v611, %v525
  %v616 = vmul.f32 %v612, %v521
  %v617 = vmul.f32 %v613, %v525
  %v618 = vmul.f32 %v614, %v614
  %v619 = vmul.f32 %v615, %v615
  %v620 = vmul.f32 %v616, %v616
  %v621 = vmul.f32 %v617, %v617
  %v622 = vadd.f32 %v618, %v619
  %623 = vadd.xlane.f32.xlu0 %v622
  %v624 = vpop.xlane.xlu0 %623
  %v625 = vadd.f32 %v620, %v621
  %626 = vadd.xlane.f32.xlu0 %v625
  %v627 = vpop.xlane.xlu0 %626
  %v628 = vadd.f32 %v608, %v624
  %v629 = vadd.f32 %v609, %v627
  %v630 = vsub.f32 %v556, %v588
  %v631 = vsub.f32 %v557, %v588
  %v632 = vsub.f32 %v558, %v589
  %v633 = vsub.f32 %v559, %v589
  %v634 = vmul.f32 %v630, %v521
  %v635 = vmul.f32 %v631, %v525
  %v636 = vmul.f32 %v632, %v521
  %v637 = vmul.f32 %v633, %v525
  %v638 = vmul.f32 %v634, %v634
  %v639 = vmul.f32 %v635, %v635
  %v640 = vmul.f32 %v636, %v636
  %v641 = vmul.f32 %v637, %v637
  %v642 = vadd.f32 %v638, %v639
  %643 = vadd.xlane.f32.xlu0 %v642
  %v644 = vpop.xlane.xlu0 %643
  %v645 = vadd.f32 %v640, %v641
  %646 = vadd.xlane.f32.xlu0 %v645
  %v647 = vpop.xlane.xlu0 %646
  %v648 = vadd.f32 %v628, %v644
  %v649 = vadd.f32 %v629, %v647
  %v650 = vsub.f32 %v572, %v588
  %v651 = vsub.f32 %v573, %v588
  %v652 = vsub.f32 %v574, %v589
  %v653 = vsub.f32 %v575, %v589
  %v654 = vmul.f32 %v650, %v521
  %v655 = vmul.f32 %v651, %v525
  %v656 = vmul.f32 %v652, %v521
  %v657 = vmul.f32 %v653, %v525
  %v658 = vmul.f32 %v654, %v654
  %v659 = vmul.f32 %v655, %v655
  %v660 = vmul.f32 %v656, %v656
  %v661 = vmul.f32 %v657, %v657
  %v662 = vadd.f32 %v658, %v659
  %663 = vadd.xlane.f32.xlu0 %v662
  %v664 = vpop.xlane.xlu0 %663
  %v665 = vadd.f32 %v660, %v661
  %666 = vadd.xlane.f32.xlu0 %v665
  %v667 = vpop.xlane.xlu0 %666
  %v668 = vadd.f32 %v648, %v664
  %v669 = vadd.f32 %v649, %v667
  %v670 = vmul.f32 %v668, 0.001953125
  %v671 = vmul.f32 %v669, 0.001953125
  %v672 = vld [vmem:[%s2] sm:$0xff]
  %v673 = vld [vmem:[%s2 + $0x8] sm:$0xff]
  %v674 = vadd.f32 %v670, 1e-05
  %v675 = vadd.f32 %v671, 1e-05
  %v676 = vrsqrt.pop %v674
  %v677 = vrsqrt.pop %v675
  %v678 = vmul.f32 %v672, %v676
  %v679 = vmul.f32 %v673, %v677
  %v680 = vld [vmem:[%s3] sm:$0xff]
  %v681 = vld [vmem:[%s3 + $0x8] sm:$0xff]
  %v682 = vmul.f32 %v588, %v678
  %v683 = vmul.f32 %v589, %v679
  %v684 = vsub.f32 %v680, %v682
  %v685 = vsub.f32 %v681, %v683
  %687 = vset.pattern.permute.xlu0 0
  %688 = vperm.xlu0 %687, %v678
  %v689 = vpop.permute.xlu0 %688
  %692 = vset.pattern.permute.xlu0 0
  %693 = vperm.xlu0 %692, %v679
  %v694 = vpop.permute.xlu0 %693
  %v696 = vmul.f32 %v513, %v689
  %v697 = vmul.f32 %v514, %v689
  %v698 = vmul.f32 %v515, %v694
  %v699 = vmul.f32 %v516, %v694
  %701 = vset.pattern.permute.xlu0 0
  %702 = vperm.xlu0 %701, %v684
  %v703 = vpop.permute.xlu0 %702
  %706 = vset.pattern.permute.xlu0 0
  %707 = vperm.xlu0 %706, %v685
  %v708 = vpop.permute.xlu0 %707
  %v710 = vadd.f32 %v696, %v703
  %v711 = vadd.f32 %v697, %v703
  %v712 = vadd.f32 %v698, %v708
  %v713 = vadd.f32 %v699, %v708
  %vm714 = vcmp.gt.f32.partialorder %v710, 0.0
  %vm715 = vcmp.gt.f32.partialorder %v711, 0.0
  %vm716 = vcmp.gt.f32.partialorder %v712, 0.0
  %vm717 = vcmp.gt.f32.partialorder %v713, 0.0
  %v718 = vmul.f32 %v710, 0.2
  %v719 = vmul.f32 %v711, 0.2
  %v720 = vmul.f32 %v712, 0.2
  %v721 = vmul.f32 %v713, 0.2
  %v722 = vsel %vm714, %v710, %v718
  %v723 = vsel %vm715, %v711, %v719
  %v724 = vsel %vm716, %v712, %v720
  %v725 = vsel %vm717, %v713, %v721
  %v726 = vpack.c.bf16 %v724, %v722
  %v727 = vpack.c.bf16 %v725, %v723
  %v730 = vunpack.c.l.b16 %v726
  %v731 = vunpack.c.l.b16 %v727
  %v732 = vunpack.c.h.b16 %v726
  %v733 = vunpack.c.h.b16 %v727
  %v734 = vpack.c.b16 %v731, %v730
  %v735 = vpack.c.b16 %v733, %v732
  %738 = vst [vmem:[%s5] sm:$0xff] %v734
  %739 = vst [vmem:[%s5 + $0x8] sm:$0xff] %v735
  %v740 = vld [vmem:[#allocation3 + $0x20] sm:$0xff]
  %v741 = vld [vmem:[#allocation3 + $0x28] sm:$0xff]
  %v742 = vld [vmem:[#allocation3 + $0x30] sm:$0xff]
  %v743 = vld [vmem:[#allocation3 + $0x38] sm:$0xff]
  %v744 = vmul.f32 %v740, %v689
  %v745 = vmul.f32 %v741, %v689
  %v746 = vmul.f32 %v742, %v694
  %v747 = vmul.f32 %v743, %v694
  %v748 = vadd.f32 %v744, %v703
  %v749 = vadd.f32 %v745, %v703
  %v750 = vadd.f32 %v746, %v708
  %v751 = vadd.f32 %v747, %v708
  %vm752 = vcmp.gt.f32.partialorder %v748, 0.0
  %vm753 = vcmp.gt.f32.partialorder %v749, 0.0
  %vm754 = vcmp.gt.f32.partialorder %v750, 0.0
  %vm755 = vcmp.gt.f32.partialorder %v751, 0.0
  %v756 = vmul.f32 %v748, 0.2
  %v757 = vmul.f32 %v749, 0.2
  %v758 = vmul.f32 %v750, 0.2
  %v759 = vmul.f32 %v751, 0.2
  %v760 = vsel %vm752, %v748, %v756
  %v761 = vsel %vm753, %v749, %v757
  %v762 = vsel %vm754, %v750, %v758
  %v763 = vsel %vm755, %v751, %v759
  %v764 = vpack.c.bf16 %v762, %v760
  %v765 = vpack.c.bf16 %v763, %v761
  %v768 = vunpack.c.l.b16 %v764
  %v769 = vunpack.c.l.b16 %v765
  %v770 = vunpack.c.h.b16 %v764
  %v771 = vunpack.c.h.b16 %v765
  %v772 = vpack.c.b16 %v769, %v768
  %v773 = vpack.c.b16 %v771, %v770
  %776 = vst [vmem:[%s5 + $0x10] sm:$0xff] %v772
  %777 = vst [vmem:[%s5 + $0x18] sm:$0xff] %v773
  %v778 = vld [vmem:[#allocation3 + $0x40] sm:$0xff]
  %v779 = vld [vmem:[#allocation3 + $0x48] sm:$0xff]
  %v780 = vld [vmem:[#allocation3 + $0x50] sm:$0xff]
  %v781 = vld [vmem:[#allocation3 + $0x58] sm:$0xff]
  %v782 = vmul.f32 %v778, %v689
  %v783 = vmul.f32 %v779, %v689
  %v784 = vmul.f32 %v780, %v694
  %v785 = vmul.f32 %v781, %v694
  %v786 = vadd.f32 %v782, %v703
  %v787 = vadd.f32 %v783, %v703
  %v788 = vadd.f32 %v784, %v708
  %v789 = vadd.f32 %v785, %v708
  %vm790 = vcmp.gt.f32.partialorder %v786, 0.0
  %vm791 = vcmp.gt.f32.partialorder %v787, 0.0
  %vm792 = vcmp.gt.f32.partialorder %v788, 0.0
  %vm793 = vcmp.gt.f32.partialorder %v789, 0.0
  %v794 = vmul.f32 %v786, 0.2
  %v795 = vmul.f32 %v787, 0.2
  %v796 = vmul.f32 %v788, 0.2
  %v797 = vmul.f32 %v789, 0.2
  %v798 = vsel %vm790, %v786, %v794
  %v799 = vsel %vm791, %v787, %v795
  %v800 = vsel %vm792, %v788, %v796
  %v801 = vsel %vm793, %v789, %v797
  %v802 = vpack.c.bf16 %v800, %v798
  %v803 = vpack.c.bf16 %v801, %v799
  %v806 = vunpack.c.l.b16 %v802
  %v807 = vunpack.c.l.b16 %v803
  %v808 = vunpack.c.h.b16 %v802
  %v809 = vunpack.c.h.b16 %v803
  %v810 = vpack.c.b16 %v807, %v806
  %v811 = vpack.c.b16 %v809, %v808
  %814 = vst [vmem:[%s5 + $0x20] sm:$0xff] %v810
  %815 = vst [vmem:[%s5 + $0x28] sm:$0xff] %v811
  %v816 = vld [vmem:[#allocation3 + $0x60] sm:$0xff]
  %v817 = vld [vmem:[#allocation3 + $0x68] sm:$0xff]
  %v818 = vld [vmem:[#allocation3 + $0x70] sm:$0xff]
  %v819 = vld [vmem:[#allocation3 + $0x78] sm:$0xff]
  %v820 = vmul.f32 %v816, %v689
  %v821 = vmul.f32 %v817, %v689
  %v822 = vmul.f32 %v818, %v694
  %v823 = vmul.f32 %v819, %v694
  %v824 = vadd.f32 %v820, %v703
  %v825 = vadd.f32 %v821, %v703
  %v826 = vadd.f32 %v822, %v708
  %v827 = vadd.f32 %v823, %v708
  %vm828 = vcmp.gt.f32.partialorder %v824, 0.0
  %vm829 = vcmp.gt.f32.partialorder %v825, 0.0
  %vm830 = vcmp.gt.f32.partialorder %v826, 0.0
  %vm831 = vcmp.gt.f32.partialorder %v827, 0.0
  %v832 = vmul.f32 %v824, 0.2
  %v833 = vmul.f32 %v825, 0.2
  %v834 = vmul.f32 %v826, 0.2
  %v835 = vmul.f32 %v827, 0.2
  %v836 = vsel %vm828, %v824, %v832
  %v837 = vsel %vm829, %v825, %v833
  %v838 = vsel %vm830, %v826, %v834
  %v839 = vsel %vm831, %v827, %v835
  %v840 = vpack.c.bf16 %v838, %v836
  %v841 = vpack.c.bf16 %v839, %v837
  %v844 = vunpack.c.l.b16 %v840
  %v845 = vunpack.c.l.b16 %v841
  %v846 = vunpack.c.h.b16 %v840
  %v847 = vunpack.c.h.b16 %v841
  %v848 = vpack.c.b16 %v845, %v844
  %v849 = vpack.c.b16 %v847, %v846
  %852 = vst [vmem:[%s5 + $0x30] sm:$0xff] %v848
  %853 = vst [vmem:[%s5 + $0x38] sm:$0xff] %v849
  // Predicated region
  $region22: #{generator_forward.7} parent=0 // pred_check
    _
  $region23: #{generator_forward.7} parent=0 // pred_check_branch
    %855 = sbr.rel (0) target = $region25
  $region24: #{generator_forward.7} parent=0 // pred_region
    _
  $region25: #{generator_forward.7} parent=0 // pred_fallthru
    _
  // Predicated region
  $region26: #{generator_forward.7} parent=0 // pred_check
    _
  $region27: #{generator_forward.7} parent=0 // pred_check_branch
    %857 = sbr.rel (0) target = $region29
  $region28: #{generator_forward.7} parent=0 // pred_region
    _
  $region29: #{generator_forward.7} parent=0 // pred_fallthru
    _

// kernel: generator_forward.8
$region0: #{generator_forward.8}
  #allocation0 [shape = 'u32[]', space=smem, size = 0x4, offset = 0x4, fixed_abs, tag = 'smem constant byte address 0x4 - core index']
  #allocation1 [shape = 'u32[144,128]{1,0:T(1,128)}', space=vmem, size = 0x12000, scoped, tag = 'internal scratch']
  #allocation2 [shape = 'bf16[144,768]{1,0:T(8,128)(2,1)}', space=vmem, size = 0x36000, scoped, tag = 'scratch operand']
  #allocation3 [shape = 'f32[32,768]{1,0:T(8,128)}', space=vmem, size = 0x18000, scoped, tag = 'scratch operand']
  %s0 = inlined_call_operand.vmem [shape: bf16[16,896], index: 0, kind: input, shape index: {}]
  %s1 = inlined_call_operand.vmem [shape: bf16[32,144], index: 1, kind: input, shape index: {}]
  %s2 = inlined_call_operand.vmem [shape: f32[8,1], index: 2, kind: input, shape index: {}]
  %s3 = inlined_call_operand.vmem [shape: f32[8,1], index: 3, kind: input, shape index: {}]
  %s4 = inlined_call_operand.vmem [shape: f32[1,768], index: 4, kind: input, shape index: {}]
  %s5 = inlined_call_operand.vmem [shape: bf16[32,768], index: 5, kind: output, shape index: {}]
  %s6 = sld [smem:[#allocation0]]
  $region30: #{generator_forward.8} parent=0
    _
  %s8 = ssub.s32 1, %s6
  %s9 = scalar_select 0, %s8, %s6
  // Predicated region
  $region2: #{generator_forward.8} parent=0 // pred_check
    _
  $region3: #{generator_forward.8} parent=0 // pred_check_branch
    %11 = sbr.rel (0) target = $region5
  $region4: #{generator_forward.8} parent=0 // pred_region
    _
  $region5: #{generator_forward.8} parent=0 // pred_fallthru
    _
  // Predicated region
  $region6: #{generator_forward.8} parent=0 // pred_check
    _
  $region7: #{generator_forward.8} parent=0 // pred_check_branch
    %13 = sbr.rel (0) target = $region9
  $region8: #{generator_forward.8} parent=0 // pred_region
    _
  $region9: #{generator_forward.8} parent=0 // pred_fallthru
    _
  // Predicated region
  $region10: #{generator_forward.8} parent=0 // pred_check
    _
  $region11: #{generator_forward.8} parent=0 // pred_check_branch
    %15 = sbr.rel (0) target = $region13
  $region12: #{generator_forward.8} parent=0 // pred_region
    _
  $region13: #{generator_forward.8} parent=0 // pred_fallthru
    _
  // Predicated region
  $region14: #{generator_forward.8} parent=0 // pred_check
    _
  $region15: #{generator_forward.8} parent=0 // pred_check_branch
    %17 = sbr.rel (0) target = $region17
  $region16: #{generator_forward.8} parent=0 // pred_region
    _
  $region17: #{generator_forward.8} parent=0 // pred_fallthru
    _
  // Predicated region
  $region18: #{generator_forward.8} parent=0 // pred_check
    _
  $region19: #{generator_forward.8} parent=0 // pred_check_branch
    %19 = sbr.rel (0) target = $region21
  $region20: #{generator_forward.8} parent=0 // pred_region
    _
  $region21: #{generator_forward.8} parent=0 // pred_fallthru
    _
  %v21 = vld [vmem:[%s0] sm:$0xff]
  %v22 = vld [vmem:[%s0 + $0x8] sm:$0xff]
  %v23 = vld [vmem:[%s0 + $0x10] sm:$0xff]
  %v24 = vld [vmem:[%s0 + $0x1c] sm:$0xff]
  %v25 = vld [vmem:[%s0 + $0x24] sm:$0xff]
  %v26 = vld [vmem:[%s0 + $0x2c] sm:$0xff]
  %27 = vst [vmem:[#allocation2] sm:$0xff] %v21
  %28 = vst [vmem:[#allocation2 + $0x8] sm:$0xff] %v22
  %29 = vst [vmem:[#allocation2 + $0x10] sm:$0xff] %v23
  %30 = vst [vmem:[#allocation2 + $0x18] sm:$0xff] %v24
  %31 = vst [vmem:[#allocation2 + $0x20] sm:$0xff] %v25
  %32 = vst [vmem:[#allocation2 + $0x28] sm:$0xff] %v26
  %v33 = vld [vmem:[%s0] sm:$0xff]
  %v34 = vld [vmem:[%s0 + $0x8] sm:$0xff]
  %v35 = vld [vmem:[%s0 + $0x10] sm:$0xff]
  %v36 = vld [vmem:[%s0 + $0x18] sm:$0xf]
  %v37 = vld [vmem:[%s0 + $0x1c] sm:$0xff]
  %v38 = vld [vmem:[%s0 + $0x24] sm:$0xff]
  %v39 = vld [vmem:[%s0 + $0x2c] sm:$0xff]
  %v40 = vld [vmem:[%s0 + $0x34] sm:$0xf]
  %49 = vrot.lane.b32.xlu0 %v33, 127
  %v50 = vpop.permute.xlu0 %49
  %51 = vrot.lane.b32.xlu0 %v34, 127
  %v52 = vpop.permute.xlu0 %51
  %53 = vrot.lane.b32.xlu0 %v35, 127
  %v54 = vpop.permute.xlu0 %53
  %55 = vrot.lane.b32.xlu0 %v36, 127
  %v56 = vpop.permute.xlu0 %55
  %57 = vrot.lane.b32.xlu0 %v37, 127
  %v58 = vpop.permute.xlu0 %57
  %59 = vrot.lane.b32.xlu0 %v38, 127
  %v60 = vpop.permute.xlu0 %59
  %61 = vrot.lane.b32.xlu0 %v39, 127
  %v62 = vpop.permute.xlu0 %61
  %63 = vrot.lane.b32.xlu0 %v40, 127
  %v64 = vpop.permute.xlu0 %63
  %v65 = vrot.slane %v50, 4
  %v66 = vrot.slane %v52, 4
  %v67 = vrot.slane %v54, 4
  %v68 = vrot.slane %v56, 4
  %v69 = vrot.slane %v58, 4
  %v70 = vrot.slane %v60, 4
  %v71 = vrot.slane %v62, 4
  %v72 = vrot.slane %v64, 4
  %vm73 = vcmask 1043456
  %v74 = vsel %vm73, %v65, %v66
  %vm75 = vcmask 1039360
  %v76 = vsel %vm75, %v50, %v74
  %v77 = vsel %vm73, %v66, %v67
  %v78 = vsel %vm75, %v52, %v77
  %v79 = vsel %vm73, %v67, %v68
  %v80 = vsel %vm75, %v54, %v79
  %v81 = vsel %vm73, %v69, %v70
  %v82 = vsel %vm75, %v58, %v81
  %v83 = vsel %vm73, %v70, %v71
  %v84 = vsel %vm75, %v60, %v83
  %v85 = vsel %vm73, %v71, %v72
  %v86 = vsel %vm75, %v62, %v85
  %93 = vst [vmem:[#allocation2 + $0x30] sm:$0xff] %v76
  %94 = vst [vmem:[#allocation2 + $0x38] sm:$0xff] %v78
  %95 = vst [vmem:[#allocation2 + $0x40] sm:$0xff] %v80
  %96 = vst [vmem:[#allocation2 + $0x48] sm:$0xff] %v82
  %97 = vst [vmem:[#allocation2 + $0x50] sm:$0xff] %v84
  %98 = vst [vmem:[#allocation2 + $0x58] sm:$0xff] %v86
  %v99 = vld [vmem:[%s0] sm:$0xff]
  %v100 = vld [vmem:[%s0 + $0x8] sm:$0xff]
  %v101 = vld [vmem:[%s0 + $0x10] sm:$0xff]
  %v102 = vld [vmem:[%s0 + $0x18] sm:$0xf]
  %v103 = vld [vmem:[%s0 + $0x1c] sm:$0xff]
  %v104 = vld [vmem:[%s0 + $0x24] sm:$0xff]
  %v105 = vld [vmem:[%s0 + $0x2c] sm:$0xff]
  %v106 = vld [vmem:[%s0 + $0x34] sm:$0xf]
  %115 = vrot.lane.b32.xlu0 %v99, 126
  %v116 = vpop.permute.xlu0 %115
  %117 = vrot.lane.b32.xlu0 %v100, 126
  %v118 = vpop.permute.xlu0 %117
  %119 = vrot.lane.b32.xlu0 %v101, 126
  %v120 = vpop.permute.xlu0 %119
  %121 = vrot.lane.b32.xlu0 %v102, 126
  %v122 = vpop.permute.xlu0 %121
  %123 = vrot.lane.b32.xlu0 %v103, 126
  %v124 = vpop.permute.xlu0 %123
  %125 = vrot.lane.b32.xlu0 %v104, 126
  %v126 = vpop.permute.xlu0 %125
  %127 = vrot.lane.b32.xlu0 %v105, 126
  %v128 = vpop.permute.xlu0 %127
  %129 = vrot.lane.b32.xlu0 %v106, 126
  %v130 = vpop.permute.xlu0 %129
  %v131 = vrot.slane %v116, 4
  %v132 = vrot.slane %v118, 4
  %v133 = vrot.slane %v120, 4
  %v134 = vrot.slane %v122, 4
  %v135 = vrot.slane %v124, 4
  %v136 = vrot.slane %v126, 4
  %v137 = vrot.slane %v128, 4
  %v138 = vrot.slane %v130, 4
  %v139 = vsel %vm73, %v131, %v132
  %vm140 = vcmask 1031168
  %v141 = vsel %vm140, %v116, %v139
  %v142 = vsel %vm73, %v132, %v133
  %v143 = vsel %vm140, %v118, %v142
  %v144 = vsel %vm73, %v133, %v134
  %v145 = vsel %vm140, %v120, %v144
  %v146 = vsel %vm73, %v135, %v136
  %v147 = vsel %vm140, %v124, %v146
  %v148 = vsel %vm73, %v136, %v137
  %v149 = vsel %vm140, %v126, %v148
  %v150 = vsel %vm73, %v137, %v138
  %v151 = vsel %vm140, %v128, %v150
  %158 = vst [vmem:[#allocation2 + $0x60] sm:$0xff] %v141
  %159 = vst [vmem:[#allocation2 + $0x68] sm:$0xff] %v143
  %160 = vst [vmem:[#allocation2 + $0x70] sm:$0xff] %v145
  %161 = vst [vmem:[#allocation2 + $0x78] sm:$0xff] %v147
  %162 = vst [vmem:[#allocation2 + $0x80] sm:$0xff] %v149
  %163 = vst [vmem:[#allocation2 + $0x88] sm:$0xff] %v151
  %v164 = vld [vmem:[%s0] sm:$0xff]
  %v165 = vld [vmem:[%s0 + $0x8] sm:$0xff]
  %v166 = vld [vmem:[%s0 + $0x10] sm:$0xff]
  %v167 = vld [vmem:[%s0 + $0x18] sm:$0xf]
  %v168 = vld [vmem:[%s0 + $0x1c] sm:$0xff]
  %v169 = vld [vmem:[%s0 + $0x24] sm:$0xff]
  %v170 = vld [vmem:[%s0 + $0x2c] sm:$0xff]
  %v171 = vld [vmem:[%s0 + $0x34] sm:$0xf]
  %180 = vrot.lane.b32.xlu0 %v164, 110
  %v181 = vpop.permute.xlu0 %180
  %182 = vrot.lane.b32.xlu0 %v165, 110
  %v183 = vpop.permute.xlu0 %182
  %184 = vrot.lane.b32.xlu0 %v166, 110
  %v185 = vpop.permute.xlu0 %184
  %186 = vrot.lane.b32.xlu0 %v167, 110
  %v187 = vpop.permute.xlu0 %186
  %188 = vrot.lane.b32.xlu0 %v168, 110
  %v189 = vpop.permute.xlu0 %188
  %190 = vrot.lane.b32.xlu0 %v169, 110
  %v191 = vpop.permute.xlu0 %190
  %192 = vrot.lane.b32.xlu0 %v170, 110
  %v193 = vpop.permute.xlu0 %192
  %194 = vrot.lane.b32.xlu0 %v171, 110
  %v195 = vpop.permute.xlu0 %194
  %v196 = vrot.slane %v181, 4
  %v197 = vrot.slane %v183, 4
  %v198 = vrot.slane %v185, 4
  %v199 = vrot.slane %v187, 4
  %v200 = vrot.slane %v189, 4
  %v201 = vrot.slane %v191, 4
  %v202 = vrot.slane %v193, 4
  %v203 = vrot.slane %v195, 4
  %v204 = vsel %vm73, %v196, %v197
  %vm205 = vcmask 900096
  %v206 = vsel %vm205, %v181, %v204
  %v207 = vsel %vm73, %v197, %v198
  %v208 = vsel %vm205, %v183, %v207
  %v209 = vsel %vm73, %v198, %v199
  %v210 = vsel %vm205, %v185, %v209
  %v211 = vsel %vm73, %v200, %v201
  %v212 = vsel %vm205, %v189, %v211
  %v213 = vsel %vm73, %v201, %v202
  %v214 = vsel %vm205, %v191, %v213
  %v215 = vsel %vm73, %v202, %v203
  %v216 = vsel %vm205, %v193, %v215
  %223 = vst [vmem:[#allocation2 + $0x90] sm:$0xff] %v206
  %224 = vst [vmem:[#allocation2 + $0x98] sm:$0xff] %v208
  %225 = vst [vmem:[#allocation2 + $0xa0] sm:$0xff] %v210
  %226 = vst [vmem:[#allocation2 + $0xa8] sm:$0xff] %v212
  %227 = vst [vmem:[#allocation2 + $0xb0] sm:$0xff] %v214
  %228 = vst [vmem:[#allocation2 + $0xb8] sm:$0xff] %v216
  %v229 = vld [vmem:[%s0] sm:$0xff]
  %v230 = vld [vmem:[%s0 + $0x8] sm:$0xff]
  %v231 = vld [vmem:[%s0 + $0x10] sm:$0xff]
  %v232 = vld [vmem:[%s0 + $0x18] sm:$0xf]
  %v233 = vld [vmem:[%s0 + $0x1c] sm:$0xff]
  %v234 = vld [vmem:[%s0 + $0x24] sm:$0xff]
  %v235 = vld [vmem:[%s0 + $0x2c] sm:$0xff]
  %v236 = vld [vmem:[%s0 + $0x34] sm:$0xf]
  %245 = vrot.lane.b32.xlu0 %v229, 109
  %v246 = vpop.permute.xlu0 %245
  %247 = vrot.lane.b32.xlu0 %v230, 109
  %v248 = vpop.permute.xlu0 %247
  %249 = vrot.lane.b32.xlu0 %v231, 109
  %v250 = vpop.permute.xlu0 %249
  %251 = vrot.lane.b32.xlu0 %v232, 109
  %v252 = vpop.permute.xlu0 %251
  %253 = vrot.lane.b32.xlu0 %v233, 109
  %v254 = vpop.permute.xlu0 %253
  %255 = vrot.lane.b32.xlu0 %v234, 109
  %v256 = vpop.permute.xlu0 %255
  %257 = vrot.lane.b32.xlu0 %v235, 109
  %v258 = vpop.permute.xlu0 %257
  %259 = vrot.lane.b32.xlu0 %v236, 109
  %v260 = vpop.permute.xlu0 %259
  %v261 = vrot.slane %v246, 4
  %v262 = vrot.slane %v248, 4
  %v263 = vrot.slane %v250, 4
  %v264 = vrot.slane %v252, 4
  %v265 = vrot.slane %v254, 4
  %v266 = vrot.slane %v256, 4
  %v267 = vrot.slane %v258, 4
  %v268 = vrot.slane %v260, 4
  %v269 = vsel %vm73, %v261, %v262
  %vm270 = vcmask 891904
  %v271 = vsel %vm270, %v246, %v269
  %v272 = vsel %vm73, %v262, %v263
  %v273 = vsel %vm270, %v248, %v272
  %v274 = vsel %vm73, %v263, %v264
  %v275 = vsel %vm270, %v250, %v274
  %v276 = vsel %vm73, %v265, %v266
  %v277 = vsel %vm270, %v254, %v276
  %v278 = vsel %vm73, %v266, %v267
  %v279 = vsel %vm270, %v256, %v278
  %v280 = vsel %vm73, %v267, %v268
  %v281 = vsel %vm270, %v258, %v280
  %288 = vst [vmem:[#allocation2 + $0xc0] sm:$0xff] %v271
  %289 = vst [vmem:[#allocation2 + $0xc8] sm:$0xff] %v273
  %290 = vst [vmem:[#allocation2 + $0xd0] sm:$0xff] %v275
  %291 = vst [vmem:[#allocation2 + $0xd8] sm:$0xff] %v277
  %292 = vst [vmem:[#allocation2 + $0xe0] sm:$0xff] %v279
  %293 = vst [vmem:[#allocation2 + $0xe8] sm:$0xff] %v281
  %v294 = vld [vmem:[%s0] sm:$0xff]
  %v295 = vld [vmem:[%s0 + $0x8] sm:$0xff]
  %v296 = vld [vmem:[%s0 + $0x10] sm:$0xff]
  %v297 = vld [vmem:[%s0 + $0x18] sm:$0xf]
  %v298 = vld [vmem:[%s0 + $0x1c] sm:$0xff]
  %v299 = vld [vmem:[%s0 + $0x24] sm:$0xff]
  %v300 = vld [vmem:[%s0 + $0x2c] sm:$0xff]
  %v301 = vld [vmem:[%s0 + $0x34] sm:$0xf]
  %310 = vrot.lane.b32.xlu0 %v294, 108
  %v311 = vpop.permute.xlu0 %310
  %312 = vrot.lane.b32.xlu0 %v295, 108
  %v313 = vpop.permute.xlu0 %312
  %314 = vrot.lane.b32.xlu0 %v296, 108
  %v315 = vpop.permute.xlu0 %314
  %316 = vrot.lane.b32.xlu0 %v297, 108
  %v317 = vpop.permute.xlu0 %316
  %318 = vrot.lane.b32.xlu0 %v298, 108
  %v319 = vpop.permute.xlu0 %318
  %320 = vrot.lane.b32.xlu0 %v299, 108
  %v321 = vpop.permute.xlu0 %320
  %322 = vrot.lane.b32.xlu0 %v300, 108
  %v323 = vpop.permute.xlu0 %322
  %324 = vrot.lane.b32.xlu0 %v301, 108
  %v325 = vpop.permute.xlu0 %324
  %v326 = vrot.slane %v311, 4
  %v327 = vrot.slane %v313, 4
  %v328 = vrot.slane %v315, 4
  %v329 = vrot.slane %v317, 4
  %v330 = vrot.slane %v319, 4
  %v331 = vrot.slane %v321, 4
  %v332 = vrot.slane %v323, 4
  %v333 = vrot.slane %v325, 4
  %v334 = vsel %vm73, %v326, %v327
  %vm335 = vcmask 883712
  %v336 = vsel %vm335, %v311, %v334
  %v337 = vsel %vm73, %v327, %v328
  %v338 = vsel %vm335, %v313, %v337
  %v339 = vsel %vm73, %v328, %v329
  %v340 = vsel %vm335, %v315, %v339
  %v341 = vsel %vm73, %v330, %v331
  %v342 = vsel %vm335, %v319, %v341
  %v343 = vsel %vm73, %v331, %v332
  %v344 = vsel %vm335, %v321, %v343
  %v345 = vsel %vm73, %v332, %v333
  %v346 = vsel %vm335, %v323, %v345
  %353 = vst [vmem:[#allocation2 + $0xf0] sm:$0xff] %v336
  %354 = vst [vmem:[#allocation2 + $0xf8] sm:$0xff] %v338
  %355 = vst [vmem:[#allocation2 + $0x100] sm:$0xff] %v340
  %356 = vst [vmem:[#allocation2 + $0x108] sm:$0xff] %v342
  %357 = vst [vmem:[#allocation2 + $0x110] sm:$0xff] %v344
  %358 = vst [vmem:[#allocation2 + $0x118] sm:$0xff] %v346
  %v359 = vld [vmem:[%s0] sm:$0xff]
  %v360 = vld [vmem:[%s0 + $0x8] sm:$0xff]
  %v361 = vld [vmem:[%s0 + $0x10] sm:$0xff]
  %v362 = vld [vmem:[%s0 + $0x18] sm:$0xf]
  %v363 = vld [vmem:[%s0 + $0x1c] sm:$0xff]
  %v364 = vld [vmem:[%s0 + $0x24] sm:$0xff]
  %v365 = vld [vmem:[%s0 + $0x2c] sm:$0xff]
  %v366 = vld [vmem:[%s0 + $0x34] sm:$0xf]
  %375 = vrot.lane.b32.xlu0 %v359, 92
  %v376 = vpop.permute.xlu0 %375
  %377 = vrot.lane.b32.xlu0 %v360, 92
  %v378 = vpop.permute.xlu0 %377
  %379 = vrot.lane.b32.xlu0 %v361, 92
  %v380 = vpop.permute.xlu0 %379
  %381 = vrot.lane.b32.xlu0 %v362, 92
  %v382 = vpop.permute.xlu0 %381
  %383 = vrot.lane.b32.xlu0 %v363, 92
  %v384 = vpop.permute.xlu0 %383
  %385 = vrot.lane.b32.xlu0 %v364, 92
  %v386 = vpop.permute.xlu0 %385
  %387 = vrot.lane.b32.xlu0 %v365, 92
  %v388 = vpop.permute.xlu0 %387
  %389 = vrot.lane.b32.xlu0 %v366, 92
  %v390 = vpop.permute.xlu0 %389
  %v391 = vrot.slane %v376, 4
  %v392 = vrot.slane %v378, 4
  %v393 = vrot.slane %v380, 4
  %v394 = vrot.slane %v382, 4
  %v395 = vrot.slane %v384, 4
  %v396 = vrot.slane %v386, 4
  %v397 = vrot.slane %v388, 4
  %v398 = vrot.slane %v390, 4
  %v399 = vsel %vm73, %v391, %v392
  %vm400 = vcmask 752640
  %v401 = vsel %vm400, %v376, %v399
  %v402 = vsel %vm73, %v392, %v393
  %v403 = vsel %vm400, %v378, %v402
  %v404 = vsel %vm73, %v393, %v394
  %v405 = vsel %vm400, %v380, %v404
  %v406 = vsel %vm73, %v395, %v396
  %v407 = vsel %vm400, %v384, %v406
  %v408 = vsel %vm73, %v396, %v397
  %v409 = vsel %vm400, %v386, %v408
  %v410 = vsel %vm73, %v397, %v398
  %v411 = vsel %vm400, %v388, %v410
  %418 = vst [vmem:[#allocation2 + $0x120] sm:$0xff] %v401
  %419 = vst [vmem:[#allocation2 + $0x128] sm:$0xff] %v403
  %420 = vst [vmem:[#allocation2 + $0x130] sm:$0xff] %v405
  %421 = vst [vmem:[#allocation2 + $0x138] sm:$0xff] %v407
  %422 = vst [vmem:[#allocation2 + $0x140] sm:$0xff] %v409
  %423 = vst [vmem:[#allocation2 + $0x148] sm:$0xff] %v411
  %v424 = vld [vmem:[%s0] sm:$0xff]
  %v425 = vld [vmem:[%s0 + $0x8] sm:$0xff]
  %v426 = vld [vmem:[%s0 + $0x10] sm:$0xff]
  %v427 = vld [vmem:[%s0 + $0x18] sm:$0xf]
  %v428 = vld [vmem:[%s0 + $0x1c] sm:$0xff]
  %v429 = vld [vmem:[%s0 + $0x24] sm:$0xff]
  %v430 = vld [vmem:[%s0 + $0x2c] sm:$0xff]
  %v431 = vld [vmem:[%s0 + $0x34] sm:$0xf]
  %440 = vrot.lane.b32.xlu0 %v424, 91
  %v441 = vpop.permute.xlu0 %440
  %442 = vrot.lane.b32.xlu0 %v425, 91
  %v443 = vpop.permute.xlu0 %442
  %444 = vrot.lane.b32.xlu0 %v426, 91
  %v445 = vpop.permute.xlu0 %444
  %446 = vrot.lane.b32.xlu0 %v427, 91
  %v447 = vpop.permute.xlu0 %446
  %448 = vrot.lane.b32.xlu0 %v428, 91
  %v449 = vpop.permute.xlu0 %448
  %450 = vrot.lane.b32.xlu0 %v429, 91
  %v451 = vpop.permute.xlu0 %450
  %452 = vrot.lane.b32.xlu0 %v430, 91
  %v453 = vpop.permute.xlu0 %452
  %454 = vrot.lane.b32.xlu0 %v431, 91
  %v455 = vpop.permute.xlu0 %454
  %v456 = vrot.slane %v441, 4
  %v457 = vrot.slane %v443, 4
  %v458 = vrot.slane %v445, 4
  %v459 = vrot.slane %v447, 4
  %v460 = vrot.slane %v449, 4
  %v461 = vrot.slane %v451, 4
  %v462 = vrot.slane %v453, 4
  %v463 = vrot.slane %v455, 4
  %v464 = vsel %vm73, %v456, %v457
  %vm465 = vcmask 744448
  %v466 = vsel %vm465, %v441, %v464
  %v467 = vsel %vm73, %v457, %v458
  %v468 = vsel %vm465, %v443, %v467
  %v469 = vsel %vm73, %v458, %v459
  %v470 = vsel %vm465, %v445, %v469
  %v471 = vsel %vm73, %v460, %v461
  %v472 = vsel %vm465, %v449, %v471
  %v473 = vsel %vm73, %v461, %v462
  %v474 = vsel %vm465, %v451, %v473
  %v475 = vsel %vm73, %v462, %v463
  %v476 = vsel %vm465, %v453, %v475
  %483 = vst [vmem:[#allocation2 + $0x150] sm:$0xff] %v466
  %484 = vst [vmem:[#allocation2 + $0x158] sm:$0xff] %v468
  %485 = vst [vmem:[#allocation2 + $0x160] sm:$0xff] %v470
  %486 = vst [vmem:[#allocation2 + $0x168] sm:$0xff] %v472
  %487 = vst [vmem:[#allocation2 + $0x170] sm:$0xff] %v474
  %488 = vst [vmem:[#allocation2 + $0x178] sm:$0xff] %v476
  %v489 = vld [vmem:[%s0] sm:$0xff]
  %v490 = vld [vmem:[%s0 + $0x8] sm:$0xff]
  %v491 = vld [vmem:[%s0 + $0x10] sm:$0xff]
  %v492 = vld [vmem:[%s0 + $0x18] sm:$0xf]
  %v493 = vld [vmem:[%s0 + $0x1c] sm:$0xff]
  %v494 = vld [vmem:[%s0 + $0x24] sm:$0xff]
  %v495 = vld [vmem:[%s0 + $0x2c] sm:$0xff]
  %v496 = vld [vmem:[%s0 + $0x34] sm:$0xf]
  %505 = vrot.lane.b32.xlu0 %v489, 90
  %v506 = vpop.permute.xlu0 %505
  %507 = vrot.lane.b32.xlu0 %v490, 90
  %v508 = vpop.permute.xlu0 %507
  %509 = vrot.lane.b32.xlu0 %v491, 90
  %v510 = vpop.permute.xlu0 %509
  %511 = vrot.lane.b32.xlu0 %v492, 90
  %v512 = vpop.permute.xlu0 %511
  %513 = vrot.lane.b32.xlu0 %v493, 90
  %v514 = vpop.permute.xlu0 %513
  %515 = vrot.lane.b32.xlu0 %v494, 90
  %v516 = vpop.permute.xlu0 %515
  %517 = vrot.lane.b32.xlu0 %v495, 90
  %v518 = vpop.permute.xlu0 %517
  %519 = vrot.lane.b32.xlu0 %v496, 90
  %v520 = vpop.permute.xlu0 %519
  %v521 = vrot.slane %v506, 4
  %v522 = vrot.slane %v508, 4
  %v523 = vrot.slane %v510, 4
  %v524 = vrot.slane %v512, 4
  %v525 = vrot.slane %v514, 4
  %v526 = vrot.slane %v516, 4
  %v527 = vrot.slane %v518, 4
  %v528 = vrot.slane %v520, 4
  %v529 = vsel %vm73, %v521, %v522
  %vm530 = vcmask 736256
  %v531 = vsel %vm530, %v506, %v529
  %v532 = vsel %vm73, %v522, %v523
  %v533 = vsel %vm530, %v508, %v532
  %v534 = vsel %vm73, %v523, %v524
  %v535 = vsel %vm530, %v510, %v534
  %v536 = vsel %vm73, %v525, %v526
  %v537 = vsel %vm530, %v514, %v536
  %v538 = vsel %vm73, %v526, %v527
  %v539 = vsel %vm530, %v516, %v538
  %v540 = vsel %vm73, %v527, %v528
  %v541 = vsel %vm530, %v518, %v540
  %548 = vst [vmem:[#allocation2 + $0x180] sm:$0xff] %v531
  %549 = vst [vmem:[#allocation2 + $0x188] sm:$0xff] %v533
  %550 = vst [vmem:[#allocation2 + $0x190] sm:$0xff] %v535
  %551 = vst [vmem:[#allocation2 + $0x198] sm:$0xff] %v537
  %552 = vst [vmem:[#allocation2 + $0x1a0] sm:$0xff] %v539
  %553 = vst [vmem:[#allocation2 + $0x1a8] sm:$0xff] %v541
  %v554 = vld [vmem:[%s1] sm:$0xff]
  %v555 = vld [vmem:[%s1 + $0x8] sm:$0xff]
  %v556 = vld [vmem:[%s1 + $0x10] sm:$0xff]
  %v557 = vld [vmem:[%s1 + $0x18] sm:$0xff]
  %v558 = vld [vmem:[#allocation2] sm:$0xff]
  %v559 = vld [vmem:[#allocation2 + $0x8] sm:$0xff]
  %v560 = vld [vmem:[#allocation2 + $0x10] sm:$0xff]
  %v561 = vld [vmem:[#allocation2 + $0x18] sm:$0xff]
  %v562 = vld [vmem:[#allocation2 + $0x20] sm:$0xff]
  %v563 = vld [vmem:[#allocation2 + $0x28] sm:$0xff]
  %v564 = vld [vmem:[#allocation2 + $0x30] sm:$0xff]
  %v565 = vld [vmem:[#allocation2 + $0x38] sm:$0xff]
  %v566 = vld [vmem:[#allocation2 + $0x40] sm:$0xff]
  %v567 = vld [vmem:[#allocation2 + $0x48] sm:$0xff]
  %v568 = vld [vmem:[#allocation2 + $0x50] sm:$0xff]
  %v569 = vld [vmem:[#allocation2 + $0x58] sm:$0xff]
  %v570 = vld [vmem:[#allocation2 + $0x60] sm:$0xff]
  %v571 = vld [vmem:[#allocation2 + $0x68] sm:$0xff]
  %v572 = vld [vmem:[#allocation2 + $0x70] sm:$0xff]
  %v573 = vld [vmem:[#allocation2 + $0x78] sm:$0xff]
  %v574 = vld [vmem:[#allocation2 + $0x80] sm:$0xff]
  %v575 = vld [vmem:[#allocation2 + $0x88] sm:$0xff]
  %v576 = vld [vmem:[#allocation2 + $0x90] sm:$0xff]
  %v577 = vld [vmem:[#allocation2 + $0x98] sm:$0xff]
  %v578 = vld [vmem:[#allocation2 + $0xa0] sm:$0xff]
  %v579 = vld [vmem:[#allocation2 + $0xa8] sm:$0xff]
  %v580 = vld [vmem:[#allocation2 + $0xb0] sm:$0xff]
  %v581 = vld [vmem:[#allocation2 + $0xb8] sm:$0xff]
  %v582 = vld [vmem:[#allocation2 + $0xc0] sm:$0xff]
  %v583 = vld [vmem:[#allocation2 + $0xc8] sm:$0xff]
  %v584 = vld [vmem:[#allocation2 + $0xd0] sm:$0xff]
  %v585 = vld [vmem:[#allocation2 + $0xd8] sm:$0xff]
  %v586 = vld [vmem:[#allocation2 + $0xe0] sm:$0xff]
  %v587 = vld [vmem:[#allocation2 + $0xe8] sm:$0xff]
  %v588 = vld [vmem:[#allocation2 + $0xf0] sm:$0xff]
  %v589 = vld [vmem:[#allocation2 + $0xf8] sm:$0xff]
  %v590 = vld [vmem:[#allocation2 + $0x100] sm:$0xff]
  %v591 = vld [vmem:[#allocation2 + $0x108] sm:$0xff]
  %v592 = vld [vmem:[#allocation2 + $0x110] sm:$0xff]
  %v593 = vld [vmem:[#allocation2 + $0x118] sm:$0xff]
  %v594 = vld [vmem:[#allocation2 + $0x120] sm:$0xff]
  %v595 = vld [vmem:[#allocation2 + $0x128] sm:$0xff]
  %v596 = vld [vmem:[#allocation2 + $0x130] sm:$0xff]
  %v597 = vld [vmem:[#allocation2 + $0x138] sm:$0xff]
  %v598 = vld [vmem:[#allocation2 + $0x140] sm:$0xff]
  %v599 = vld [vmem:[#allocation2 + $0x148] sm:$0xff]
  %v600 = vld [vmem:[#allocation2 + $0x150] sm:$0xff]
  %v601 = vld [vmem:[#allocation2 + $0x158] sm:$0xff]
  %v602 = vld [vmem:[#allocation2 + $0x160] sm:$0xff]
  %v603 = vld [vmem:[#allocation2 + $0x168] sm:$0xff]
  %v604 = vld [vmem:[#allocation2 + $0x170] sm:$0xff]
  %v605 = vld [vmem:[#allocation2 + $0x178] sm:$0xff]
  %v606 = vld [vmem:[#allocation2 + $0x180] sm:$0xff]
  %v607 = vld [vmem:[#allocation2 + $0x188] sm:$0xff]
  %v608 = vld [vmem:[#allocation2 + $0x190] sm:$0xff]
  %v609 = vld [vmem:[#allocation2 + $0x198] sm:$0xff]
  %v610 = vld [vmem:[#allocation2 + $0x1a0] sm:$0xff]
  %v611 = vld [vmem:[#allocation2 + $0x1a8] sm:$0xff]
  %v616 = vunpack.c.l.b16 %v554
  %v617 = vunpack.c.h.b16 %v554
  %v618 = vunpack.c.l.b16 %v555
  %v619 = vunpack.c.h.b16 %v555
  %v620 = vunpack.c.l.b16 %v556
  %v621 = vunpack.c.h.b16 %v556
  %v622 = vunpack.c.l.b16 %v557
  %v623 = vunpack.c.h.b16 %v557
  %v624 = vpack.c.b16 %v618, %v616
  %v625 = vpack.c.b16 %v619, %v617
  %v626 = vpack.c.b16 %v622, %v620
  %v627 = vpack.c.b16 %v623, %v621
  %v684 = vunpack.c.l.b16 %v558
  %v685 = vunpack.c.h.b16 %v558
  %v686 = vunpack.c.l.b16 %v559
  %v687 = vunpack.c.h.b16 %v559
  %v688 = vunpack.c.l.b16 %v560
  %v689 = vunpack.c.h.b16 %v560
  %v690 = vunpack.c.l.b16 %v561
  %v691 = vunpack.c.h.b16 %v561
  %v692 = vunpack.c.l.b16 %v562
  %v693 = vunpack.c.h.b16 %v562
  %v694 = vunpack.c.l.b16 %v563
  %v695 = vunpack.c.h.b16 %v563
  %v696 = vunpack.c.l.b16 %v564
  %v697 = vunpack.c.h.b16 %v564
  %v698 = vunpack.c.l.b16 %v565
  %v699 = vunpack.c.h.b16 %v565
  %v700 = vunpack.c.l.b16 %v566
  %v701 = vunpack.c.h.b16 %v566
  %v702 = vunpack.c.l.b16 %v567
  %v703 = vunpack.c.h.b16 %v567
  %v704 = vunpack.c.l.b16 %v568
  %v705 = vunpack.c.h.b16 %v568
  %v706 = vunpack.c.l.b16 %v569
  %v707 = vunpack.c.h.b16 %v569
  %v708 = vunpack.c.l.b16 %v570
  %v709 = vunpack.c.h.b16 %v570
  %v710 = vunpack.c.l.b16 %v571
  %v711 = vunpack.c.h.b16 %v571
  %v712 = vunpack.c.l.b16 %v572
  %v713 = vunpack.c.h.b16 %v572
  %v714 = vunpack.c.l.b16 %v573
  %v715 = vunpack.c.h.b16 %v573
  %v716 = vunpack.c.l.b16 %v574
  %v717 = vunpack.c.h.b16 %v574
  %v718 = vunpack.c.l.b16 %v575
  %v719 = vunpack.c.h.b16 %v575
  %v720 = vunpack.c.l.b16 %v576
  %v721 = vunpack.c.h.b16 %v576
  %v722 = vunpack.c.l.b16 %v577
  %v723 = vunpack.c.h.b16 %v577
  %v724 = vunpack.c.l.b16 %v578
  %v725 = vunpack.c.h.b16 %v578
  %v726 = vunpack.c.l.b16 %v579
  %v727 = vunpack.c.h.b16 %v579
  %v728 = vunpack.c.l.b16 %v580
  %v729 = vunpack.c.h.b16 %v580
  %v730 = vunpack.c.l.b16 %v581
  %v731 = vunpack.c.h.b16 %v581
  %v732 = vunpack.c.l.b16 %v582
  %v733 = vunpack.c.h.b16 %v582
  %v734 = vunpack.c.l.b16 %v583
  %v735 = vunpack.c.h.b16 %v583
  %v736 = vunpack.c.l.b16 %v584
  %v737 = vunpack.c.h.b16 %v584
  %v738 = vunpack.c.l.b16 %v585
  %v739 = vunpack.c.h.b16 %v585
  %v740 = vunpack.c.l.b16 %v586
  %v741 = vunpack.c.h.b16 %v586
  %v742 = vunpack.c.l.b16 %v587
  %v743 = vunpack.c.h.b16 %v587
  %v744 = vunpack.c.l.b16 %v588
  %v745 = vunpack.c.h.b16 %v588
  %v746 = vunpack.c.l.b16 %v589
  %v747 = vunpack.c.h.b16 %v589
  %v748 = vunpack.c.l.b16 %v590
  %v749 = vunpack.c.h.b16 %v590
  %v750 = vunpack.c.l.b16 %v591
  %v751 = vunpack.c.h.b16 %v591
  %v752 = vunpack.c.l.b16 %v592
  %v753 = vunpack.c.h.b16 %v592
  %v754 = vunpack.c.l.b16 %v593
  %v755 = vunpack.c.h.b16 %v593
  %v756 = vunpack.c.l.b16 %v594
  %v757 = vunpack.c.h.b16 %v594
  %v758 = vunpack.c.l.b16 %v595
  %v759 = vunpack.c.h.b16 %v595
  %v760 = vunpack.c.l.b16 %v596
  %v761 = vunpack.c.h.b16 %v596
  %v762 = vunpack.c.l.b16 %v597
  %v763 = vunpack.c.h.b16 %v597
  %v764 = vunpack.c.l.b16 %v598
  %v765 = vunpack.c.h.b16 %v598
  %v766 = vunpack.c.l.b16 %v599
  %v767 = vunpack.c.h.b16 %v599
  %v768 = vunpack.c.l.b16 %v600
  %v769 = vunpack.c.h.b16 %v600
  %v770 = vunpack.c.l.b16 %v601
  %v771 = vunpack.c.h.b16 %v601
  %v772 = vunpack.c.l.b16 %v602
  %v773 = vunpack.c.h.b16 %v602
  %v774 = vunpack.c.l.b16 %v603
  %v775 = vunpack.c.h.b16 %v603
  %v776 = vunpack.c.l.b16 %v604
  %v777 = vunpack.c.h.b16 %v604
  %v778 = vunpack.c.l.b16 %v605
  %v779 = vunpack.c.h.b16 %v605
  %v780 = vunpack.c.l.b16 %v606
  %v781 = vunpack.c.h.b16 %v606
  %v782 = vunpack.c.l.b16 %v607
  %v783 = vunpack.c.h.b16 %v607
  %v784 = vunpack.c.l.b16 %v608
  %v785 = vunpack.c.h.b16 %v608
  %v786 = vunpack.c.l.b16 %v609
  %v787 = vunpack.c.h.b16 %v609
  %v788 = vunpack.c.l.b16 %v610
  %v789 = vunpack.c.h.b16 %v610
  %v790 = vunpack.c.l.b16 %v611
  %v791 = vunpack.c.h.b16 %v611
  %v792 = vpack.c.b16 %v690, %v684
  %v793 = vpack.c.b16 %v691, %v685
  %v794 = vpack.c.b16 %v692, %v686
  %v795 = vpack.c.b16 %v693, %v687
  %v796 = vpack.c.b16 %v694, %v688
  %v797 = vpack.c.b16 %v695, %v689
  %v798 = vpack.c.b16 %v702, %v696
  %v799 = vpack.c.b16 %v703, %v697
  %v800 = vpack.c.b16 %v704, %v698
  %v801 = vpack.c.b16 %v705, %v699
  %v802 = vpack.c.b16 %v706, %v700
  %v803 = vpack.c.b16 %v707, %v701
  %v804 = vpack.c.b16 %v714, %v708
  %v805 = vpack.c.b16 %v715, %v709
  %v806 = vpack.c.b16 %v716, %v710
  %v807 = vpack.c.b16 %v717, %v711
  %v808 = vpack.c.b16 %v718, %v712
  %v809 = vpack.c.b16 %v719, %v713
  %v810 = vpack.c.b16 %v726, %v720
  %v811 = vpack.c.b16 %v727, %v721
  %v812 = vpack.c.b16 %v728, %v722
  %v813 = vpack.c.b16 %v729, %v723
  %v814 = vpack.c.b16 %v730, %v724
  %v815 = vpack.c.b16 %v731, %v725
  %v816 = vpack.c.b16 %v738, %v732
  %v817 = vpack.c.b16 %v739, %v733
  %v818 = vpack.c.b16 %v740, %v734
  %v819 = vpack.c.b16 %v741, %v735
  %v820 = vpack.c.b16 %v742, %v736
  %v821 = vpack.c.b16 %v743, %v737
  %v822 = vpack.c.b16 %v750, %v744
  %v823 = vpack.c.b16 %v751, %v745
  %v824 = vpack.c.b16 %v752, %v746
  %v825 = vpack.c.b16 %v753, %v747
  %v826 = vpack.c.b16 %v754, %v748
  %v827 = vpack.c.b16 %v755, %v749
  %v828 = vpack.c.b16 %v762, %v756
  %v829 = vpack.c.b16 %v763, %v757
  %v830 = vpack.c.b16 %v764, %v758
  %v831 = vpack.c.b16 %v765, %v759
  %v832 = vpack.c.b16 %v766, %v760
  %v833 = vpack.c.b16 %v767, %v761
  %v834 = vpack.c.b16 %v774, %v768
  %v835 = vpack.c.b16 %v775, %v769
  %v836 = vpack.c.b16 %v776, %v770
  %v837 = vpack.c.b16 %v777, %v771
  %v838 = vpack.c.b16 %v778, %v772
  %v839 = vpack.c.b16 %v779, %v773
  %v840 = vpack.c.b16 %v786, %v780
  %v841 = vpack.c.b16 %v787, %v781
  %v842 = vpack.c.b16 %v788, %v782
  %v843 = vpack.c.b16 %v789, %v783
  %v844 = vpack.c.b16 %v790, %v784
  %v845 = vpack.c.b16 %v791, %v785
  %vm900 = vcmask 130048
  %v902 = vsel %vm900, %v625, 0
  %v905 = vsel %vm900, %v627, 0
  %907 = vmatprep.subr.bf16.mxu0 %v835
  %908 = vmatpush1.bf16.msra.mxu0 %v834
  %909 = vmatprep.subr.bf16.mxu0 %v829
  %910 = vmatpush1.bf16.msra.mxu0 %v828
  %911 = vmatprep.subr.bf16.mxu0 %v823
  %912 = vmatpush1.bf16.msra.mxu0 %v822
  %913 = vmatprep.subr.bf16.mxu0 %v817
  %914 = vmatpush1.bf16.msra.mxu0 %v816
  %915 = vmatprep.subr.bf16.mxu0 %v811
  %916 = vmatpush1.bf16.msra.mxu0 %v810
  %917 = vmatprep.subr.bf16.mxu0 %v805
  %918 = vmatpush1.bf16.msra.mxu0 %v804
  %919 = vmatprep.subr.bf16.mxu0 %v799
  %920 = vmatpush1.bf16.msra.mxu0 %v798
  %921 = vmatprep.subr.bf16.mxu0 %v793
  %922 = vmatpush1.bf16.msra.mxu0 %v792
  %923 = vmatprep.subr.bf16.mxu0 0
  %924 = vmatpush2.bf16.msra.mxu0 0
  %925 = vmatprep.subr.bf16.mxu0 0
  %926 = vmatpush2.bf16.msra.mxu0 0
  %927 = vmatprep.subr.bf16.mxu0 0
  %928 = vmatpush2.bf16.msra.mxu0 0
  %929 = vmatprep.subr.bf16.mxu0 0
  %930 = vmatpush2.bf16.msra.mxu0 0
  %931 = vmatprep.subr.bf16.mxu0 0
  %932 = vmatpush2.bf16.msra.mxu0 0
  %933 = vmatprep.subr.bf16.mxu0 0
  %934 = vmatpush2.bf16.msra.mxu0 0
  %935 = vmatprep.subr.bf16.mxu0 0
  %936 = vmatpush2.bf16.msra.mxu0 0
  %937 = vmatprep.subr.bf16.mxu0 %v841
  %938 = vmatpush2.bf16.msra.mxu0 %v840
  %939 = vmatprep.mubr.bf16.mxu0 %v902
  %940 = vmatmul.mubr.bf16.gmra.mxu0 %v624
  %v941 = vpop.f32.mrf.mxu0
  %v942 = vadd.f32 0.0, %v941
  %v943 = vpop.f32.mrf.mxu0
  %v944 = vadd.f32 0.0, %v943
  %v945 = vpop.f32.mrf.mxu0
  %v946 = vadd.f32 0.0, %v945
  %v947 = vpop.f32.mrf.mxu0
  %v948 = vadd.f32 0.0, %v947
  %949 = vmatprep.mubr.bf16.mxu0 %v905
  %950 = vmatmul.mubr.bf16.gmra.mxu0 %v626
  %v951 = vpop.f32.mrf.mxu0
  %v952 = vadd.f32 0.0, %v951
  %v953 = vpop.f32.mrf.mxu0
  %v954 = vadd.f32 0.0, %v953
  %v955 = vpop.f32.mrf.mxu0
  %v956 = vadd.f32 0.0, %v955
  %v957 = vpop.f32.mrf.mxu0
  %v958 = vadd.f32 0.0, %v957
  %959 = vdwg.mxu0
  %960 = vmatprep.subr.bf16.mxu0 %v837
  %961 = vmatpush1.bf16.msra.mxu0 %v836
  %962 = vmatprep.subr.bf16.mxu0 %v831
  %963 = vmatpush1.bf16.msra.mxu0 %v830
  %964 = vmatprep.subr.bf16.mxu0 %v825
  %965 = vmatpush1.bf16.msra.mxu0 %v824
  %966 = vmatprep.subr.bf16.mxu0 %v819
  %967 = vmatpush1.bf16.msra.mxu0 %v818
  %968 = vmatprep.subr.bf16.mxu0 %v813
  %969 = vmatpush1.bf16.msra.mxu0 %v812
  %970 = vmatprep.subr.bf16.mxu0 %v807
  %971 = vmatpush1.bf16.msra.mxu0 %v806
  %972 = vmatprep.subr.bf16.mxu0 %v801
  %973 = vmatpush1.bf16.msra.mxu0 %v800
  %974 = vmatprep.subr.bf16.mxu0 %v795
  %975 = vmatpush1.bf16.msra.mxu0 %v794
  %976 = vmatprep.subr.bf16.mxu0 0
  %977 = vmatpush2.bf16.msra.mxu0 0
  %978 = vmatprep.subr.bf16.mxu0 0
  %979 = vmatpush2.bf16.msra.mxu0 0
  %980 = vmatprep.subr.bf16.mxu0 0
  %981 = vmatpush2.bf16.msra.mxu0 0
  %982 = vmatprep.subr.bf16.mxu0 0
  %983 = vmatpush2.bf16.msra.mxu0 0
  %984 = vmatprep.subr.bf16.mxu0 0
  %985 = vmatpush2.bf16.msra.mxu0 0
  %986 = vmatprep.subr.bf16.mxu0 0
  %987 = vmatpush2.bf16.msra.mxu0 0
  %988 = vmatprep.subr.bf16.mxu0 0
  %989 = vmatpush2.bf16.msra.mxu0 0
  %990 = vmatprep.subr.bf16.mxu0 %v843
  %991 = vmatpush2.bf16.msra.mxu0 %v842
  %992 = vmatprep.mubr.bf16.mxu0 %v902
  %993 = vmatmul.mubr.bf16.gmra.mxu0 %v624
  %v994 = vpop.f32.mrf.mxu0
  %v995 = vadd.f32 0.0, %v994
  %v996 = vpop.f32.mrf.mxu0
  %v997 = vadd.f32 0.0, %v996
  %v998 = vpop.f32.mrf.mxu0
  %v999 = vadd.f32 0.0, %v998
  %v1000 = vpop.f32.mrf.mxu0
  %v1001 = vadd.f32 0.0, %v1000
  %1002 = vmatprep.mubr.bf16.mxu0 %v905
  %1003 = vmatmul.mubr.bf16.gmra.mxu0 %v626
  %v1004 = vpop.f32.mrf.mxu0
  %v1005 = vadd.f32 0.0, %v1004
  %v1006 = vpop.f32.mrf.mxu0
  %v1007 = vadd.f32 0.0, %v1006
  %v1008 = vpop.f32.mrf.mxu0
  %v1009 = vadd.f32 0.0, %v1008
  %v1010 = vpop.f32.mrf.mxu0
  %v1011 = vadd.f32 0.0, %v1010
  %1012 = vdwg.mxu0
  %1013 = vmatprep.subr.bf16.mxu0 %v839
  %1014 = vmatpush1.bf16.msra.mxu0 %v838
  %1015 = vmatprep.subr.bf16.mxu0 %v833
  %1016 = vmatpush1.bf16.msra.mxu0 %v832
  %1017 = vmatprep.subr.bf16.mxu0 %v827
  %1018 = vmatpush1.bf16.msra.mxu0 %v826
  %1019 = vmatprep.subr.bf16.mxu0 %v821
  %1020 = vmatpush1.bf16.msra.mxu0 %v820
  %1021 = vmatprep.subr.bf16.mxu0 %v815
  %1022 = vmatpush1.bf16.msra.mxu0 %v814
  %1023 = vmatprep.subr.bf16.mxu0 %v809
  %1024 = vmatpush1.bf16.msra.mxu0 %v808
  %1025 = vmatprep.subr.bf16.mxu0 %v803
  %1026 = vmatpush1.bf16.msra.mxu0 %v802
  %1027 = vmatprep.subr.bf16.mxu0 %v797
  %1028 = vmatpush1.bf16.msra.mxu0 %v796
  %1029 = vmatprep.subr.bf16.mxu0 0
  %1030 = vmatpush2.bf16.msra.mxu0 0
  %1031 = vmatprep.subr.bf16.mxu0 0
  %1032 = vmatpush2.bf16.msra.mxu0 0
  %1033 = vmatprep.subr.bf16.mxu0 0
  %1034 = vmatpush2.bf16.msra.mxu0 0
  %1035 = vmatprep.subr.bf16.mxu0 0
  %1036 = vmatpush2.bf16.msra.mxu0 0
  %1037 = vmatprep.subr.bf16.mxu0 0
  %1038 = vmatpush2.bf16.msra.mxu0 0
  %1039 = vmatprep.subr.bf16.mxu0 0
  %1040 = vmatpush2.bf16.msra.mxu0 0
  %1041 = vmatprep.subr.bf16.mxu0 0
  %1042 = vmatpush2.bf16.msra.mxu0 0
  %1043 = vmatprep.subr.bf16.mxu0 %v845
  %1044 = vmatpush2.bf16.msra.mxu0 %v844
  %1045 = vmatprep.mubr.bf16.mxu0 %v902
  %1046 = vmatmul.mubr.bf16.gmra.mxu0 %v624
  %v1047 = vpop.f32.mrf.mxu0
  %v1048 = vadd.f32 0.0, %v1047
  %v1049 = vpop.f32.mrf.mxu0
  %v1050 = vadd.f32 0.0, %v1049
  %v1051 = vpop.f32.mrf.mxu0
  %v1052 = vadd.f32 0.0, %v1051
  %v1053 = vpop.f32.mrf.mxu0
  %v1054 = vadd.f32 0.0, %v1053
  %1055 = vmatprep.mubr.bf16.mxu0 %v905
  %1056 = vmatmul.mubr.bf16.gmra.mxu0 %v626
  %v1057 = vpop.f32.mrf.mxu0
  %v1058 = vadd.f32 0.0, %v1057
  %v1059 = vpop.f32.mrf.mxu0
  %v1060 = vadd.f32 0.0, %v1059
  %v1061 = vpop.f32.mrf.mxu0
  %v1062 = vadd.f32 0.0, %v1061
  %v1063 = vpop.f32.mrf.mxu0
  %v1064 = vadd.f32 0.0, %v1063
  %1065 = vdwg.mxu0
  %1066 = vst [vmem:[#allocation3] sm:$0xff] %v942
  %1067 = vst [vmem:[#allocation3 + $0x8] sm:$0xff] %v944
  %1068 = vst [vmem:[#allocation3 + $0x10] sm:$0xff] %v995
  %1069 = vst [vmem:[#allocation3 + $0x18] sm:$0xff] %v997
  %1070 = vst [vmem:[#allocation3 + $0x20] sm:$0xff] %v1048
  %1071 = vst [vmem:[#allocation3 + $0x28] sm:$0xff] %v1050
  %1072 = vst [vmem:[#allocation3 + $0x30] sm:$0xff] %v946
  %1073 = vst [vmem:[#allocation3 + $0x38] sm:$0xff] %v948
  %1074 = vst [vmem:[#allocation3 + $0x40] sm:$0xff] %v999
  %1075 = vst [vmem:[#allocation3 + $0x48] sm:$0xff] %v1001
  %1076 = vst [vmem:[#allocation3 + $0x50] sm:$0xff] %v1052
  %1077 = vst [vmem:[#allocation3 + $0x58] sm:$0xff] %v1054
  %1078 = vst [vmem:[#allocation3 + $0x60] sm:$0xff] %v952
  %1079 = vst [vmem:[#allocation3 + $0x68] sm:$0xff] %v954
  %1080 = vst [vmem:[#allocation3 + $0x70] sm:$0xff] %v1005
  %1081 = vst [vmem:[#allocation3 + $0x78] sm:$0xff] %v1007
  %1082 = vst [vmem:[#allocation3 + $0x80] sm:$0xff] %v1058
  %1083 = vst [vmem:[#allocation3 + $0x88] sm:$0xff] %v1060
  %1084 = vst [vmem:[#allocation3 + $0x90] sm:$0xff] %v956
  %1085 = vst [vmem:[#allocation3 + $0x98] sm:$0xff] %v958
  %1086 = vst [vmem:[#allocation3 + $0xa0] sm:$0xff] %v1009
  %1087 = vst [vmem:[#allocation3 + $0xa8] sm:$0xff] %v1011
  %1088 = vst [vmem:[#allocation3 + $0xb0] sm:$0xff] %v1062
  %1089 = vst [vmem:[#allocation3 + $0xb8] sm:$0xff] %v1064
  %v1090 = vld [vmem:[%s4] sm:$0x3f]
  %v1091 = vld [vmem:[#allocation3] sm:$0xff]
  %v1092 = vld [vmem:[#allocation3 + $0x8] sm:$0xff]
  %v1093 = vld [vmem:[#allocation3 + $0x10] sm:$0xff]
  %v1094 = vld [vmem:[#allocation3 + $0x18] sm:$0xff]
  %v1095 = vld [vmem:[#allocation3 + $0x20] sm:$0xff]
  %v1096 = vld [vmem:[#allocation3 + $0x28] sm:$0xff]
  %v1098 = vlaneseq
  %v1099 = vshrl.u32 %v1098, 7
  %v1100 = vsub.s32 0, %v1099
  %v1101 = vrot.slane %v1090, %v1100
  %v1102 = vlaneseq
  %v1103 = vshrl.u32 %v1102, 7
  %v1104 = vsub.s32 1, %v1103
  %v1105 = vrot.slane %v1090, %v1104
  %v1106 = vlaneseq
  %v1107 = vshrl.u32 %v1106, 7
  %v1108 = vsub.s32 2, %v1107
  %v1109 = vrot.slane %v1090, %v1108
  %v1110 = vlaneseq
  %v1111 = vshrl.u32 %v1110, 7
  %v1112 = vsub.s32 3, %v1111
  %v1113 = vrot.slane %v1090, %v1112
  %v1114 = vlaneseq
  %v1115 = vshrl.u32 %v1114, 7
  %v1116 = vsub.s32 4, %v1115
  %v1117 = vrot.slane %v1090, %v1116
  %v1118 = vlaneseq
  %v1119 = vshrl.u32 %v1118, 7
  %v1120 = vsub.s32 5, %v1119
  %v1121 = vrot.slane %v1090, %v1120
  %v1128 = vmul.f32 %v1091, %v1101
  %v1129 = vmul.f32 %v1092, %v1105
  %v1130 = vmul.f32 %v1093, %v1109
  %v1131 = vmul.f32 %v1094, %v1113
  %v1132 = vmul.f32 %v1095, %v1117
  %v1133 = vmul.f32 %v1096, %v1121
  %v1134 = vadd.f32 %v1128, %v1129
  %v1135 = vadd.f32 %v1134, %v1130
  %v1136 = vadd.f32 %v1135, %v1131
  %v1137 = vadd.f32 %v1136, %v1132
  %v1138 = vadd.f32 %v1137, %v1133
  %1139 = vadd.xlane.f32.xlu0 %v1138
  %v1140 = vpop.xlane.xlu0 %1139
  %v1141 = vadd.f32 %v1140, 0.0
  %v1142 = vld [vmem:[#allocation3 + $0x30] sm:$0xff]
  %v1143 = vld [vmem:[#allocation3 + $0x38] sm:$0xff]
  %v1144 = vld [vmem:[#allocation3 + $0x40] sm:$0xff]
  %v1145 = vld [vmem:[#allocation3 + $0x48] sm:$0xff]
  %v1146 = vld [vmem:[#allocation3 + $0x50] sm:$0xff]
  %v1147 = vld [vmem:[#allocation3 + $0x58] sm:$0xff]
  %v1148 = vmul.f32 %v1142, %v1101
  %v1149 = vmul.f32 %v1143, %v1105
  %v1150 = vmul.f32 %v1144, %v1109
  %v1151 = vmul.f32 %v1145, %v1113
  %v1152 = vmul.f32 %v1146, %v1117
  %v1153 = vmul.f32 %v1147, %v1121
  %v1154 = vadd.f32 %v1148, %v1149
  %v1155 = vadd.f32 %v1154, %v1150
  %v1156 = vadd.f32 %v1155, %v1151
  %v1157 = vadd.f32 %v1156, %v1152
  %v1158 = vadd.f32 %v1157, %v1153
  %1159 = vadd.xlane.f32.xlu0 %v1158
  %v1160 = vpop.xlane.xlu0 %1159
  %v1161 = vadd.f32 %v1141, %v1160
  %v1162 = vld [vmem:[#allocation3 + $0x60] sm:$0xff]
  %v1163 = vld [vmem:[#allocation3 + $0x68] sm:$0xff]
  %v1164 = vld [vmem:[#allocation3 + $0x70] sm:$0xff]
  %v1165 = vld [vmem:[#allocation3 + $0x78] sm:$0xff]
  %v1166 = vld [vmem:[#allocation3 + $0x80] sm:$0xff]
  %v1167 = vld [vmem:[#allocation3 + $0x88] sm:$0xff]
  %v1168 = vmul.f32 %v1162, %v1101
  %v1169 = vmul.f32 %v1163, %v1105
  %v1170 = vmul.f32 %v1164, %v1109
  %v1171 = vmul.f32 %v1165, %v1113
  %v1172 = vmul.f32 %v1166, %v1117
  %v1173 = vmul.f32 %v1167, %v1121
  %v1174 = vadd.f32 %v1168, %v1169
  %v1175 = vadd.f32 %v1174, %v1170
  %v1176 = vadd.f32 %v1175, %v1171
  %v1177 = vadd.f32 %v1176, %v1172
  %v1178 = vadd.f32 %v1177, %v1173
  %1179 = vadd.xlane.f32.xlu0 %v1178
  %v1180 = vpop.xlane.xlu0 %1179
  %v1181 = vadd.f32 %v1161, %v1180
  %v1182 = vld [vmem:[#allocation3 + $0x90] sm:$0xff]
  %v1183 = vld [vmem:[#allocation3 + $0x98] sm:$0xff]
  %v1184 = vld [vmem:[#allocation3 + $0xa0] sm:$0xff]
  %v1185 = vld [vmem:[#allocation3 + $0xa8] sm:$0xff]
  %v1186 = vld [vmem:[#allocation3 + $0xb0] sm:$0xff]
  %v1187 = vld [vmem:[#allocation3 + $0xb8] sm:$0xff]
  %v1188 = vmul.f32 %v1182, %v1101
  %v1189 = vmul.f32 %v1183, %v1105
  %v1190 = vmul.f32 %v1184, %v1109
  %v1191 = vmul.f32 %v1185, %v1113
  %v1192 = vmul.f32 %v1186, %v1117
  %v1193 = vmul.f32 %v1187, %v1121
  %v1194 = vadd.f32 %v1188, %v1189
  %v1195 = vadd.f32 %v1194, %v1190
  %v1196 = vadd.f32 %v1195, %v1191
  %v1197 = vadd.f32 %v1196, %v1192
  %v1198 = vadd.f32 %v1197, %v1193
  %1199 = vadd.xlane.f32.xlu0 %v1198
  %v1200 = vpop.xlane.xlu0 %1199
  %v1201 = vadd.f32 %v1181, %v1200
  %v1202 = vmul.f32 %v1201, 0.00048828125
  %v1203 = vsub.f32 %v1091, %v1202
  %v1204 = vsub.f32 %v1092, %v1202
  %v1205 = vsub.f32 %v1093, %v1202
  %v1206 = vsub.f32 %v1094, %v1202
  %v1207 = vsub.f32 %v1095, %v1202
  %v1208 = vsub.f32 %v1096, %v1202
  %v1209 = vmul.f32 %v1203, %v1101
  %v1210 = vmul.f32 %v1204, %v1105
  %v1211 = vmul.f32 %v1205, %v1109
  %v1212 = vmul.f32 %v1206, %v1113
  %v1213 = vmul.f32 %v1207, %v1117
  %v1214 = vmul.f32 %v1208, %v1121
  %v1215 = vmul.f32 %v1209, %v1209
  %v1216 = vmul.f32 %v1210, %v1210
  %v1217 = vmul.f32 %v1211, %v1211
  %v1218 = vmul.f32 %v1212, %v1212
  %v1219 = vmul.f32 %v1213, %v1213
  %v1220 = vmul.f32 %v1214, %v1214
  %v1221 = vadd.f32 %v1215, %v1216
  %v1222 = vadd.f32 %v1221, %v1217
  %v1223 = vadd.f32 %v1222, %v1218
  %v1224 = vadd.f32 %v1223, %v1219
  %v1225 = vadd.f32 %v1224, %v1220
  %1226 = vadd.xlane.f32.xlu0 %v1225
  %v1227 = vpop.xlane.xlu0 %1226
  %v1228 = vadd.f32 %v1227, 0.0
  %v1229 = vsub.f32 %v1142, %v1202
  %v1230 = vsub.f32 %v1143, %v1202
  %v1231 = vsub.f32 %v1144, %v1202
  %v1232 = vsub.f32 %v1145, %v1202
  %v1233 = vsub.f32 %v1146, %v1202
  %v1234 = vsub.f32 %v1147, %v1202
  %v1235 = vmul.f32 %v1229, %v1101
  %v1236 = vmul.f32 %v1230, %v1105
  %v1237 = vmul.f32 %v1231, %v1109
  %v1238 = vmul.f32 %v1232, %v1113
  %v1239 = vmul.f32 %v1233, %v1117
  %v1240 = vmul.f32 %v1234, %v1121
  %v1241 = vmul.f32 %v1235, %v1235
  %v1242 = vmul.f32 %v1236, %v1236
  %v1243 = vmul.f32 %v1237, %v1237
  %v1244 = vmul.f32 %v1238, %v1238
  %v1245 = vmul.f32 %v1239, %v1239
  %v1246 = vmul.f32 %v1240, %v1240
  %v1247 = vadd.f32 %v1241, %v1242
  %v1248 = vadd.f32 %v1247, %v1243
  %v1249 = vadd.f32 %v1248, %v1244
  %v1250 = vadd.f32 %v1249, %v1245
  %v1251 = vadd.f32 %v1250, %v1246
  %1252 = vadd.xlane.f32.xlu0 %v1251
  %v1253 = vpop.xlane.xlu0 %1252
  %v1254 = vadd.f32 %v1228, %v1253
  %v1255 = vsub.f32 %v1162, %v1202
  %v1256 = vsub.f32 %v1163, %v1202
  %v1257 = vsub.f32 %v1164, %v1202
  %v1258 = vsub.f32 %v1165, %v1202
  %v1259 = vsub.f32 %v1166, %v1202
  %v1260 = vsub.f32 %v1167, %v1202
  %v1261 = vmul.f32 %v1255, %v1101
  %v1262 = vmul.f32 %v1256, %v1105
  %v1263 = vmul.f32 %v1257, %v1109
  %v1264 = vmul.f32 %v1258, %v1113
  %v1265 = vmul.f32 %v1259, %v1117
  %v1266 = vmul.f32 %v1260, %v1121
  %v1267 = vmul.f32 %v1261, %v1261
  %v1268 = vmul.f32 %v1262, %v1262
  %v1269 = vmul.f32 %v1263, %v1263
  %v1270 = vmul.f32 %v1264, %v1264
  %v1271 = vmul.f32 %v1265, %v1265
  %v1272 = vmul.f32 %v1266, %v1266
  %v1273 = vadd.f32 %v1267, %v1268
  %v1274 = vadd.f32 %v1273, %v1269
  %v1275 = vadd.f32 %v1274, %v1270
  %v1276 = vadd.f32 %v1275, %v1271
  %v1277 = vadd.f32 %v1276, %v1272
  %1278 = vadd.xlane.f32.xlu0 %v1277
  %v1279 = vpop.xlane.xlu0 %1278
  %v1280 = vadd.f32 %v1254, %v1279
  %v1281 = vsub.f32 %v1182, %v1202
  %v1282 = vsub.f32 %v1183, %v1202
  %v1283 = vsub.f32 %v1184, %v1202
  %v1284 = vsub.f32 %v1185, %v1202
  %v1285 = vsub.f32 %v1186, %v1202
  %v1286 = vsub.f32 %v1187, %v1202
  %v1287 = vmul.f32 %v1281, %v1101
  %v1288 = vmul.f32 %v1282, %v1105
  %v1289 = vmul.f32 %v1283, %v1109
  %v1290 = vmul.f32 %v1284, %v1113
  %v1291 = vmul.f32 %v1285, %v1117
  %v1292 = vmul.f32 %v1286, %v1121
  %v1293 = vmul.f32 %v1287, %v1287
  %v1294 = vmul.f32 %v1288, %v1288
  %v1295 = vmul.f32 %v1289, %v1289
  %v1296 = vmul.f32 %v1290, %v1290
  %v1297 = vmul.f32 %v1291, %v1291
  %v1298 = vmul.f32 %v1292, %v1292
  %v1299 = vadd.f32 %v1293, %v1294
  %v1300 = vadd.f32 %v1299, %v1295
  %v1301 = vadd.f32 %v1300, %v1296
  %v1302 = vadd.f32 %v1301, %v1297
  %v1303 = vadd.f32 %v1302, %v1298
  %1304 = vadd.xlane.f32.xlu0 %v1303
  %v1305 = vpop.xlane.xlu0 %1304
  %v1306 = vadd.f32 %v1280, %v1305
  %v1307 = vmul.f32 %v1306, 0.00048828125
  %v1308 = vld [vmem:[%s2] sm:$0xff]
  %v1309 = vadd.f32 %v1307, 1e-05
  %v1310 = vrsqrt.pop %v1309
  %v1311 = vmul.f32 %v1308, %v1310
  %v1312 = vld [vmem:[%s3] sm:$0xff]
  %v1313 = vmul.f32 %v1202, %v1311
  %v1314 = vsub.f32 %v1312, %v1313
  %1316 = vset.pattern.permute.xlu0 0
  %1317 = vperm.xlu0 %1316, %v1311
  %v1318 = vpop.permute.xlu0 %1317
  %v1320 = vmul.f32 %v1091, %v1318
  %v1321 = vmul.f32 %v1092, %v1318
  %v1322 = vmul.f32 %v1093, %v1318
  %v1323 = vmul.f32 %v1094, %v1318
  %v1324 = vmul.f32 %v1095, %v1318
  %v1325 = vmul.f32 %v1096, %v1318
  %1327 = vset.pattern.permute.xlu0 0
  %1328 = vperm.xlu0 %1327, %v1314
  %v1329 = vpop.permute.xlu0 %1328
  %v1331 = vadd.f32 %v1320, %v1329
  %v1332 = vadd.f32 %v1321, %v1329
  %v1333 = vadd.f32 %v1322, %v1329
  %v1334 = vadd.f32 %v1323, %v1329
  %v1335 = vadd.f32 %v1324, %v1329
  %v1336 = vadd.f32 %v1325, %v1329
  %vm1337 = vcmp.gt.f32.partialorder %v1331, 0.0
  %vm1338 = vcmp.gt.f32.partialorder %v1332, 0.0
  %vm1339 = vcmp.gt.f32.partialorder %v1333, 0.0
  %vm1340 = vcmp.gt.f32.partialorder %v1334, 0.0
  %vm1341 = vcmp.gt.f32.partialorder %v1335, 0.0
  %vm1342 = vcmp.gt.f32.partialorder %v1336, 0.0
  %v1343 = vmul.f32 %v1331, 0.2
  %v1344 = vmul.f32 %v1332, 0.2
  %v1345 = vmul.f32 %v1333, 0.2
  %v1346 = vmul.f32 %v1334, 0.2
  %v1347 = vmul.f32 %v1335, 0.2
  %v1348 = vmul.f32 %v1336, 0.2
  %v1349 = vsel %vm1337, %v1331, %v1343
  %v1350 = vsel %vm1338, %v1332, %v1344
  %v1351 = vsel %vm1339, %v1333, %v1345
  %v1352 = vsel %vm1340, %v1334, %v1346
  %v1353 = vsel %vm1341, %v1335, %v1347
  %v1354 = vsel %vm1342, %v1336, %v1348
  %v1355 = vpack.c.bf16 %v1349, %v1349
  %v1356 = vpack.c.bf16 %v1350, %v1350
  %v1357 = vpack.c.bf16 %v1351, %v1351
  %v1358 = vpack.c.bf16 %v1352, %v1352
  %v1359 = vpack.c.bf16 %v1353, %v1353
  %v1360 = vpack.c.bf16 %v1354, %v1354
  %v1367 = vunpack.c.l.b16 %v1355
  %v1368 = vunpack.c.l.b16 %v1356
  %v1369 = vunpack.c.l.b16 %v1357
  %v1370 = vunpack.c.l.b16 %v1358
  %v1371 = vunpack.c.l.b16 %v1359
  %v1372 = vunpack.c.l.b16 %v1360
  %v1373 = vpack.c.b16 %v1368, %v1367
  %v1374 = vpack.c.b16 %v1370, %v1369
  %v1375 = vpack.c.b16 %v1372, %v1371
  %1379 = vst [vmem:[%s5] sm:$0xff] %v1373
  %1380 = vst [vmem:[%s5 + $0x8] sm:$0xff] %v1374
  %1381 = vst [vmem:[%s5 + $0x10] sm:$0xff] %v1375
  %v1382 = vld [vmem:[#allocation3 + $0x30] sm:$0xff]
  %v1383 = vld [vmem:[#allocation3 + $0x38] sm:$0xff]
  %v1384 = vld [vmem:[#allocation3 + $0x40] sm:$0xff]
  %v1385 = vld [vmem:[#allocation3 + $0x48] sm:$0xff]
  %v1386 = vld [vmem:[#allocation3 + $0x50] sm:$0xff]
  %v1387 = vld [vmem:[#allocation3 + $0x58] sm:$0xff]
  %v1388 = vmul.f32 %v1382, %v1318
  %v1389 = vmul.f32 %v1383, %v1318
  %v1390 = vmul.f32 %v1384, %v1318
  %v1391 = vmul.f32 %v1385, %v1318
  %v1392 = vmul.f32 %v1386, %v1318
  %v1393 = vmul.f32 %v1387, %v1318
  %v1394 = vadd.f32 %v1388, %v1329
  %v1395 = vadd.f32 %v1389, %v1329
  %v1396 = vadd.f32 %v1390, %v1329
  %v1397 = vadd.f32 %v1391, %v1329
  %v1398 = vadd.f32 %v1392, %v1329
  %v1399 = vadd.f32 %v1393, %v1329
  %vm1400 = vcmp.gt.f32.partialorder %v1394, 0.0
  %vm1401 = vcmp.gt.f32.partialorder %v1395, 0.0
  %vm1402 = vcmp.gt.f32.partialorder %v1396, 0.0
  %vm1403 = vcmp.gt.f32.partialorder %v1397, 0.0
  %vm1404 = vcmp.gt.f32.partialorder %v1398, 0.0
  %vm1405 = vcmp.gt.f32.partialorder %v1399, 0.0
  %v1406 = vmul.f32 %v1394, 0.2
  %v1407 = vmul.f32 %v1395, 0.2
  %v1408 = vmul.f32 %v1396, 0.2
  %v1409 = vmul.f32 %v1397, 0.2
  %v1410 = vmul.f32 %v1398, 0.2
  %v1411 = vmul.f32 %v1399, 0.2
  %v1412 = vsel %vm1400, %v1394, %v1406
  %v1413 = vsel %vm1401, %v1395, %v1407
  %v1414 = vsel %vm1402, %v1396, %v1408
  %v1415 = vsel %vm1403, %v1397, %v1409
  %v1416 = vsel %vm1404, %v1398, %v1410
  %v1417 = vsel %vm1405, %v1399, %v1411
  %v1418 = vpack.c.bf16 %v1412, %v1412
  %v1419 = vpack.c.bf16 %v1413, %v1413
  %v1420 = vpack.c.bf16 %v1414, %v1414
  %v1421 = vpack.c.bf16 %v1415, %v1415
  %v1422 = vpack.c.bf16 %v1416, %v1416
  %v1423 = vpack.c.bf16 %v1417, %v1417
  %v1430 = vunpack.c.l.b16 %v1418
  %v1431 = vunpack.c.l.b16 %v1419
  %v1432 = vunpack.c.l.b16 %v1420
  %v1433 = vunpack.c.l.b16 %v1421
  %v1434 = vunpack.c.l.b16 %v1422
  %v1435 = vunpack.c.l.b16 %v1423
  %v1436 = vpack.c.b16 %v1431, %v1430
  %v1437 = vpack.c.b16 %v1433, %v1432
  %v1438 = vpack.c.b16 %v1435, %v1434
  %1442 = vst [vmem:[%s5 + $0x18] sm:$0xff] %v1436
  %1443 = vst [vmem:[%s5 + $0x20] sm:$0xff] %v1437
  %1444 = vst [vmem:[%s5 + $0x28] sm:$0xff] %v1438
  %v1445 = vld [vmem:[#allocation3 + $0x60] sm:$0xff]
  %v1446 = vld [vmem:[#allocation3 + $0x68] sm:$0xff]
  %v1447 = vld [vmem:[#allocation3 + $0x70] sm:$0xff]
  %v1448 = vld [vmem:[#allocation3 + $0x78] sm:$0xff]
  %v1449 = vld [vmem:[#allocation3 + $0x80] sm:$0xff]
  %v1450 = vld [vmem:[#allocation3 + $0x88] sm:$0xff]
  %v1451 = vmul.f32 %v1445, %v1318
  %v1452 = vmul.f32 %v1446, %v1318
  %v1453 = vmul.f32 %v1447, %v1318
  %v1454 = vmul.f32 %v1448, %v1318
  %v1455 = vmul.f32 %v1449, %v1318
  %v1456 = vmul.f32 %v1450, %v1318
  %v1457 = vadd.f32 %v1451, %v1329
  %v1458 = vadd.f32 %v1452, %v1329
  %v1459 = vadd.f32 %v1453, %v1329
  %v1460 = vadd.f32 %v1454, %v1329
  %v1461 = vadd.f32 %v1455, %v1329
  %v1462 = vadd.f32 %v1456, %v1329
  %vm1463 = vcmp.gt.f32.partialorder %v1457, 0.0
  %vm1464 = vcmp.gt.f32.partialorder %v1458, 0.0
  %vm1465 = vcmp.gt.f32.partialorder %v1459, 0.0
  %vm1466 = vcmp.gt.f32.partialorder %v1460, 0.0
  %vm1467 = vcmp.gt.f32.partialorder %v1461, 0.0
  %vm1468 = vcmp.gt.f32.partialorder %v1462, 0.0
  %v1469 = vmul.f32 %v1457, 0.2
  %v1470 = vmul.f32 %v1458, 0.2
  %v1471 = vmul.f32 %v1459, 0.2
  %v1472 = vmul.f32 %v1460, 0.2
  %v1473 = vmul.f32 %v1461, 0.2
  %v1474 = vmul.f32 %v1462, 0.2
  %v1475 = vsel %vm1463, %v1457, %v1469
  %v1476 = vsel %vm1464, %v1458, %v1470
  %v1477 = vsel %vm1465, %v1459, %v1471
  %v1478 = vsel %vm1466, %v1460, %v1472
  %v1479 = vsel %vm1467, %v1461, %v1473
  %v1480 = vsel %vm1468, %v1462, %v1474
  %v1481 = vpack.c.bf16 %v1475, %v1475
  %v1482 = vpack.c.bf16 %v1476, %v1476
  %v1483 = vpack.c.bf16 %v1477, %v1477
  %v1484 = vpack.c.bf16 %v1478, %v1478
  %v1485 = vpack.c.bf16 %v1479, %v1479
  %v1486 = vpack.c.bf16 %v1480, %v1480
  %v1493 = vunpack.c.l.b16 %v1481
  %v1494 = vunpack.c.l.b16 %v1482
  %v1495 = vunpack.c.l.b16 %v1483
  %v1496 = vunpack.c.l.b16 %v1484
  %v1497 = vunpack.c.l.b16 %v1485
  %v1498 = vunpack.c.l.b16 %v1486
  %v1499 = vpack.c.b16 %v1494, %v1493
  %v1500 = vpack.c.b16 %v1496, %v1495
  %v1501 = vpack.c.b16 %v1498, %v1497
  %1505 = vst [vmem:[%s5 + $0x30] sm:$0xff] %v1499
  %1506 = vst [vmem:[%s5 + $0x38] sm:$0xff] %v1500
  %1507 = vst [vmem:[%s5 + $0x40] sm:$0xff] %v1501
  %v1508 = vld [vmem:[#allocation3 + $0x90] sm:$0xff]
  %v1509 = vld [vmem:[#allocation3 + $0x98] sm:$0xff]
  %v1510 = vld [vmem:[#allocation3 + $0xa0] sm:$0xff]
  %v1511 = vld [vmem:[#allocation3 + $0xa8] sm:$0xff]
  %v1512 = vld [vmem:[#allocation3 + $0xb0] sm:$0xff]
  %v1513 = vld [vmem:[#allocation3 + $0xb8] sm:$0xff]
  %v1514 = vmul.f32 %v1508, %v1318
  %v1515 = vmul.f32 %v1509, %v1318
  %v1516 = vmul.f32 %v1510, %v1318
  %v1517 = vmul.f32 %v1511, %v1318
  %v1518 = vmul.f32 %v1512, %v1318
  %v1519 = vmul.f32 %v1513, %v1318
  %v1520 = vadd.f32 %v1514, %v1329
  %v1521 = vadd.f32 %v1515, %v1329
  %v1522 = vadd.f32 %v1516, %v1329
  %v1523 = vadd.f32 %v1517, %v1329
  %v1524 = vadd.f32 %v1518, %v1329
  %v1525 = vadd.f32 %v1519, %v1329
  %vm1526 = vcmp.gt.f32.partialorder %v1520, 0.0
  %vm1527 = vcmp.gt.f32.partialorder %v1521, 0.0
  %vm1528 = vcmp.gt.f32.partialorder %v1522, 0.0
  %vm1529 = vcmp.gt.f32.partialorder %v1523, 0.0
  %vm1530 = vcmp.gt.f32.partialorder %v1524, 0.0
  %vm1531 = vcmp.gt.f32.partialorder %v1525, 0.0
  %v1532 = vmul.f32 %v1520, 0.2
  %v1533 = vmul.f32 %v1521, 0.2
  %v1534 = vmul.f32 %v1522, 0.2
  %v1535 = vmul.f32 %v1523, 0.2
  %v1536 = vmul.f32 %v1524, 0.2
  %v1537 = vmul.f32 %v1525, 0.2
  %v1538 = vsel %vm1526, %v1520, %v1532
  %v1539 = vsel %vm1527, %v1521, %v1533
  %v1540 = vsel %vm1528, %v1522, %v1534
  %v1541 = vsel %vm1529, %v1523, %v1535
  %v1542 = vsel %vm1530, %v1524, %v1536
  %v1543 = vsel %vm1531, %v1525, %v1537
  %v1544 = vpack.c.bf16 %v1538, %v1538
  %v1545 = vpack.c.bf16 %v1539, %v1539
  %v1546 = vpack.c.bf16 %v1540, %v1540
  %v1547 = vpack.c.bf16 %v1541, %v1541
  %v1548 = vpack.c.bf16 %v1542, %v1542
  %v1549 = vpack.c.bf16 %v1543, %v1543
  %v1556 = vunpack.c.l.b16 %v1544
  %v1557 = vunpack.c.l.b16 %v1545
  %v1558 = vunpack.c.l.b16 %v1546
  %v1559 = vunpack.c.l.b16 %v1547
  %v1560 = vunpack.c.l.b16 %v1548
  %v1561 = vunpack.c.l.b16 %v1549
  %v1562 = vpack.c.b16 %v1557, %v1556
  %v1563 = vpack.c.b16 %v1559, %v1558
  %v1564 = vpack.c.b16 %v1561, %v1560
  %1568 = vst [vmem:[%s5 + $0x48] sm:$0xff] %v1562
  %1569 = vst [vmem:[%s5 + $0x50] sm:$0xff] %v1563
  %1570 = vst [vmem:[%s5 + $0x58] sm:$0xff] %v1564
  // Predicated region
  $region22: #{generator_forward.8} parent=0 // pred_check
    _
  $region23: #{generator_forward.8} parent=0 // pred_check_branch
    %1572 = sbr.rel (0) target = $region25
  $region24: #{generator_forward.8} parent=0 // pred_region
    _
  $region25: #{generator_forward.8} parent=0 // pred_fallthru
    _
  // Predicated region
  $region26: #{generator_forward.8} parent=0 // pred_check
    _
  $region27: #{generator_forward.8} parent=0 // pred_check_branch
    %1574 = sbr.rel (0) target = $region29
  $region28: #{generator_forward.8} parent=0 // pred_region
    _
  $region29: #{generator_forward.8} parent=0 // pred_fallthru
    _

// kernel: generator_forward.9
$region0: #{generator_forward.9}
  #allocation0 [shape = 'u32[]', space=smem, size = 0x4, offset = 0x4, fixed_abs, tag = 'smem constant byte address 0x4 - core index']
  #allocation1 [shape = 'u32[144,128]{1,0:T(1,128)}', space=vmem, size = 0x12000, scoped, tag = 'internal scratch']
  #allocation2 [shape = 'bf16[72,2432]{1,0:T(8,128)(2,1)}', space=vmem, size = 0x55800, scoped, tag = 'scratch operand']
  %s0 = inlined_call_operand.vmem [shape: bf16[8,2560], index: 0, kind: input, shape index: {}]
  %s1 = inlined_call_operand.vmem [shape: bf16[3,72], index: 1, kind: input, shape index: {}]
  %s2 = inlined_call_operand.vmem [shape: f32[3,1], index: 2, kind: input, shape index: {}]
  %s3 = inlined_call_operand.vmem [shape: f32[3,2432], index: 3, kind: output, shape index: {}]
  %s4 = sld [smem:[#allocation0]]
  $region22: #{generator_forward.9} parent=0
    _
  %s6 = ssub.s32 1, %s4
  %s7 = scalar_select 0, %s6, %s4
  // Predicated region
  $region2: #{generator_forward.9} parent=0 // pred_check
    _
  $region3: #{generator_forward.9} parent=0 // pred_check_branch
    %9 = sbr.rel (0) target = $region5
  $region4: #{generator_forward.9} parent=0 // pred_region
    _
  $region5: #{generator_forward.9} parent=0 // pred_fallthru
    _
  // Predicated region
  $region6: #{generator_forward.9} parent=0 // pred_check
    _
  $region7: #{generator_forward.9} parent=0 // pred_check_branch
    %11 = sbr.rel (0) target = $region9
  $region8: #{generator_forward.9} parent=0 // pred_region
    _
  $region9: #{generator_forward.9} parent=0 // pred_fallthru
    _
  // Predicated region
  $region10: #{generator_forward.9} parent=0 // pred_check
    _
  $region11: #{generator_forward.9} parent=0 // pred_check_branch
    %13 = sbr.rel (0) target = $region13
  $region12: #{generator_forward.9} parent=0 // pred_region
    _
  $region13: #{generator_forward.9} parent=0 // pred_fallthru
    _
  %v15 = vld [vmem:[%s0] sm:$0xff]
  %v16 = vld [vmem:[%s0 + $0x8] sm:$0xff]
  %v17 = vld [vmem:[%s0 + $0x10] sm:$0xff]
  %v18 = vld [vmem:[%s0 + $0x18] sm:$0xff]
  %v19 = vld [vmem:[%s0 + $0x20] sm:$0xff]
  %v20 = vld [vmem:[%s0 + $0x28] sm:$0xff]
  %v21 = vld [vmem:[%s0 + $0x30] sm:$0xff]
  %v22 = vld [vmem:[%s0 + $0x38] sm:$0xff]
  %v23 = vld [vmem:[%s0 + $0x40] sm:$0xff]
  %v24 = vld [vmem:[%s0 + $0x48] sm:$0xf]
  %25 = vst [vmem:[#allocation2] sm:$0xff] %v15
  %26 = vst [vmem:[#allocation2 + $0x8] sm:$0xff] %v16
  %27 = vst [vmem:[#allocation2 + $0x10] sm:$0xff] %v17
  %28 = vst [vmem:[#allocation2 + $0x18] sm:$0xff] %v18
  %29 = vst [vmem:[#allocation2 + $0x20] sm:$0xff] %v19
  %30 = vst [vmem:[#allocation2 + $0x28] sm:$0xff] %v20
  %31 = vst [vmem:[#allocation2 + $0x30] sm:$0xff] %v21
  %32 = vst [vmem:[#allocation2 + $0x38] sm:$0xff] %v22
  %33 = vst [vmem:[#allocation2 + $0x40] sm:$0xff] %v23
  %34 = vst [vmem:[#allocation2 + $0x48] sm:$0xf] %v24
  %v35 = vld [vmem:[%s0] sm:$0xff]
  %v36 = vld [vmem:[%s0 + $0x8] sm:$0xff]
  %v37 = vld [vmem:[%s0 + $0x10] sm:$0xff]
  %v38 = vld [vmem:[%s0 + $0x18] sm:$0xff]
  %v39 = vld [vmem:[%s0 + $0x20] sm:$0xff]
  %v40 = vld [vmem:[%s0 + $0x28] sm:$0xff]
  %v41 = vld [vmem:[%s0 + $0x30] sm:$0xff]
  %v42 = vld [vmem:[%s0 + $0x38] sm:$0xff]
  %v43 = vld [vmem:[%s0 + $0x40] sm:$0xff]
  %v44 = vld [vmem:[%s0 + $0x48] sm:$0xff]
  %55 = vrot.lane.b32.xlu0 %v35, 127
  %v56 = vpop.permute.xlu0 %55
  %57 = vrot.lane.b32.xlu0 %v36, 127
  %v58 = vpop.permute.xlu0 %57
  %59 = vrot.lane.b32.xlu0 %v37, 127
  %v60 = vpop.permute.xlu0 %59
  %61 = vrot.lane.b32.xlu0 %v38, 127
  %v62 = vpop.permute.xlu0 %61
  %63 = vrot.lane.b32.xlu0 %v39, 127
  %v64 = vpop.permute.xlu0 %63
  %65 = vrot.lane.b32.xlu0 %v40, 127
  %v66 = vpop.permute.xlu0 %65
  %67 = vrot.lane.b32.xlu0 %v41, 127
  %v68 = vpop.permute.xlu0 %67
  %69 = vrot.lane.b32.xlu0 %v42, 127
  %v70 = vpop.permute.xlu0 %69
  %71 = vrot.lane.b32.xlu0 %v43, 127
  %v72 = vpop.permute.xlu0 %71
  %73 = vrot.lane.b32.xlu0 %v44, 127
  %v74 = vpop.permute.xlu0 %73
  %v75 = vrot.slane %v56, 4
  %v76 = vrot.slane %v58, 4
  %v77 = vrot.slane %v60, 4
  %v78 = vrot.slane %v62, 4
  %v79 = vrot.slane %v64, 4
  %v80 = vrot.slane %v66, 4
  %v81 = vrot.slane %v68, 4
  %v82 = vrot.slane %v70, 4
  %v83 = vrot.slane %v72, 4
  %v84 = vrot.slane %v74, 4
  %vm85 = vcmask 1043456
  %v86 = vsel %vm85, %v75, %v76
  %vm87 = vcmask 1039360
  %v88 = vsel %vm87, %v56, %v86
  %v89 = vsel %vm85, %v76, %v77
  %v90 = vsel %vm87, %v58, %v89
  %v91 = vsel %vm85, %v77, %v78
  %v92 = vsel %vm87, %v60, %v91
  %v93 = vsel %vm85, %v78, %v79
  %v94 = vsel %vm87, %v62, %v93
  %v95 = vsel %vm85, %v79, %v80
  %v96 = vsel %vm87, %v64, %v95
  %v97 = vsel %vm85, %v80, %v81
  %v98 = vsel %vm87, %v66, %v97
  %v99 = vsel %vm85, %v81, %v82
  %v100 = vsel %vm87, %v68, %v99
  %v101 = vsel %vm85, %v82, %v83
  %v102 = vsel %vm87, %v70, %v101
  %v103 = vsel %vm85, %v83, %v84
  %v104 = vsel %vm87, %v72, %v103
  %v105 = vsel %vm87, %v74, %v84
  %116 = vst [vmem:[#allocation2 + $0x4c] sm:$0xff] %v88
  %117 = vst [vmem:[#allocation2 + $0x54] sm:$0xff] %v90
  %118 = vst [vmem:[#allocation2 + $0x5c] sm:$0xff] %v92
  %119 = vst [vmem:[#allocation2 + $0x64] sm:$0xff] %v94
  %120 = vst [vmem:[#allocation2 + $0x6c] sm:$0xff] %v96
  %121 = vst [vmem:[#allocation2 + $0x74] sm:$0xff] %v98
  %122 = vst [vmem:[#allocation2 + $0x7c] sm:$0xff] %v100
  %123 = vst [vmem:[#allocation2 + $0x84] sm:$0xff] %v102
  %124 = vst [vmem:[#allocation2 + $0x8c] sm:$0xff] %v104
  %125 = vst [vmem:[#allocation2 + $0x94] sm:$0xf] %v105
  %v126 = vld [vmem:[%s0] sm:$0xff]
  %v127 = vld [vmem:[%s0 + $0x8] sm:$0xff]
  %v128 = vld [vmem:[%s0 + $0x10] sm:$0xff]
  %v129 = vld [vmem:[%s0 + $0x18] sm:$0xff]
  %v130 = vld [vmem:[%s0 + $0x20] sm:$0xff]
  %v131 = vld [vmem:[%s0 + $0x28] sm:$0xff]
  %v132 = vld [vmem:[%s0 + $0x30] sm:$0xff]
  %v133 = vld [vmem:[%s0 + $0x38] sm:$0xff]
  %v134 = vld [vmem:[%s0 + $0x40] sm:$0xff]
  %v135 = vld [vmem:[%s0 + $0x48] sm:$0xff]
  %146 = vrot.lane.b32.xlu0 %v126, 126
  %v147 = vpop.permute.xlu0 %146
  %148 = vrot.lane.b32.xlu0 %v127, 126
  %v149 = vpop.permute.xlu0 %148
  %150 = vrot.lane.b32.xlu0 %v128, 126
  %v151 = vpop.permute.xlu0 %150
  %152 = vrot.lane.b32.xlu0 %v129, 126
  %v153 = vpop.permute.xlu0 %152
  %154 = vrot.lane.b32.xlu0 %v130, 126
  %v155 = vpop.permute.xlu0 %154
  %156 = vrot.lane.b32.xlu0 %v131, 126
  %v157 = vpop.permute.xlu0 %156
  %158 = vrot.lane.b32.xlu0 %v132, 126
  %v159 = vpop.permute.xlu0 %158
  %160 = vrot.lane.b32.xlu0 %v133, 126
  %v161 = vpop.permute.xlu0 %160
  %162 = vrot.lane.b32.xlu0 %v134, 126
  %v163 = vpop.permute.xlu0 %162
  %164 = vrot.lane.b32.xlu0 %v135, 126
  %v165 = vpop.permute.xlu0 %164
  %v166 = vrot.slane %v147, 4
  %v167 = vrot.slane %v149, 4
  %v168 = vrot.slane %v151, 4
  %v169 = vrot.slane %v153, 4
  %v170 = vrot.slane %v155, 4
  %v171 = vrot.slane %v157, 4
  %v172 = vrot.slane %v159, 4
  %v173 = vrot.slane %v161, 4
  %v174 = vrot.slane %v163, 4
  %v175 = vrot.slane %v165, 4
  %v176 = vsel %vm85, %v166, %v167
  %vm177 = vcmask 1031168
  %v178 = vsel %vm177, %v147, %v176
  %v179 = vsel %vm85, %v167, %v168
  %v180 = vsel %vm177, %v149, %v179
  %v181 = vsel %vm85, %v168, %v169
  %v182 = vsel %vm177, %v151, %v181
  %v183 = vsel %vm85, %v169, %v170
  %v184 = vsel %vm177, %v153, %v183
  %v185 = vsel %vm85, %v170, %v171
  %v186 = vsel %vm177, %v155, %v185
  %v187 = vsel %vm85, %v171, %v172
  %v188 = vsel %vm177, %v157, %v187
  %v189 = vsel %vm85, %v172, %v173
  %v190 = vsel %vm177, %v159, %v189
  %v191 = vsel %vm85, %v173, %v174
  %v192 = vsel %vm177, %v161, %v191
  %v193 = vsel %vm85, %v174, %v175
  %v194 = vsel %vm177, %v163, %v193
  %v195 = vsel %vm177, %v165, %v175
  %206 = vst [vmem:[#allocation2 + $0x98] sm:$0xff] %v178
  %207 = vst [vmem:[#allocation2 + $0xa0] sm:$0xff] %v180
  %208 = vst [vmem:[#allocation2 + $0xa8] sm:$0xff] %v182
  %209 = vst [vmem:[#allocation2 + $0xb0] sm:$0xff] %v184
  %210 = vst [vmem:[#allocation2 + $0xb8] sm:$0xff] %v186
  %211 = vst [vmem:[#allocation2 + $0xc0] sm:$0xff] %v188
  %212 = vst [vmem:[#allocation2 + $0xc8] sm:$0xff] %v190
  %213 = vst [vmem:[#allocation2 + $0xd0] sm:$0xff] %v192
  %214 = vst [vmem:[#allocation2 + $0xd8] sm:$0xff] %v194
  %215 = vst [vmem:[#allocation2 + $0xe0] sm:$0xf] %v195
  %v216 = vld [vmem:[%s0] sm:$0xff]
  %v217 = vld [vmem:[%s0 + $0x8] sm:$0xff]
  %v218 = vld [vmem:[%s0 + $0x10] sm:$0xff]
  %v219 = vld [vmem:[%s0 + $0x18] sm:$0xff]
  %v220 = vld [vmem:[%s0 + $0x20] sm:$0xff]
  %v221 = vld [vmem:[%s0 + $0x28] sm:$0xff]
  %v222 = vld [vmem:[%s0 + $0x30] sm:$0xff]
  %v223 = vld [vmem:[%s0 + $0x38] sm:$0xff]
  %v224 = vld [vmem:[%s0 + $0x40] sm:$0xff]
  %v225 = vld [vmem:[%s0 + $0x48] sm:$0xff]
  %236 = vrot.lane.b32.xlu0 %v216, 94
  %v237 = vpop.permute.xlu0 %236
  %238 = vrot.lane.b32.xlu0 %v217, 94
  %v239 = vpop.permute.xlu0 %238
  %240 = vrot.lane.b32.xlu0 %v218, 94
  %v241 = vpop.permute.xlu0 %240
  %242 = vrot.lane.b32.xlu0 %v219, 94
  %v243 = vpop.permute.xlu0 %242
  %244 = vrot.lane.b32.xlu0 %v220, 94
  %v245 = vpop.permute.xlu0 %244
  %246 = vrot.lane.b32.xlu0 %v221, 94
  %v247 = vpop.permute.xlu0 %246
  %248 = vrot.lane.b32.xlu0 %v222, 94
  %v249 = vpop.permute.xlu0 %248
  %250 = vrot.lane.b32.xlu0 %v223, 94
  %v251 = vpop.permute.xlu0 %250
  %252 = vrot.lane.b32.xlu0 %v224, 94
  %v253 = vpop.permute.xlu0 %252
  %254 = vrot.lane.b32.xlu0 %v225, 94
  %v255 = vpop.permute.xlu0 %254
  %v256 = vrot.slane %v237, 4
  %v257 = vrot.slane %v239, 4
  %v258 = vrot.slane %v241, 4
  %v259 = vrot.slane %v243, 4
  %v260 = vrot.slane %v245, 4
  %v261 = vrot.slane %v247, 4
  %v262 = vrot.slane %v249, 4
  %v263 = vrot.slane %v251, 4
  %v264 = vrot.slane %v253, 4
  %v265 = vrot.slane %v255, 4
  %v266 = vsel %vm85, %v256, %v257
  %vm267 = vcmask 769024
  %v268 = vsel %vm267, %v237, %v266
  %v269 = vsel %vm85, %v257, %v258
  %v270 = vsel %vm267, %v239, %v269
  %v271 = vsel %vm85, %v258, %v259
  %v272 = vsel %vm267, %v241, %v271
  %v273 = vsel %vm85, %v259, %v260
  %v274 = vsel %vm267, %v243, %v273
  %v275 = vsel %vm85, %v260, %v261
  %v276 = vsel %vm267, %v245, %v275
  %v277 = vsel %vm85, %v261, %v262
  %v278 = vsel %vm267, %v247, %v277
  %v279 = vsel %vm85, %v262, %v263
  %v280 = vsel %vm267, %v249, %v279
  %v281 = vsel %vm85, %v263, %v264
  %v282 = vsel %vm267, %v251, %v281
  %v283 = vsel %vm85, %v264, %v265
  %v284 = vsel %vm267, %v253, %v283
  %v285 = vsel %vm267, %v255, %v265
  %296 = vst [vmem:[#allocation2 + $0xe4] sm:$0xff] %v268
  %297 = vst [vmem:[#allocation2 + $0xec] sm:$0xff] %v270
  %298 = vst [vmem:[#allocation2 + $0xf4] sm:$0xff] %v272
  %299 = vst [vmem:[#allocation2 + $0xfc] sm:$0xff] %v274
  %300 = vst [vmem:[#allocation2 + $0x104] sm:$0xff] %v276
  %301 = vst [vmem:[#allocation2 + $0x10c] sm:$0xff] %v278
  %302 = vst [vmem:[#allocation2 + $0x114] sm:$0xff] %v280
  %303 = vst [vmem:[#allocation2 + $0x11c] sm:$0xff] %v282
  %304 = vst [vmem:[#allocation2 + $0x124] sm:$0xff] %v284
  %305 = vst [vmem:[#allocation2 + $0x12c] sm:$0xf] %v285
  %v306 = vld [vmem:[%s0] sm:$0xff]
  %v307 = vld [vmem:[%s0 + $0x8] sm:$0xff]
  %v308 = vld [vmem:[%s0 + $0x10] sm:$0xff]
  %v309 = vld [vmem:[%s0 + $0x18] sm:$0xff]
  %v310 = vld [vmem:[%s0 + $0x20] sm:$0xff]
  %v311 = vld [vmem:[%s0 + $0x28] sm:$0xff]
  %v312 = vld [vmem:[%s0 + $0x30] sm:$0xff]
  %v313 = vld [vmem:[%s0 + $0x38] sm:$0xff]
  %v314 = vld [vmem:[%s0 + $0x40] sm:$0xff]
  %v315 = vld [vmem:[%s0 + $0x48] sm:$0xff]
  %326 = vrot.lane.b32.xlu0 %v306, 93
  %v327 = vpop.permute.xlu0 %326
  %328 = vrot.lane.b32.xlu0 %v307, 93
  %v329 = vpop.permute.xlu0 %328
  %330 = vrot.lane.b32.xlu0 %v308, 93
  %v331 = vpop.permute.xlu0 %330
  %332 = vrot.lane.b32.xlu0 %v309, 93
  %v333 = vpop.permute.xlu0 %332
  %334 = vrot.lane.b32.xlu0 %v310, 93
  %v335 = vpop.permute.xlu0 %334
  %336 = vrot.lane.b32.xlu0 %v311, 93
  %v337 = vpop.permute.xlu0 %336
  %338 = vrot.lane.b32.xlu0 %v312, 93
  %v339 = vpop.permute.xlu0 %338
  %340 = vrot.lane.b32.xlu0 %v313, 93
  %v341 = vpop.permute.xlu0 %340
  %342 = vrot.lane.b32.xlu0 %v314, 93
  %v343 = vpop.permute.xlu0 %342
  %344 = vrot.lane.b32.xlu0 %v315, 93
  %v345 = vpop.permute.xlu0 %344
  %v346 = vrot.slane %v327, 4
  %v347 = vrot.slane %v329, 4
  %v348 = vrot.slane %v331, 4
  %v349 = vrot.slane %v333, 4
  %v350 = vrot.slane %v335, 4
  %v351 = vrot.slane %v337, 4
  %v352 = vrot.slane %v339, 4
  %v353 = vrot.slane %v341, 4
  %v354 = vrot.slane %v343, 4
  %v355 = vrot.slane %v345, 4
  %v356 = vsel %vm85, %v346, %v347
  %vm357 = vcmask 760832
  %v358 = vsel %vm357, %v327, %v356
  %v359 = vsel %vm85, %v347, %v348
  %v360 = vsel %vm357, %v329, %v359
  %v361 = vsel %vm85, %v348, %v349
  %v362 = vsel %vm357, %v331, %v361
  %v363 = vsel %vm85, %v349, %v350
  %v364 = vsel %vm357, %v333, %v363
  %v365 = vsel %vm85, %v350, %v351
  %v366 = vsel %vm357, %v335, %v365
  %v367 = vsel %vm85, %v351, %v352
  %v368 = vsel %vm357, %v337, %v367
  %v369 = vsel %vm85, %v352, %v353
  %v370 = vsel %vm357, %v339, %v369
  %v371 = vsel %vm85, %v353, %v354
  %v372 = vsel %vm357, %v341, %v371
  %v373 = vsel %vm85, %v354, %v355
  %v374 = vsel %vm357, %v343, %v373
  %v375 = vsel %vm357, %v345, %v355
  %386 = vst [vmem:[#allocation2 + $0x130] sm:$0xff] %v358
  %387 = vst [vmem:[#allocation2 + $0x138] sm:$0xff] %v360
  %388 = vst [vmem:[#allocation2 + $0x140] sm:$0xff] %v362
  %389 = vst [vmem:[#allocation2 + $0x148] sm:$0xff] %v364
  %390 = vst [vmem:[#allocation2 + $0x150] sm:$0xff] %v366
  %391 = vst [vmem:[#allocation2 + $0x158] sm:$0xff] %v368
  %392 = vst [vmem:[#allocation2 + $0x160] sm:$0xff] %v370
  %393 = vst [vmem:[#allocation2 + $0x168] sm:$0xff] %v372
  %394 = vst [vmem:[#allocation2 + $0x170] sm:$0xff] %v374
  %395 = vst [vmem:[#allocation2 + $0x178] sm:$0xf] %v375
  %v396 = vld [vmem:[%s0] sm:$0xff]
  %v397 = vld [vmem:[%s0 + $0x8] sm:$0xff]
  %v398 = vld [vmem:[%s0 + $0x10] sm:$0xff]
  %v399 = vld [vmem:[%s0 + $0x18] sm:$0xff]
  %v400 = vld [vmem:[%s0 + $0x20] sm:$0xff]
  %v401 = vld [vmem:[%s0 + $0x28] sm:$0xff]
  %v402 = vld [vmem:[%s0 + $0x30] sm:$0xff]
  %v403 = vld [vmem:[%s0 + $0x38] sm:$0xff]
  %v404 = vld [vmem:[%s0 + $0x40] sm:$0xff]
  %v405 = vld [vmem:[%s0 + $0x48] sm:$0xff]
  %416 = vrot.lane.b32.xlu0 %v396, 92
  %v417 = vpop.permute.xlu0 %416
  %418 = vrot.lane.b32.xlu0 %v397, 92
  %v419 = vpop.permute.xlu0 %418
  %420 = vrot.lane.b32.xlu0 %v398, 92
  %v421 = vpop.permute.xlu0 %420
  %422 = vrot.lane.b32.xlu0 %v399, 92
  %v423 = vpop.permute.xlu0 %422
  %424 = vrot.lane.b32.xlu0 %v400, 92
  %v425 = vpop.permute.xlu0 %424
  %426 = vrot.lane.b32.xlu0 %v401, 92
  %v427 = vpop.permute.xlu0 %426
  %428 = vrot.lane.b32.xlu0 %v402, 92
  %v429 = vpop.permute.xlu0 %428
  %430 = vrot.lane.b32.xlu0 %v403, 92
  %v431 = vpop.permute.xlu0 %430
  %432 = vrot.lane.b32.xlu0 %v404, 92
  %v433 = vpop.permute.xlu0 %432
  %434 = vrot.lane.b32.xlu0 %v405, 92
  %v435 = vpop.permute.xlu0 %434
  %v436 = vrot.slane %v417, 4
  %v437 = vrot.slane %v419, 4
  %v438 = vrot.slane %v421, 4
  %v439 = vrot.slane %v423, 4
  %v440 = vrot.slane %v425, 4
  %v441 = vrot.slane %v427, 4
  %v442 = vrot.slane %v429, 4
  %v443 = vrot.slane %v431, 4
  %v444 = vrot.slane %v433, 4
  %v445 = vrot.slane %v435, 4
  %v446 = vsel %vm85, %v436, %v437
  %vm447 = vcmask 752640
  %v448 = vsel %vm447, %v417, %v446
  %v449 = vsel %vm85, %v437, %v438
  %v450 = vsel %vm447, %v419, %v449
  %v451 = vsel %vm85, %v438, %v439
  %v452 = vsel %vm447, %v421, %v451
  %v453 = vsel %vm85, %v439, %v440
  %v454 = vsel %vm447, %v423, %v453
  %v455 = vsel %vm85, %v440, %v441
  %v456 = vsel %vm447, %v425, %v455
  %v457 = vsel %vm85, %v441, %v442
  %v458 = vsel %vm447, %v427, %v457
  %v459 = vsel %vm85, %v442, %v443
  %v460 = vsel %vm447, %v429, %v459
  %v461 = vsel %vm85, %v443, %v444
  %v462 = vsel %vm447, %v431, %v461
  %v463 = vsel %vm85, %v444, %v445
  %v464 = vsel %vm447, %v433, %v463
  %v465 = vsel %vm447, %v435, %v445
  %476 = vst [vmem:[#allocation2 + $0x17c] sm:$0xff] %v448
  %477 = vst [vmem:[#allocation2 + $0x184] sm:$0xff] %v450
  %478 = vst [vmem:[#allocation2 + $0x18c] sm:$0xff] %v452
  %479 = vst [vmem:[#allocation2 + $0x194] sm:$0xff] %v454
  %480 = vst [vmem:[#allocation2 + $0x19c] sm:$0xff] %v456
  %481 = vst [vmem:[#allocation2 + $0x1a4] sm:$0xff] %v458
  %482 = vst [vmem:[#allocation2 + $0x1ac] sm:$0xff] %v460
  %483 = vst [vmem:[#allocation2 + $0x1b4] sm:$0xff] %v462
  %484 = vst [vmem:[#allocation2 + $0x1bc] sm:$0xff] %v464
  %485 = vst [vmem:[#allocation2 + $0x1c4] sm:$0xf] %v465
  %v486 = vld [vmem:[%s0] sm:$0xff]
  %v487 = vld [vmem:[%s0 + $0x8] sm:$0xff]
  %v488 = vld [vmem:[%s0 + $0x10] sm:$0xff]
  %v489 = vld [vmem:[%s0 + $0x18] sm:$0xff]
  %v490 = vld [vmem:[%s0 + $0x20] sm:$0xff]
  %v491 = vld [vmem:[%s0 + $0x28] sm:$0xff]
  %v492 = vld [vmem:[%s0 + $0x30] sm:$0xff]
  %v493 = vld [vmem:[%s0 + $0x38] sm:$0xff]
  %v494 = vld [vmem:[%s0 + $0x40] sm:$0xff]
  %v495 = vld [vmem:[%s0 + $0x48] sm:$0xff]
  %506 = vrot.lane.b32.xlu0 %v486, 60
  %v507 = vpop.permute.xlu0 %506
  %508 = vrot.lane.b32.xlu0 %v487, 60
  %v509 = vpop.permute.xlu0 %508
  %510 = vrot.lane.b32.xlu0 %v488, 60
  %v511 = vpop.permute.xlu0 %510
  %512 = vrot.lane.b32.xlu0 %v489, 60
  %v513 = vpop.permute.xlu0 %512
  %514 = vrot.lane.b32.xlu0 %v490, 60
  %v515 = vpop.permute.xlu0 %514
  %516 = vrot.lane.b32.xlu0 %v491, 60
  %v517 = vpop.permute.xlu0 %516
  %518 = vrot.lane.b32.xlu0 %v492, 60
  %v519 = vpop.permute.xlu0 %518
  %520 = vrot.lane.b32.xlu0 %v493, 60
  %v521 = vpop.permute.xlu0 %520
  %522 = vrot.lane.b32.xlu0 %v494, 60
  %v523 = vpop.permute.xlu0 %522
  %524 = vrot.lane.b32.xlu0 %v495, 60
  %v525 = vpop.permute.xlu0 %524
  %v526 = vrot.slane %v507, 4
  %v527 = vrot.slane %v509, 4
  %v528 = vrot.slane %v511, 4
  %v529 = vrot.slane %v513, 4
  %v530 = vrot.slane %v515, 4
  %v531 = vrot.slane %v517, 4
  %v532 = vrot.slane %v519, 4
  %v533 = vrot.slane %v521, 4
  %v534 = vrot.slane %v523, 4
  %v535 = vrot.slane %v525, 4
  %v536 = vsel %vm85, %v526, %v527
  %vm537 = vcmask 490496
  %v538 = vsel %vm537, %v507, %v536
  %v539 = vsel %vm85, %v527, %v528
  %v540 = vsel %vm537, %v509, %v539
  %v541 = vsel %vm85, %v528, %v529
  %v542 = vsel %vm537, %v511, %v541
  %v543 = vsel %vm85, %v529, %v530
  %v544 = vsel %vm537, %v513, %v543
  %v545 = vsel %vm85, %v530, %v531
  %v546 = vsel %vm537, %v515, %v545
  %v547 = vsel %vm85, %v531, %v532
  %v548 = vsel %vm537, %v517, %v547
  %v549 = vsel %vm85, %v532, %v533
  %v550 = vsel %vm537, %v519, %v549
  %v551 = vsel %vm85, %v533, %v534
  %v552 = vsel %vm537, %v521, %v551
  %v553 = vsel %vm85, %v534, %v535
  %v554 = vsel %vm537, %v523, %v553
  %v555 = vsel %vm537, %v525, %v535
  %566 = vst [vmem:[#allocation2 + $0x1c8] sm:$0xff] %v538
  %567 = vst [vmem:[#allocation2 + $0x1d0] sm:$0xff] %v540
  %568 = vst [vmem:[#allocation2 + $0x1d8] sm:$0xff] %v542
  %569 = vst [vmem:[#allocation2 + $0x1e0] sm:$0xff] %v544
  %570 = vst [vmem:[#allocation2 + $0x1e8] sm:$0xff] %v546
  %571 = vst [vmem:[#allocation2 + $0x1f0] sm:$0xff] %v548
  %572 = vst [vmem:[#allocation2 + $0x1f8] sm:$0xff] %v550
  %573 = vst [vmem:[#allocation2 + $0x200] sm:$0xff] %v552
  %574 = vst [vmem:[#allocation2 + $0x208] sm:$0xff] %v554
  %575 = vst [vmem:[#allocation2 + $0x210] sm:$0xf] %v555
  %v576 = vld [vmem:[%s0] sm:$0xff]
  %v577 = vld [vmem:[%s0 + $0x8] sm:$0xff]
  %v578 = vld [vmem:[%s0 + $0x10] sm:$0xff]
  %v579 = vld [vmem:[%s0 + $0x18] sm:$0xff]
  %v580 = vld [vmem:[%s0 + $0x20] sm:$0xff]
  %v581 = vld [vmem:[%s0 + $0x28] sm:$0xff]
  %v582 = vld [vmem:[%s0 + $0x30] sm:$0xff]
  %v583 = vld [vmem:[%s0 + $0x38] sm:$0xff]
  %v584 = vld [vmem:[%s0 + $0x40] sm:$0xff]
  %v585 = vld [vmem:[%s0 + $0x48] sm:$0xff]
  %596 = vrot.lane.b32.xlu0 %v576, 59
  %v597 = vpop.permute.xlu0 %596
  %598 = vrot.lane.b32.xlu0 %v577, 59
  %v599 = vpop.permute.xlu0 %598
  %600 = vrot.lane.b32.xlu0 %v578, 59
  %v601 = vpop.permute.xlu0 %600
  %602 = vrot.lane.b32.xlu0 %v579, 59
  %v603 = vpop.permute.xlu0 %602
  %604 = vrot.lane.b32.xlu0 %v580, 59
  %v605 = vpop.permute.xlu0 %604
  %606 = vrot.lane.b32.xlu0 %v581, 59
  %v607 = vpop.permute.xlu0 %606
  %608 = vrot.lane.b32.xlu0 %v582, 59
  %v609 = vpop.permute.xlu0 %608
  %610 = vrot.lane.b32.xlu0 %v583, 59
  %v611 = vpop.permute.xlu0 %610
  %612 = vrot.lane.b32.xlu0 %v584, 59
  %v613 = vpop.permute.xlu0 %612
  %614 = vrot.lane.b32.xlu0 %v585, 59
  %v615 = vpop.permute.xlu0 %614
  %v616 = vrot.slane %v597, 4
  %v617 = vrot.slane %v599, 4
  %v618 = vrot.slane %v601, 4
  %v619 = vrot.slane %v603, 4
  %v620 = vrot.slane %v605, 4
  %v621 = vrot.slane %v607, 4
  %v622 = vrot.slane %v609, 4
  %v623 = vrot.slane %v611, 4
  %v624 = vrot.slane %v613, 4
  %v625 = vrot.slane %v615, 4
  %v626 = vsel %vm85, %v616, %v617
  %vm627 = vcmask 482304
  %v628 = vsel %vm627, %v597, %v626
  %v629 = vsel %vm85, %v617, %v618
  %v630 = vsel %vm627, %v599, %v629
  %v631 = vsel %vm85, %v618, %v619
  %v632 = vsel %vm627, %v601, %v631
  %v633 = vsel %vm85, %v619, %v620
  %v634 = vsel %vm627, %v603, %v633
  %v635 = vsel %vm85, %v620, %v621
  %v636 = vsel %vm627, %v605, %v635
  %v637 = vsel %vm85, %v621, %v622
  %v638 = vsel %vm627, %v607, %v637
  %v639 = vsel %vm85, %v622, %v623
  %v640 = vsel %vm627, %v609, %v639
  %v641 = vsel %vm85, %v623, %v624
  %v642 = vsel %vm627, %v611, %v641
  %v643 = vsel %vm85, %v624, %v625
  %v644 = vsel %vm627, %v613, %v643
  %v645 = vsel %vm627, %v615, %v625
  %656 = vst [vmem:[#allocation2 + $0x214] sm:$0xff] %v628
  %657 = vst [vmem:[#allocation2 + $0x21c] sm:$0xff] %v630
  %658 = vst [vmem:[#allocation2 + $0x224] sm:$0xff] %v632
  %659 = vst [vmem:[#allocation2 + $0x22c] sm:$0xff] %v634
  %660 = vst [vmem:[#allocation2 + $0x234] sm:$0xff] %v636
  %661 = vst [vmem:[#allocation2 + $0x23c] sm:$0xff] %v638
  %662 = vst [vmem:[#allocation2 + $0x244] sm:$0xff] %v640
  %663 = vst [vmem:[#allocation2 + $0x24c] sm:$0xff] %v642
  %664 = vst [vmem:[#allocation2 + $0x254] sm:$0xff] %v644
  %665 = vst [vmem:[#allocation2 + $0x25c] sm:$0xf] %v645
  %v666 = vld [vmem:[%s0] sm:$0xff]
  %v667 = vld [vmem:[%s0 + $0x8] sm:$0xff]
  %v668 = vld [vmem:[%s0 + $0x10] sm:$0xff]
  %v669 = vld [vmem:[%s0 + $0x18] sm:$0xff]
  %v670 = vld [vmem:[%s0 + $0x20] sm:$0xff]
  %v671 = vld [vmem:[%s0 + $0x28] sm:$0xff]
  %v672 = vld [vmem:[%s0 + $0x30] sm:$0xff]
  %v673 = vld [vmem:[%s0 + $0x38] sm:$0xff]
  %v674 = vld [vmem:[%s0 + $0x40] sm:$0xff]
  %v675 = vld [vmem:[%s0 + $0x48] sm:$0xff]
  %686 = vrot.lane.b32.xlu0 %v666, 58
  %v687 = vpop.permute.xlu0 %686
  %688 = vrot.lane.b32.xlu0 %v667, 58
  %v689 = vpop.permute.xlu0 %688
  %690 = vrot.lane.b32.xlu0 %v668, 58
  %v691 = vpop.permute.xlu0 %690
  %692 = vrot.lane.b32.xlu0 %v669, 58
  %v693 = vpop.permute.xlu0 %692
  %694 = vrot.lane.b32.xlu0 %v670, 58
  %v695 = vpop.permute.xlu0 %694
  %696 = vrot.lane.b32.xlu0 %v671, 58
  %v697 = vpop.permute.xlu0 %696
  %698 = vrot.lane.b32.xlu0 %v672, 58
  %v699 = vpop.permute.xlu0 %698
  %700 = vrot.lane.b32.xlu0 %v673, 58
  %v701 = vpop.permute.xlu0 %700
  %702 = vrot.lane.b32.xlu0 %v674, 58
  %v703 = vpop.permute.xlu0 %702
  %704 = vrot.lane.b32.xlu0 %v675, 58
  %v705 = vpop.permute.xlu0 %704
  %v706 = vrot.slane %v687, 4
  %v707 = vrot.slane %v689, 4
  %v708 = vrot.slane %v691, 4
  %v709 = vrot.slane %v693, 4
  %v710 = vrot.slane %v695, 4
  %v711 = vrot.slane %v697, 4
  %v712 = vrot.slane %v699, 4
  %v713 = vrot.slane %v701, 4
  %v714 = vrot.slane %v703, 4
  %v715 = vrot.slane %v705, 4
  %v716 = vsel %vm85, %v706, %v707
  %vm717 = vcmask 474112
  %v718 = vsel %vm717, %v687, %v716
  %v719 = vsel %vm85, %v707, %v708
  %v720 = vsel %vm717, %v689, %v719
  %v721 = vsel %vm85, %v708, %v709
  %v722 = vsel %vm717, %v691, %v721
  %v723 = vsel %vm85, %v709, %v710
  %v724 = vsel %vm717, %v693, %v723
  %v725 = vsel %vm85, %v710, %v711
  %v726 = vsel %vm717, %v695, %v725
  %v727 = vsel %vm85, %v711, %v712
  %v728 = vsel %vm717, %v697, %v727
  %v729 = vsel %vm85, %v712, %v713
  %v730 = vsel %vm717, %v699, %v729
  %v731 = vsel %vm85, %v713, %v714
  %v732 = vsel %vm717, %v701, %v731
  %v733 = vsel %vm85, %v714, %v715
  %v734 = vsel %vm717, %v703, %v733
  %v735 = vsel %vm717, %v705, %v715
  %746 = vst [vmem:[#allocation2 + $0x260] sm:$0xff] %v718
  %747 = vst [vmem:[#allocation2 + $0x268] sm:$0xff] %v720
  %748 = vst [vmem:[#allocation2 + $0x270] sm:$0xff] %v722
  %749 = vst [vmem:[#allocation2 + $0x278] sm:$0xff] %v724
  %750 = vst [vmem:[#allocation2 + $0x280] sm:$0xff] %v726
  %751 = vst [vmem:[#allocation2 + $0x288] sm:$0xff] %v728
  %752 = vst [vmem:[#allocation2 + $0x290] sm:$0xff] %v730
  %753 = vst [vmem:[#allocation2 + $0x298] sm:$0xff] %v732
  %754 = vst [vmem:[#allocation2 + $0x2a0] sm:$0xff] %v734
  %755 = vst [vmem:[#allocation2 + $0x2a8] sm:$0xf] %v735
  %v756 = vld [vmem:[%s1] sm:$0x3]
  %v757 = vld [vmem:[#allocation2] sm:$0xff]
  %v758 = vld [vmem:[#allocation2 + $0x8] sm:$0xff]
  %v759 = vld [vmem:[#allocation2 + $0x10] sm:$0xff]
  %v760 = vld [vmem:[#allocation2 + $0x18] sm:$0xff]
  %v761 = vld [vmem:[#allocation2 + $0x20] sm:$0xff]
  %v762 = vld [vmem:[#allocation2 + $0x28] sm:$0xff]
  %v763 = vld [vmem:[#allocation2 + $0x30] sm:$0xff]
  %v764 = vld [vmem:[#allocation2 + $0x38] sm:$0xff]
  %v765 = vld [vmem:[#allocation2 + $0x40] sm:$0xff]
  %v766 = vld [vmem:[#allocation2 + $0x48] sm:$0xf]
  %v767 = vld [vmem:[#allocation2 + $0x4c] sm:$0xff]
  %v768 = vld [vmem:[#allocation2 + $0x54] sm:$0xff]
  %v769 = vld [vmem:[#allocation2 + $0x5c] sm:$0xff]
  %v770 = vld [vmem:[#allocation2 + $0x64] sm:$0xff]
  %v771 = vld [vmem:[#allocation2 + $0x6c] sm:$0xff]
  %v772 = vld [vmem:[#allocation2 + $0x74] sm:$0xff]
  %v773 = vld [vmem:[#allocation2 + $0x7c] sm:$0xff]
  %v774 = vld [vmem:[#allocation2 + $0x84] sm:$0xff]
  %v775 = vld [vmem:[#allocation2 + $0x8c] sm:$0xff]
  %v776 = vld [vmem:[#allocation2 + $0x94] sm:$0xf]
  %v777 = vld [vmem:[#allocation2 + $0x98] sm:$0xff]
  %v778 = vld [vmem:[#allocation2 + $0xa0] sm:$0xff]
  %v779 = vld [vmem:[#allocation2 + $0xa8] sm:$0xff]
  %v780 = vld [vmem:[#allocation2 + $0xb0] sm:$0xff]
  %v781 = vld [vmem:[#allocation2 + $0xb8] sm:$0xff]
  %v782 = vld [vmem:[#allocation2 + $0xc0] sm:$0xff]
  %v783 = vld [vmem:[#allocation2 + $0xc8] sm:$0xff]
  %v784 = vld [vmem:[#allocation2 + $0xd0] sm:$0xff]
  %v785 = vld [vmem:[#allocation2 + $0xd8] sm:$0xff]
  %v786 = vld [vmem:[#allocation2 + $0xe0] sm:$0xf]
  %v787 = vld [vmem:[#allocation2 + $0xe4] sm:$0xff]
  %v788 = vld [vmem:[#allocation2 + $0xec] sm:$0xff]
  %v789 = vld [vmem:[#allocation2 + $0xf4] sm:$0xff]
  %v790 = vld [vmem:[#allocation2 + $0xfc] sm:$0xff]
  %v791 = vld [vmem:[#allocation2 + $0x104] sm:$0xff]
  %v792 = vld [vmem:[#allocation2 + $0x10c] sm:$0xff]
  %v793 = vld [vmem:[#allocation2 + $0x114] sm:$0xff]
  %v794 = vld [vmem:[#allocation2 + $0x11c] sm:$0xff]
  %v795 = vld [vmem:[#allocation2 + $0x124] sm:$0xff]
  %v796 = vld [vmem:[#allocation2 + $0x12c] sm:$0xf]
  %v797 = vld [vmem:[#allocation2 + $0x130] sm:$0xff]
  %v798 = vld [vmem:[#allocation2 + $0x138] sm:$0xff]
  %v799 = vld [vmem:[#allocation2 + $0x140] sm:$0xff]
  %v800 = vld [vmem:[#allocation2 + $0x148] sm:$0xff]
  %v801 = vld [vmem:[#allocation2 + $0x150] sm:$0xff]
  %v802 = vld [vmem:[#allocation2 + $0x158] sm:$0xff]
  %v803 = vld [vmem:[#allocation2 + $0x160] sm:$0xff]
  %v804 = vld [vmem:[#allocation2 + $0x168] sm:$0xff]
  %v805 = vld [vmem:[#allocation2 + $0x170] sm:$0xff]
  %v806 = vld [vmem:[#allocation2 + $0x178] sm:$0xf]
  %v807 = vld [vmem:[#allocation2 + $0x17c] sm:$0xff]
  %v808 = vld [vmem:[#allocation2 + $0x184] sm:$0xff]
  %v809 = vld [vmem:[#allocation2 + $0x18c] sm:$0xff]
  %v810 = vld [vmem:[#allocation2 + $0x194] sm:$0xff]
  %v811 = vld [vmem:[#allocation2 + $0x19c] sm:$0xff]
  %v812 = vld [vmem:[#allocation2 + $0x1a4] sm:$0xff]
  %v813 = vld [vmem:[#allocation2 + $0x1ac] sm:$0xff]
  %v814 = vld [vmem:[#allocation2 + $0x1b4] sm:$0xff]
  %v815 = vld [vmem:[#allocation2 + $0x1bc] sm:$0xff]
  %v816 = vld [vmem:[#allocation2 + $0x1c4] sm:$0xf]
  %v817 = vld [vmem:[#allocation2 + $0x1c8] sm:$0xff]
  %v818 = vld [vmem:[#allocation2 + $0x1d0] sm:$0xff]
  %v819 = vld [vmem:[#allocation2 + $0x1d8] sm:$0xff]
  %v820 = vld [vmem:[#allocation2 + $0x1e0] sm:$0xff]
  %v821 = vld [vmem:[#allocation2 + $0x1e8] sm:$0xff]
  %v822 = vld [vmem:[#allocation2 + $0x1f0] sm:$0xff]
  %v823 = vld [vmem:[#allocation2 + $0x1f8] sm:$0xff]
  %v824 = vld [vmem:[#allocation2 + $0x200] sm:$0xff]
  %v825 = vld [vmem:[#allocation2 + $0x208] sm:$0xff]
  %v826 = vld [vmem:[#allocation2 + $0x210] sm:$0xf]
  %v827 = vld [vmem:[#allocation2 + $0x214] sm:$0xff]
  %v828 = vld [vmem:[#allocation2 + $0x21c] sm:$0xff]
  %v829 = vld [vmem:[#allocation2 + $0x224] sm:$0xff]
  %v830 = vld [vmem:[#allocation2 + $0x22c] sm:$0xff]
  %v831 = vld [vmem:[#allocation2 + $0x234] sm:$0xff]
  %v832 = vld [vmem:[#allocation2 + $0x23c] sm:$0xff]
  %v833 = vld [vmem:[#allocation2 + $0x244] sm:$0xff]
  %v834 = vld [vmem:[#allocation2 + $0x24c] sm:$0xff]
  %v835 = vld [vmem:[#allocation2 + $0x254] sm:$0xff]
  %v836 = vld [vmem:[#allocation2 + $0x25c] sm:$0xf]
  %v837 = vld [vmem:[#allocation2 + $0x260] sm:$0xff]
  %v838 = vld [vmem:[#allocation2 + $0x268] sm:$0xff]
  %v839 = vld [vmem:[#allocation2 + $0x270] sm:$0xff]
  %v840 = vld [vmem:[#allocation2 + $0x278] sm:$0xff]
  %v841 = vld [vmem:[#allocation2 + $0x280] sm:$0xff]
  %v842 = vld [vmem:[#allocation2 + $0x288] sm:$0xff]
  %v843 = vld [vmem:[#allocation2 + $0x290] sm:$0xff]
  %v844 = vld [vmem:[#allocation2 + $0x298] sm:$0xff]
  %v845 = vld [vmem:[#allocation2 + $0x2a0] sm:$0xff]
  %v846 = vld [vmem:[#allocation2 + $0x2a8] sm:$0xf]
  %v847 = vld [vmem:[%s2] sm:$0x7]
  %849 = vset.pattern.permute.xlu0 0
  %850 = vperm.xlu0 %849, %v847
  %v851 = vpop.permute.xlu0 %850
  %v943 = vunpack.c.l.b16 %v757
  %v944 = vunpack.c.h.b16 %v757
  %v945 = vunpack.c.l.b16 %v758
  %v946 = vunpack.c.h.b16 %v758
  %v947 = vunpack.c.l.b16 %v759
  %v948 = vunpack.c.h.b16 %v759
  %v949 = vunpack.c.l.b16 %v760
  %v950 = vunpack.c.h.b16 %v760
  %v951 = vunpack.c.l.b16 %v761
  %v952 = vunpack.c.h.b16 %v761
  %v953 = vunpack.c.l.b16 %v762
  %v954 = vunpack.c.h.b16 %v762
  %v955 = vunpack.c.l.b16 %v763
  %v956 = vunpack.c.h.b16 %v763
  %v957 = vunpack.c.l.b16 %v764
  %v958 = vunpack.c.h.b16 %v764
  %v959 = vunpack.c.l.b16 %v765
  %v960 = vunpack.c.h.b16 %v765
  %v961 = vunpack.c.l.b16 %v766
  %v962 = vunpack.c.l.b16 %v767
  %v963 = vunpack.c.h.b16 %v767
  %v964 = vunpack.c.l.b16 %v768
  %v965 = vunpack.c.h.b16 %v768
  %v966 = vunpack.c.l.b16 %v769
  %v967 = vunpack.c.h.b16 %v769
  %v968 = vunpack.c.l.b16 %v770
  %v969 = vunpack.c.h.b16 %v770
  %v970 = vunpack.c.l.b16 %v771
  %v971 = vunpack.c.h.b16 %v771
  %v972 = vunpack.c.l.b16 %v772
  %v973 = vunpack.c.h.b16 %v772
  %v974 = vunpack.c.l.b16 %v773
  %v975 = vunpack.c.h.b16 %v773
  %v976 = vunpack.c.l.b16 %v774
  %v977 = vunpack.c.h.b16 %v774
  %v978 = vunpack.c.l.b16 %v775
  %v979 = vunpack.c.h.b16 %v775
  %v980 = vunpack.c.l.b16 %v776
  %v981 = vunpack.c.l.b16 %v777
  %v982 = vunpack.c.h.b16 %v777
  %v983 = vunpack.c.l.b16 %v778
  %v984 = vunpack.c.h.b16 %v778
  %v985 = vunpack.c.l.b16 %v779
  %v986 = vunpack.c.h.b16 %v779
  %v987 = vunpack.c.l.b16 %v780
  %v988 = vunpack.c.h.b16 %v780
  %v989 = vunpack.c.l.b16 %v781
  %v990 = vunpack.c.h.b16 %v781
  %v991 = vunpack.c.l.b16 %v782
  %v992 = vunpack.c.h.b16 %v782
  %v993 = vunpack.c.l.b16 %v783
  %v994 = vunpack.c.h.b16 %v783
  %v995 = vunpack.c.l.b16 %v784
  %v996 = vunpack.c.h.b16 %v784
  %v997 = vunpack.c.l.b16 %v785
  %v998 = vunpack.c.h.b16 %v785
  %v999 = vunpack.c.l.b16 %v786
  %v1000 = vunpack.c.l.b16 %v787
  %v1001 = vunpack.c.h.b16 %v787
  %v1002 = vunpack.c.l.b16 %v788
  %v1003 = vunpack.c.h.b16 %v788
  %v1004 = vunpack.c.l.b16 %v789
  %v1005 = vunpack.c.h.b16 %v789
  %v1006 = vunpack.c.l.b16 %v790
  %v1007 = vunpack.c.h.b16 %v790
  %v1008 = vunpack.c.l.b16 %v791
  %v1009 = vunpack.c.h.b16 %v791
  %v1010 = vunpack.c.l.b16 %v792
  %v1011 = vunpack.c.h.b16 %v792
  %v1012 = vunpack.c.l.b16 %v793
  %v1013 = vunpack.c.h.b16 %v793
  %v1014 = vunpack.c.l.b16 %v794
  %v1015 = vunpack.c.h.b16 %v794
  %v1016 = vunpack.c.l.b16 %v795
  %v1017 = vunpack.c.h.b16 %v795
  %v1018 = vunpack.c.l.b16 %v796
  %v1019 = vunpack.c.l.b16 %v797
  %v1020 = vunpack.c.h.b16 %v797
  %v1021 = vunpack.c.l.b16 %v798
  %v1022 = vunpack.c.h.b16 %v798
  %v1023 = vunpack.c.l.b16 %v799
  %v1024 = vunpack.c.h.b16 %v799
  %v1025 = vunpack.c.l.b16 %v800
  %v1026 = vunpack.c.h.b16 %v800
  %v1027 = vunpack.c.l.b16 %v801
  %v1028 = vunpack.c.h.b16 %v801
  %v1029 = vunpack.c.l.b16 %v802
  %v1030 = vunpack.c.h.b16 %v802
  %v1031 = vunpack.c.l.b16 %v803
  %v1032 = vunpack.c.h.b16 %v803
  %v1033 = vunpack.c.l.b16 %v804
  %v1034 = vunpack.c.h.b16 %v804
  %v1035 = vunpack.c.l.b16 %v805
  %v1036 = vunpack.c.h.b16 %v805
  %v1037 = vunpack.c.l.b16 %v806
  %v1038 = vunpack.c.l.b16 %v807
  %v1039 = vunpack.c.h.b16 %v807
  %v1040 = vunpack.c.l.b16 %v808
  %v1041 = vunpack.c.h.b16 %v808
  %v1042 = vunpack.c.l.b16 %v809
  %v1043 = vunpack.c.h.b16 %v809
  %v1044 = vunpack.c.l.b16 %v810
  %v1045 = vunpack.c.h.b16 %v810
  %v1046 = vunpack.c.l.b16 %v811
  %v1047 = vunpack.c.h.b16 %v811
  %v1048 = vunpack.c.l.b16 %v812
  %v1049 = vunpack.c.h.b16 %v812
  %v1050 = vunpack.c.l.b16 %v813
  %v1051 = vunpack.c.h.b16 %v813
  %v1052 = vunpack.c.l.b16 %v814
  %v1053 = vunpack.c.h.b16 %v814
  %v1054 = vunpack.c.l.b16 %v815
  %v1055 = vunpack.c.h.b16 %v815
  %v1056 = vunpack.c.l.b16 %v816
  %v1057 = vunpack.c.l.b16 %v817
  %v1058 = vunpack.c.h.b16 %v817
  %v1059 = vunpack.c.l.b16 %v818
  %v1060 = vunpack.c.h.b16 %v818
  %v1061 = vunpack.c.l.b16 %v819
  %v1062 = vunpack.c.h.b16 %v819
  %v1063 = vunpack.c.l.b16 %v820
  %v1064 = vunpack.c.h.b16 %v820
  %v1065 = vunpack.c.l.b16 %v821
  %v1066 = vunpack.c.h.b16 %v821
  %v1067 = vunpack.c.l.b16 %v822
  %v1068 = vunpack.c.h.b16 %v822
  %v1069 = vunpack.c.l.b16 %v823
  %v1070 = vunpack.c.h.b16 %v823
  %v1071 = vunpack.c.l.b16 %v824
  %v1072 = vunpack.c.h.b16 %v824
  %v1073 = vunpack.c.l.b16 %v825
  %v1074 = vunpack.c.h.b16 %v825
  %v1075 = vunpack.c.l.b16 %v826
  %v1076 = vunpack.c.l.b16 %v827
  %v1077 = vunpack.c.h.b16 %v827
  %v1078 = vunpack.c.l.b16 %v828
  %v1079 = vunpack.c.h.b16 %v828
  %v1080 = vunpack.c.l.b16 %v829
  %v1081 = vunpack.c.h.b16 %v829
  %v1082 = vunpack.c.l.b16 %v830
  %v1083 = vunpack.c.h.b16 %v830
  %v1084 = vunpack.c.l.b16 %v831
  %v1085 = vunpack.c.h.b16 %v831
  %v1086 = vunpack.c.l.b16 %v832
  %v1087 = vunpack.c.h.b16 %v832
  %v1088 = vunpack.c.l.b16 %v833
  %v1089 = vunpack.c.h.b16 %v833
  %v1090 = vunpack.c.l.b16 %v834
  %v1091 = vunpack.c.h.b16 %v834
  %v1092 = vunpack.c.l.b16 %v835
  %v1093 = vunpack.c.h.b16 %v835
  %v1094 = vunpack.c.l.b16 %v836
  %v1095 = vunpack.c.l.b16 %v837
  %v1096 = vunpack.c.h.b16 %v837
  %v1097 = vunpack.c.l.b16 %v838
  %v1098 = vunpack.c.h.b16 %v838
  %v1099 = vunpack.c.l.b16 %v839
  %v1100 = vunpack.c.h.b16 %v839
  %v1101 = vunpack.c.l.b16 %v840
  %v1102 = vunpack.c.h.b16 %v840
  %v1103 = vunpack.c.l.b16 %v841
  %v1104 = vunpack.c.h.b16 %v841
  %v1105 = vunpack.c.l.b16 %v842
  %v1106 = vunpack.c.h.b16 %v842
  %v1107 = vunpack.c.l.b16 %v843
  %v1108 = vunpack.c.h.b16 %v843
  %v1109 = vunpack.c.l.b16 %v844
  %v1110 = vunpack.c.h.b16 %v844
  %v1111 = vunpack.c.l.b16 %v845
  %v1112 = vunpack.c.h.b16 %v845
  %v1113 = vunpack.c.l.b16 %v846
  %v1114 = vpack.c.b16 %v962, %v943
  %v1115 = vpack.c.b16 %v963, %v944
  %v1116 = vpack.c.b16 %v964, %v945
  %v1117 = vpack.c.b16 %v965, %v946
  %v1118 = vpack.c.b16 %v966, %v947
  %v1119 = vpack.c.b16 %v967, %v948
  %v1120 = vpack.c.b16 %v968, %v949
  %v1121 = vpack.c.b16 %v969, %v950
  %v1122 = vpack.c.b16 %v970, %v951
  %v1123 = vpack.c.b16 %v971, %v952
  %v1124 = vpack.c.b16 %v972, %v953
  %v1125 = vpack.c.b16 %v973, %v954
  %v1126 = vpack.c.b16 %v974, %v955
  %v1127 = vpack.c.b16 %v975, %v956
  %v1128 = vpack.c.b16 %v976, %v957
  %v1129 = vpack.c.b16 %v977, %v958
  %v1130 = vpack.c.b16 %v978, %v959
  %v1131 = vpack.c.b16 %v979, %v960
  %v1132 = vpack.c.b16 %v980, %v961
  %v1133 = vpack.c.b16 %v1000, %v981
  %v1134 = vpack.c.b16 %v1001, %v982
  %v1135 = vpack.c.b16 %v1002, %v983
  %v1136 = vpack.c.b16 %v1003, %v984
  %v1137 = vpack.c.b16 %v1004, %v985
  %v1138 = vpack.c.b16 %v1005, %v986
  %v1139 = vpack.c.b16 %v1006, %v987
  %v1140 = vpack.c.b16 %v1007, %v988
  %v1141 = vpack.c.b16 %v1008, %v989
  %v1142 = vpack.c.b16 %v1009, %v990
  %v1143 = vpack.c.b16 %v1010, %v991
  %v1144 = vpack.c.b16 %v1011, %v992
  %v1145 = vpack.c.b16 %v1012, %v993
  %v1146 = vpack.c.b16 %v1013, %v994
  %v1147 = vpack.c.b16 %v1014, %v995
  %v1148 = vpack.c.b16 %v1015, %v996
  %v1149 = vpack.c.b16 %v1016, %v997
  %v1150 = vpack.c.b16 %v1017, %v998
  %v1151 = vpack.c.b16 %v1018, %v999
  %v1152 = vpack.c.b16 %v1038, %v1019
  %v1153 = vpack.c.b16 %v1039, %v1020
  %v1154 = vpack.c.b16 %v1040, %v1021
  %v1155 = vpack.c.b16 %v1041, %v1022
  %v1156 = vpack.c.b16 %v1042, %v1023
  %v1157 = vpack.c.b16 %v1043, %v1024
  %v1158 = vpack.c.b16 %v1044, %v1025
  %v1159 = vpack.c.b16 %v1045, %v1026
  %v1160 = vpack.c.b16 %v1046, %v1027
  %v1161 = vpack.c.b16 %v1047, %v1028
  %v1162 = vpack.c.b16 %v1048, %v1029
  %v1163 = vpack.c.b16 %v1049, %v1030
  %v1164 = vpack.c.b16 %v1050, %v1031
  %v1165 = vpack.c.b16 %v1051, %v1032
  %v1166 = vpack.c.b16 %v1052, %v1033
  %v1167 = vpack.c.b16 %v1053, %v1034
  %v1168 = vpack.c.b16 %v1054, %v1035
  %v1169 = vpack.c.b16 %v1055, %v1036
  %v1170 = vpack.c.b16 %v1056, %v1037
  %v1171 = vpack.c.b16 %v1076, %v1057
  %v1172 = vpack.c.b16 %v1077, %v1058
  %v1173 = vpack.c.b16 %v1078, %v1059
  %v1174 = vpack.c.b16 %v1079, %v1060
  %v1175 = vpack.c.b16 %v1080, %v1061
  %v1176 = vpack.c.b16 %v1081, %v1062
  %v1177 = vpack.c.b16 %v1082, %v1063
  %v1178 = vpack.c.b16 %v1083, %v1064
  %v1179 = vpack.c.b16 %v1084, %v1065
  %v1180 = vpack.c.b16 %v1085, %v1066
  %v1181 = vpack.c.b16 %v1086, %v1067
  %v1182 = vpack.c.b16 %v1087, %v1068
  %v1183 = vpack.c.b16 %v1088, %v1069
  %v1184 = vpack.c.b16 %v1089, %v1070
  %v1185 = vpack.c.b16 %v1090, %v1071
  %v1186 = vpack.c.b16 %v1091, %v1072
  %v1187 = vpack.c.b16 %v1092, %v1073
  %v1188 = vpack.c.b16 %v1093, %v1074
  %v1189 = vpack.c.b16 %v1094, %v1075
  %v1190 = vpack.c.b16 %v1095, %v1095
  %v1191 = vpack.c.b16 %v1096, %v1096
  %v1192 = vpack.c.b16 %v1097, %v1097
  %v1193 = vpack.c.b16 %v1098, %v1098
  %v1194 = vpack.c.b16 %v1099, %v1099
  %v1195 = vpack.c.b16 %v1100, %v1100
  %v1196 = vpack.c.b16 %v1101, %v1101
  %v1197 = vpack.c.b16 %v1102, %v1102
  %v1198 = vpack.c.b16 %v1103, %v1103
  %v1199 = vpack.c.b16 %v1104, %v1104
  %v1200 = vpack.c.b16 %v1105, %v1105
  %v1201 = vpack.c.b16 %v1106, %v1106
  %v1202 = vpack.c.b16 %v1107, %v1107
  %v1203 = vpack.c.b16 %v1108, %v1108
  %v1204 = vpack.c.b16 %v1109, %v1109
  %v1205 = vpack.c.b16 %v1110, %v1110
  %v1206 = vpack.c.b16 %v1111, %v1111
  %v1207 = vpack.c.b16 %v1112, %v1112
  %v1208 = vpack.c.b16 %v1113, %v1113
  %vm1285 = vcmask 588800
  %v1287 = vsel %vm1285, %v756, 0
  %vm1289 = vcmask 1043456
  %v1291 = vsel %vm1289, %v1190, 0
  %v1294 = vsel %vm1289, %v1191, 0
  %v1297 = vsel %vm1289, %v1192, 0
  %v1300 = vsel %vm1289, %v1193, 0
  %v1303 = vsel %vm1289, %v1194, 0
  %v1306 = vsel %vm1289, %v1195, 0
  %v1309 = vsel %vm1289, %v1196, 0
  %v1312 = vsel %vm1289, %v1197, 0
  %v1315 = vsel %vm1289, %v1198, 0
  %v1318 = vsel %vm1289, %v1199, 0
  %v1321 = vsel %vm1289, %v1200, 0
  %v1324 = vsel %vm1289, %v1201, 0
  %v1327 = vsel %vm1289, %v1202, 0
  %v1330 = vsel %vm1289, %v1203, 0
  %v1333 = vsel %vm1289, %v1204, 0
  %v1336 = vsel %vm1289, %v1205, 0
  %v1339 = vsel %vm1289, %v1206, 0
  %v1342 = vsel %vm1289, %v1207, 0
  %v1345 = vsel %vm1289, %v1208, 0
  %1347 = vmatprep.subr.bf16.mxu0 0
  %1348 = vmatpush1.bf16.msra.mxu0 0
  %1349 = vmatprep.subr.bf16.mxu0 0
  %1350 = vmatpush1.bf16.msra.mxu0 0
  %1351 = vmatprep.subr.bf16.mxu0 0
  %1352 = vmatpush1.bf16.msra.mxu0 0
  %1353 = vmatprep.subr.bf16.mxu0 %v1294
  %1354 = vmatpush1.bf16.msra.mxu0 %v1291
  %1355 = vmatprep.subr.bf16.mxu0 %v1172
  %1356 = vmatpush1.bf16.msra.mxu0 %v1171
  %1357 = vmatprep.subr.bf16.mxu0 %v1153
  %1358 = vmatpush1.bf16.msra.mxu0 %v1152
  %1359 = vmatprep.subr.bf16.mxu0 %v1134
  %1360 = vmatpush1.bf16.msra.mxu0 %v1133
  %1361 = vmatprep.subr.bf16.mxu0 %v1115
  %1362 = vmatpush1.bf16.msra.mxu0 %v1114
  %1363 = vmatprep.subr.bf16.mxu0 0
  %1364 = vmatpush2.bf16.msra.mxu0 0
  %1365 = vmatprep.subr.bf16.mxu0 0
  %1366 = vmatpush2.bf16.msra.mxu0 0
  %1367 = vmatprep.subr.bf16.mxu0 0
  %1368 = vmatpush2.bf16.msra.mxu0 0
  %1369 = vmatprep.subr.bf16.mxu0 0
  %1370 = vmatpush2.bf16.msra.mxu0 0
  %1371 = vmatprep.subr.bf16.mxu0 0
  %1372 = vmatpush2.bf16.msra.mxu0 0
  %1373 = vmatprep.subr.bf16.mxu0 0
  %1374 = vmatpush2.bf16.msra.mxu0 0
  %1375 = vmatprep.subr.bf16.mxu0 0
  %1376 = vmatpush2.bf16.msra.mxu0 0
  %1377 = vmatprep.subr.bf16.mxu0 0
  %1378 = vmatpush2.bf16.msra.mxu0 0
  %1379 = vmatprep.mubr.bf16.mxu0 0
  %1380 = vmatmul.mubr.bf16.gmra.mxu0 %v1287
  %v1381 = vpop.f32.mrf.mxu0
  %v1382 = vadd.f32 %v851, %v1381
  %v1383 = vpop.f32.mrf.mxu0
  %v1384 = vadd.f32 %v851, %v1383
  %v1385 = vpop.f32.mrf.mxu0
  %v1386 = vpop.f32.mrf.mxu0
  %1387 = vdwg.mxu0
  %1388 = vmatprep.subr.bf16.mxu0 0
  %1389 = vmatpush1.bf16.msra.mxu0 0
  %1390 = vmatprep.subr.bf16.mxu0 0
  %1391 = vmatpush1.bf16.msra.mxu0 0
  %1392 = vmatprep.subr.bf16.mxu0 0
  %1393 = vmatpush1.bf16.msra.mxu0 0
  %1394 = vmatprep.subr.bf16.mxu0 %v1300
  %1395 = vmatpush1.bf16.msra.mxu0 %v1297
  %1396 = vmatprep.subr.bf16.mxu0 %v1174
  %1397 = vmatpush1.bf16.msra.mxu0 %v1173
  %1398 = vmatprep.subr.bf16.mxu0 %v1155
  %1399 = vmatpush1.bf16.msra.mxu0 %v1154
  %1400 = vmatprep.subr.bf16.mxu0 %v1136
  %1401 = vmatpush1.bf16.msra.mxu0 %v1135
  %1402 = vmatprep.subr.bf16.mxu0 %v1117
  %1403 = vmatpush1.bf16.msra.mxu0 %v1116
  %1404 = vmatprep.subr.bf16.mxu0 0
  %1405 = vmatpush2.bf16.msra.mxu0 0
  %1406 = vmatprep.subr.bf16.mxu0 0
  %1407 = vmatpush2.bf16.msra.mxu0 0
  %1408 = vmatprep.subr.bf16.mxu0 0
  %1409 = vmatpush2.bf16.msra.mxu0 0
  %1410 = vmatprep.subr.bf16.mxu0 0
  %1411 = vmatpush2.bf16.msra.mxu0 0
  %1412 = vmatprep.subr.bf16.mxu0 0
  %1413 = vmatpush2.bf16.msra.mxu0 0
  %1414 = vmatprep.subr.bf16.mxu0 0
  %1415 = vmatpush2.bf16.msra.mxu0 0
  %1416 = vmatprep.subr.bf16.mxu0 0
  %1417 = vmatpush2.bf16.msra.mxu0 0
  %1418 = vmatprep.subr.bf16.mxu0 0
  %1419 = vmatpush2.bf16.msra.mxu0 0
  %1420 = vmatprep.mubr.bf16.mxu0 0
  %1421 = vmatmul.mubr.bf16.gmra.mxu0 %v1287
  %v1422 = vpop.f32.mrf.mxu0
  %v1423 = vadd.f32 %v851, %v1422
  %v1424 = vpop.f32.mrf.mxu0
  %v1425 = vadd.f32 %v851, %v1424
  %v1426 = vpop.f32.mrf.mxu0
  %v1427 = vpop.f32.mrf.mxu0
  %1428 = vdwg.mxu0
  %1429 = vmatprep.subr.bf16.mxu0 0
  %1430 = vmatpush1.bf16.msra.mxu0 0
  %1431 = vmatprep.subr.bf16.mxu0 0
  %1432 = vmatpush1.bf16.msra.mxu0 0
  %1433 = vmatprep.subr.bf16.mxu0 0
  %1434 = vmatpush1.bf16.msra.mxu0 0
  %1435 = vmatprep.subr.bf16.mxu0 %v1306
  %1436 = vmatpush1.bf16.msra.mxu0 %v1303
  %1437 = vmatprep.subr.bf16.mxu0 %v1176
  %1438 = vmatpush1.bf16.msra.mxu0 %v1175
  %1439 = vmatprep.subr.bf16.mxu0 %v1157
  %1440 = vmatpush1.bf16.msra.mxu0 %v1156
  %1441 = vmatprep.subr.bf16.mxu0 %v1138
  %1442 = vmatpush1.bf16.msra.mxu0 %v1137
  %1443 = vmatprep.subr.bf16.mxu0 %v1119
  %1444 = vmatpush1.bf16.msra.mxu0 %v1118
  %1445 = vmatprep.subr.bf16.mxu0 0
  %1446 = vmatpush2.bf16.msra.mxu0 0
  %1447 = vmatprep.subr.bf16.mxu0 0
  %1448 = vmatpush2.bf16.msra.mxu0 0
  %1449 = vmatprep.subr.bf16.mxu0 0
  %1450 = vmatpush2.bf16.msra.mxu0 0
  %1451 = vmatprep.subr.bf16.mxu0 0
  %1452 = vmatpush2.bf16.msra.mxu0 0
  %1453 = vmatprep.subr.bf16.mxu0 0
  %1454 = vmatpush2.bf16.msra.mxu0 0
  %1455 = vmatprep.subr.bf16.mxu0 0
  %1456 = vmatpush2.bf16.msra.mxu0 0
  %1457 = vmatprep.subr.bf16.mxu0 0
  %1458 = vmatpush2.bf16.msra.mxu0 0
  %1459 = vmatprep.subr.bf16.mxu0 0
  %1460 = vmatpush2.bf16.msra.mxu0 0
  %1461 = vmatprep.mubr.bf16.mxu0 0
  %1462 = vmatmul.mubr.bf16.gmra.mxu0 %v1287
  %v1463 = vpop.f32.mrf.mxu0
  %v1464 = vadd.f32 %v851, %v1463
  %v1465 = vpop.f32.mrf.mxu0
  %v1466 = vadd.f32 %v851, %v1465
  %v1467 = vpop.f32.mrf.mxu0
  %v1468 = vpop.f32.mrf.mxu0
  %1469 = vdwg.mxu0
  %1470 = vmatprep.subr.bf16.mxu0 0
  %1471 = vmatpush1.bf16.msra.mxu0 0
  %1472 = vmatprep.subr.bf16.mxu0 0
  %1473 = vmatpush1.bf16.msra.mxu0 0
  %1474 = vmatprep.subr.bf16.mxu0 0
  %1475 = vmatpush1.bf16.msra.mxu0 0
  %1476 = vmatprep.subr.bf16.mxu0 %v1312
  %1477 = vmatpush1.bf16.msra.mxu0 %v1309
  %1478 = vmatprep.subr.bf16.mxu0 %v1178
  %1479 = vmatpush1.bf16.msra.mxu0 %v1177
  %1480 = vmatprep.subr.bf16.mxu0 %v1159
  %1481 = vmatpush1.bf16.msra.mxu0 %v1158
  %1482 = vmatprep.subr.bf16.mxu0 %v1140
  %1483 = vmatpush1.bf16.msra.mxu0 %v1139
  %1484 = vmatprep.subr.bf16.mxu0 %v1121
  %1485 = vmatpush1.bf16.msra.mxu0 %v1120
  %1486 = vmatprep.subr.bf16.mxu0 0
  %1487 = vmatpush2.bf16.msra.mxu0 0
  %1488 = vmatprep.subr.bf16.mxu0 0
  %1489 = vmatpush2.bf16.msra.mxu0 0
  %1490 = vmatprep.subr.bf16.mxu0 0
  %1491 = vmatpush2.bf16.msra.mxu0 0
  %1492 = vmatprep.subr.bf16.mxu0 0
  %1493 = vmatpush2.bf16.msra.mxu0 0
  %1494 = vmatprep.subr.bf16.mxu0 0
  %1495 = vmatpush2.bf16.msra.mxu0 0
  %1496 = vmatprep.subr.bf16.mxu0 0
  %1497 = vmatpush2.bf16.msra.mxu0 0
  %1498 = vmatprep.subr.bf16.mxu0 0
  %1499 = vmatpush2.bf16.msra.mxu0 0
  %1500 = vmatprep.subr.bf16.mxu0 0
  %1501 = vmatpush2.bf16.msra.mxu0 0
  %1502 = vmatprep.mubr.bf16.mxu0 0
  %1503 = vmatmul.mubr.bf16.gmra.mxu0 %v1287
  %v1504 = vpop.f32.mrf.mxu0
  %v1505 = vadd.f32 %v851, %v1504
  %v1506 = vpop.f32.mrf.mxu0
  %v1507 = vadd.f32 %v851, %v1506
  %v1508 = vpop.f32.mrf.mxu0
  %v1509 = vpop.f32.mrf.mxu0
  %1510 = vdwg.mxu0
  %1511 = vmatprep.subr.bf16.mxu0 0
  %1512 = vmatpush1.bf16.msra.mxu0 0
  %1513 = vmatprep.subr.bf16.mxu0 0
  %1514 = vmatpush1.bf16.msra.mxu0 0
  %1515 = vmatprep.subr.bf16.mxu0 0
  %1516 = vmatpush1.bf16.msra.mxu0 0
  %1517 = vmatprep.subr.bf16.mxu0 %v1318
  %1518 = vmatpush1.bf16.msra.mxu0 %v1315
  %1519 = vmatprep.subr.bf16.mxu0 %v1180
  %1520 = vmatpush1.bf16.msra.mxu0 %v1179
  %1521 = vmatprep.subr.bf16.mxu0 %v1161
  %1522 = vmatpush1.bf16.msra.mxu0 %v1160
  %1523 = vmatprep.subr.bf16.mxu0 %v1142
  %1524 = vmatpush1.bf16.msra.mxu0 %v1141
  %1525 = vmatprep.subr.bf16.mxu0 %v1123
  %1526 = vmatpush1.bf16.msra.mxu0 %v1122
  %1527 = vmatprep.subr.bf16.mxu0 0
  %1528 = vmatpush2.bf16.msra.mxu0 0
  %1529 = vmatprep.subr.bf16.mxu0 0
  %1530 = vmatpush2.bf16.msra.mxu0 0
  %1531 = vmatprep.subr.bf16.mxu0 0
  %1532 = vmatpush2.bf16.msra.mxu0 0
  %1533 = vmatprep.subr.bf16.mxu0 0
  %1534 = vmatpush2.bf16.msra.mxu0 0
  %1535 = vmatprep.subr.bf16.mxu0 0
  %1536 = vmatpush2.bf16.msra.mxu0 0
  %1537 = vmatprep.subr.bf16.mxu0 0
  %1538 = vmatpush2.bf16.msra.mxu0 0
  %1539 = vmatprep.subr.bf16.mxu0 0
  %1540 = vmatpush2.bf16.msra.mxu0 0
  %1541 = vmatprep.subr.bf16.mxu0 0
  %1542 = vmatpush2.bf16.msra.mxu0 0
  %1543 = vmatprep.mubr.bf16.mxu0 0
  %1544 = vmatmul.mubr.bf16.gmra.mxu0 %v1287
  %v1545 = vpop.f32.mrf.mxu0
  %v1546 = vadd.f32 %v851, %v1545
  %v1547 = vpop.f32.mrf.mxu0
  %v1548 = vadd.f32 %v851, %v1547
  %v1549 = vpop.f32.mrf.mxu0
  %v1550 = vpop.f32.mrf.mxu0
  %1551 = vdwg.mxu0
  %1552 = vmatprep.subr.bf16.mxu0 0
  %1553 = vmatpush1.bf16.msra.mxu0 0
  %1554 = vmatprep.subr.bf16.mxu0 0
  %1555 = vmatpush1.bf16.msra.mxu0 0
  %1556 = vmatprep.subr.bf16.mxu0 0
  %1557 = vmatpush1.bf16.msra.mxu0 0
  %1558 = vmatprep.subr.bf16.mxu0 %v1324
  %1559 = vmatpush1.bf16.msra.mxu0 %v1321
  %1560 = vmatprep.subr.bf16.mxu0 %v1182
  %1561 = vmatpush1.bf16.msra.mxu0 %v1181
  %1562 = vmatprep.subr.bf16.mxu0 %v1163
  %1563 = vmatpush1.bf16.msra.mxu0 %v1162
  %1564 = vmatprep.subr.bf16.mxu0 %v1144
  %1565 = vmatpush1.bf16.msra.mxu0 %v1143
  %1566 = vmatprep.subr.bf16.mxu0 %v1125
  %1567 = vmatpush1.bf16.msra.mxu0 %v1124
  %1568 = vmatprep.subr.bf16.mxu0 0
  %1569 = vmatpush2.bf16.msra.mxu0 0
  %1570 = vmatprep.subr.bf16.mxu0 0
  %1571 = vmatpush2.bf16.msra.mxu0 0
  %1572 = vmatprep.subr.bf16.mxu0 0
  %1573 = vmatpush2.bf16.msra.mxu0 0
  %1574 = vmatprep.subr.bf16.mxu0 0
  %1575 = vmatpush2.bf16.msra.mxu0 0
  %1576 = vmatprep.subr.bf16.mxu0 0
  %1577 = vmatpush2.bf16.msra.mxu0 0
  %1578 = vmatprep.subr.bf16.mxu0 0
  %1579 = vmatpush2.bf16.msra.mxu0 0
  %1580 = vmatprep.subr.bf16.mxu0 0
  %1581 = vmatpush2.bf16.msra.mxu0 0
  %1582 = vmatprep.subr.bf16.mxu0 0
  %1583 = vmatpush2.bf16.msra.mxu0 0
  %1584 = vmatprep.mubr.bf16.mxu0 0
  %1585 = vmatmul.mubr.bf16.gmra.mxu0 %v1287
  %v1586 = vpop.f32.mrf.mxu0
  %v1587 = vadd.f32 %v851, %v1586
  %v1588 = vpop.f32.mrf.mxu0
  %v1589 = vadd.f32 %v851, %v1588
  %v1590 = vpop.f32.mrf.mxu0
  %v1591 = vpop.f32.mrf.mxu0
  %1592 = vdwg.mxu0
  %1593 = vmatprep.subr.bf16.mxu0 0
  %1594 = vmatpush1.bf16.msra.mxu0 0
  %1595 = vmatprep.subr.bf16.mxu0 0
  %1596 = vmatpush1.bf16.msra.mxu0 0
  %1597 = vmatprep.subr.bf16.mxu0 0
  %1598 = vmatpush1.bf16.msra.mxu0 0
  %1599 = vmatprep.subr.bf16.mxu0 %v1330
  %1600 = vmatpush1.bf16.msra.mxu0 %v1327
  %1601 = vmatprep.subr.bf16.mxu0 %v1184
  %1602 = vmatpush1.bf16.msra.mxu0 %v1183
  %1603 = vmatprep.subr.bf16.mxu0 %v1165
  %1604 = vmatpush1.bf16.msra.mxu0 %v1164
  %1605 = vmatprep.subr.bf16.mxu0 %v1146
  %1606 = vmatpush1.bf16.msra.mxu0 %v1145
  %1607 = vmatprep.subr.bf16.mxu0 %v1127
  %1608 = vmatpush1.bf16.msra.mxu0 %v1126
  %1609 = vmatprep.subr.bf16.mxu0 0
  %1610 = vmatpush2.bf16.msra.mxu0 0
  %1611 = vmatprep.subr.bf16.mxu0 0
  %1612 = vmatpush2.bf16.msra.mxu0 0
  %1613 = vmatprep.subr.bf16.mxu0 0
  %1614 = vmatpush2.bf16.msra.mxu0 0
  %1615 = vmatprep.subr.bf16.mxu0 0
  %1616 = vmatpush2.bf16.msra.mxu0 0
  %1617 = vmatprep.subr.bf16.mxu0 0
  %1618 = vmatpush2.bf16.msra.mxu0 0
  %1619 = vmatprep.subr.bf16.mxu0 0
  %1620 = vmatpush2.bf16.msra.mxu0 0
  %1621 = vmatprep.subr.bf16.mxu0 0
  %1622 = vmatpush2.bf16.msra.mxu0 0
  %1623 = vmatprep.subr.bf16.mxu0 0
  %1624 = vmatpush2.bf16.msra.mxu0 0
  %1625 = vmatprep.mubr.bf16.mxu0 0
  %1626 = vmatmul.mubr.bf16.gmra.mxu0 %v1287
  %v1627 = vpop.f32.mrf.mxu0
  %v1628 = vadd.f32 %v851, %v1627
  %v1629 = vpop.f32.mrf.mxu0
  %v1630 = vadd.f32 %v851, %v1629
  %v1631 = vpop.f32.mrf.mxu0
  %v1632 = vpop.f32.mrf.mxu0
  %1633 = vdwg.mxu0
  %1634 = vmatprep.subr.bf16.mxu0 0
  %1635 = vmatpush1.bf16.msra.mxu0 0
  %1636 = vmatprep.subr.bf16.mxu0 0
  %1637 = vmatpush1.bf16.msra.mxu0 0
  %1638 = vmatprep.subr.bf16.mxu0 0
  %1639 = vmatpush1.bf16.msra.mxu0 0
  %1640 = vmatprep.subr.bf16.mxu0 %v1336
  %1641 = vmatpush1.bf16.msra.mxu0 %v1333
  %1642 = vmatprep.subr.bf16.mxu0 %v1186
  %1643 = vmatpush1.bf16.msra.mxu0 %v1185
  %1644 = vmatprep.subr.bf16.mxu0 %v1167
  %1645 = vmatpush1.bf16.msra.mxu0 %v1166
  %1646 = vmatprep.subr.bf16.mxu0 %v1148
  %1647 = vmatpush1.bf16.msra.mxu0 %v1147
  %1648 = vmatprep.subr.bf16.mxu0 %v1129
  %1649 = vmatpush1.bf16.msra.mxu0 %v1128
  %1650 = vmatprep.subr.bf16.mxu0 0
  %1651 = vmatpush2.bf16.msra.mxu0 0
  %1652 = vmatprep.subr.bf16.mxu0 0
  %1653 = vmatpush2.bf16.msra.mxu0 0
  %1654 = vmatprep.subr.bf16.mxu0 0
  %1655 = vmatpush2.bf16.msra.mxu0 0
  %1656 = vmatprep.subr.bf16.mxu0 0
  %1657 = vmatpush2.bf16.msra.mxu0 0
  %1658 = vmatprep.subr.bf16.mxu0 0
  %1659 = vmatpush2.bf16.msra.mxu0 0
  %1660 = vmatprep.subr.bf16.mxu0 0
  %1661 = vmatpush2.bf16.msra.mxu0 0
  %1662 = vmatprep.subr.bf16.mxu0 0
  %1663 = vmatpush2.bf16.msra.mxu0 0
  %1664 = vmatprep.subr.bf16.mxu0 0
  %1665 = vmatpush2.bf16.msra.mxu0 0
  %1666 = vmatprep.mubr.bf16.mxu0 0
  %1667 = vmatmul.mubr.bf16.gmra.mxu0 %v1287
  %v1668 = vpop.f32.mrf.mxu0
  %v1669 = vadd.f32 %v851, %v1668
  %v1670 = vpop.f32.mrf.mxu0
  %v1671 = vadd.f32 %v851, %v1670
  %v1672 = vpop.f32.mrf.mxu0
  %v1673 = vpop.f32.mrf.mxu0
  %1674 = vdwg.mxu0
  %1675 = vmatprep.subr.bf16.mxu0 0
  %1676 = vmatpush1.bf16.msra.mxu0 0
  %1677 = vmatprep.subr.bf16.mxu0 0
  %1678 = vmatpush1.bf16.msra.mxu0 0
  %1679 = vmatprep.subr.bf16.mxu0 0
  %1680 = vmatpush1.bf16.msra.mxu0 0
  %1681 = vmatprep.subr.bf16.mxu0 %v1342
  %1682 = vmatpush1.bf16.msra.mxu0 %v1339
  %1683 = vmatprep.subr.bf16.mxu0 %v1188
  %1684 = vmatpush1.bf16.msra.mxu0 %v1187
  %1685 = vmatprep.subr.bf16.mxu0 %v1169
  %1686 = vmatpush1.bf16.msra.mxu0 %v1168
  %1687 = vmatprep.subr.bf16.mxu0 %v1150
  %1688 = vmatpush1.bf16.msra.mxu0 %v1149
  %1689 = vmatprep.subr.bf16.mxu0 %v1131
  %1690 = vmatpush1.bf16.msra.mxu0 %v1130
  %1691 = vmatprep.subr.bf16.mxu0 0
  %1692 = vmatpush2.bf16.msra.mxu0 0
  %1693 = vmatprep.subr.bf16.mxu0 0
  %1694 = vmatpush2.bf16.msra.mxu0 0
  %1695 = vmatprep.subr.bf16.mxu0 0
  %1696 = vmatpush2.bf16.msra.mxu0 0
  %1697 = vmatprep.subr.bf16.mxu0 0
  %1698 = vmatpush2.bf16.msra.mxu0 0
  %1699 = vmatprep.subr.bf16.mxu0 0
  %1700 = vmatpush2.bf16.msra.mxu0 0
  %1701 = vmatprep.subr.bf16.mxu0 0
  %1702 = vmatpush2.bf16.msra.mxu0 0
  %1703 = vmatprep.subr.bf16.mxu0 0
  %1704 = vmatpush2.bf16.msra.mxu0 0
  %1705 = vmatprep.subr.bf16.mxu0 0
  %1706 = vmatpush2.bf16.msra.mxu0 0
  %1707 = vmatprep.mubr.bf16.mxu0 0
  %1708 = vmatmul.mubr.bf16.gmra.mxu0 %v1287
  %v1709 = vpop.f32.mrf.mxu0
  %v1710 = vadd.f32 %v851, %v1709
  %v1711 = vpop.f32.mrf.mxu0
  %v1712 = vadd.f32 %v851, %v1711
  %v1713 = vpop.f32.mrf.mxu0
  %v1714 = vpop.f32.mrf.mxu0
  %1715 = vdwg.mxu0
  %1716 = vmatprep.subr.bf16.mxu0 0
  %1717 = vmatpush1.bf16.msra.mxu0 0
  %1718 = vmatprep.subr.bf16.mxu0 0
  %1719 = vmatpush1.bf16.msra.mxu0 0
  %1720 = vmatprep.subr.bf16.mxu0 0
  %1721 = vmatpush1.bf16.msra.mxu0 0
  %1722 = vmatprep.subr.bf16.mxu0 0
  %1723 = vmatpush1.bf16.msra.mxu0 %v1345
  %1724 = vmatprep.subr.bf16.mxu0 0
  %1725 = vmatpush1.bf16.msra.mxu0 %v1189
  %1726 = vmatprep.subr.bf16.mxu0 0
  %1727 = vmatpush1.bf16.msra.mxu0 %v1170
  %1728 = vmatprep.subr.bf16.mxu0 0
  %1729 = vmatpush1.bf16.msra.mxu0 %v1151
  %1730 = vmatprep.subr.bf16.mxu0 0
  %1731 = vmatpush1.bf16.msra.mxu0 %v1132
  %1732 = vmatprep.subr.bf16.mxu0 0
  %1733 = vmatpush2.bf16.msra.mxu0 0
  %1734 = vmatprep.subr.bf16.mxu0 0
  %1735 = vmatpush2.bf16.msra.mxu0 0
  %1736 = vmatprep.subr.bf16.mxu0 0
  %1737 = vmatpush2.bf16.msra.mxu0 0
  %1738 = vmatprep.subr.bf16.mxu0 0
  %1739 = vmatpush2.bf16.msra.mxu0 0
  %1740 = vmatprep.subr.bf16.mxu0 0
  %1741 = vmatpush2.bf16.msra.mxu0 0
  %1742 = vmatprep.subr.bf16.mxu0 0
  %1743 = vmatpush2.bf16.msra.mxu0 0
  %1744 = vmatprep.subr.bf16.mxu0 0
  %1745 = vmatpush2.bf16.msra.mxu0 0
  %1746 = vmatprep.subr.bf16.mxu0 0
  %1747 = vmatpush2.bf16.msra.mxu0 0
  %1748 = vmatprep.mubr.bf16.mxu0 0
  %1749 = vmatmul.mubr.bf16.gmra.mxu0 %v1287
  %v1750 = vpop.f32.mrf.mxu0
  %v1751 = vadd.f32 %v851, %v1750
  %v1752 = vpop.f32.mrf.mxu0
  %v1753 = vpop.f32.mrf.mxu0
  %v1754 = vpop.f32.mrf.mxu0
  %1755 = vdwg.mxu0
  %v1756 = vtanh.pop %v1382
  %v1757 = vtanh.pop %v1384
  %v1758 = vtanh.pop %v1423
  %v1759 = vtanh.pop %v1425
  %v1760 = vtanh.pop %v1464
  %v1761 = vtanh.pop %v1466
  %v1762 = vtanh.pop %v1505
  %v1763 = vtanh.pop %v1507
  %v1764 = vtanh.pop %v1546
  %v1765 = vtanh.pop %v1548
  %v1766 = vtanh.pop %v1587
  %v1767 = vtanh.pop %v1589
  %v1768 = vtanh.pop %v1628
  %v1769 = vtanh.pop %v1630
  %v1770 = vtanh.pop %v1669
  %v1771 = vtanh.pop %v1671
  %v1772 = vtanh.pop %v1710
  %v1773 = vtanh.pop %v1712
  %v1774 = vtanh.pop %v1751
  %v1793 = vcombine.low %v1756, %v1757
  %v1794 = vcombine.low %v1758, %v1759
  %v1795 = vcombine.low %v1760, %v1761
  %v1796 = vcombine.low %v1762, %v1763
  %v1797 = vcombine.low %v1764, %v1765
  %v1798 = vcombine.low %v1766, %v1767
  %v1799 = vcombine.low %v1768, %v1769
  %v1800 = vcombine.low %v1770, %v1771
  %v1801 = vcombine.low %v1772, %v1773
  %1811 = vst [vmem:[%s3] sm:$0x77] %v1793
  %1812 = vst [vmem:[%s3 + $0x8] sm:$0x77] %v1794
  %1813 = vst [vmem:[%s3 + $0x10] sm:$0x77] %v1795
  %1814 = vst [vmem:[%s3 + $0x18] sm:$0x77] %v1796
  %1815 = vst [vmem:[%s3 + $0x20] sm:$0x77] %v1797
  %1816 = vst [vmem:[%s3 + $0x28] sm:$0x77] %v1798
  %1817 = vst [vmem:[%s3 + $0x30] sm:$0x77] %v1799
  %1818 = vst [vmem:[%s3 + $0x38] sm:$0x77] %v1800
  %1819 = vst [vmem:[%s3 + $0x40] sm:$0x77] %v1801
  %1820 = vst [vmem:[%s3 + $0x48] sm:$0x7] %v1774
  // Predicated region
  $region14: #{generator_forward.9} parent=0 // pred_check
    _
  $region15: #{generator_forward.9} parent=0 // pred_check_branch
    %1822 = sbr.rel (0) target = $region17
  $region16: #{generator_forward.9} parent=0 // pred_region
    _
  $region17: #{generator_forward.9} parent=0 // pred_fallthru
    _
  // Predicated region
  $region18: #{generator_forward.9} parent=0 // pred_check
    _
  $region19: #{generator_forward.9} parent=0 // pred_check_branch
    %1824 = sbr.rel (0) target = $region21
  $region20: #{generator_forward.9} parent=0 // pred_region
    _
  $region21: #{generator_forward.9} parent=0 // pred_fallthru
    _

</llo_original>
